<compile_context>
chip_gen: v7x
topology: tpu7x:2x2x1
jax: 0.10.0
libtpu: 0.0.40
codegen_flags: <defaults>
</compile_context>

<pallas_src>
import math

import jax
import jax.numpy as jnp
from jax import lax
from jax.experimental import pallas as pl
from jax.experimental.pallas import tpu as pltpu

D_MODEL = 32
N_HEADS = 4
D_K = D_MODEL // N_HEADS
D_FF = 64
EPS = 1e-6
NEG_INF = -1e9


# ----------------------------- in-kernel helpers ----------------------------

def _layer_norm(x, g, b):
    # Matches torch: a_2 * (x - mean) / (std + eps) + b_2, std is UNBIASED (N-1).
    mean = jnp.mean(x, axis=-1, keepdims=True)
    xc = x - mean
    var = jnp.sum(xc * xc, axis=-1, keepdims=True) / (x.shape[-1] - 1)
    std = jnp.sqrt(var)
    return g * xc / (std + EPS) + b


def _mha_core(q, k, v, mask, wo):
    """q: (Tq, D), k/v: (Tk, D), mask: (Tq, Tk) {0,1}, wo: (D, D).

    Returns sum over heads of softmax(q_h k_h^T / sqrt(dk)) v_h @ wo_h,
    i.e. the full multi-head attention output projection (without bias).
    """
    scale = 1.0 / math.sqrt(D_K)
    out = None
    for h in range(N_HEADS):
        sl = slice(h * D_K, (h + 1) * D_K)
        # Contract last dims of both operands -> K consumed in stored layout.
        s = lax.dot_general(q[:, sl], k[:, sl],
                            dimension_numbers=(((1,), (1,)), ((), ())),
                            preferred_element_type=jnp.float32) * scale
        s = jnp.where(mask == 0.0, NEG_INF, s)
        m = jnp.max(s, axis=-1, keepdims=True)
        e = jnp.exp(s - m)
        p = e * pl.reciprocal(jnp.sum(e, axis=-1, keepdims=True), approx=True)
        o_h = jnp.dot(p, v[:, sl], preferred_element_type=jnp.float32)        # (Tq, dk)
        contrib = jnp.dot(o_h, wo[sl, :], preferred_element_type=jnp.float32)  # (Tq, D)
        out = contrib if out is None else out + contrib
    return out


# ------------------------------ fused kernel --------------------------------

def _decoder_layer_kernel(
    x_ref, mem_ref, tgt_mask_ref, src_mask_ref,
    ln0_g_ref, ln0_b_ref, ln1_g_ref, ln1_b_ref, ln2_g_ref, ln2_b_ref,
    sa_wqkv_ref, sa_bqkv_ref, sa_wo_ref, sa_bo_ref,
    ca_wq_ref, ca_bq_ref, ca_wkv_ref, ca_bkv_ref, ca_wo_ref, ca_bo_ref,
    ff_w1_ref, ff_b1_ref, ff_w2_ref, ff_b2_ref,
    o_ref):
    x = x_ref[...].astype(jnp.float32)        # (T, D)   this batch's rows
    mem = mem_ref[...].astype(jnp.float32)    # (S, D)
    tgt_m = tgt_mask_ref[0]                   # (T, T)
    src_m = src_mask_ref[0]                   # (T, S)

    # --- sublayer 0: x + self_attn(norm(x), norm(x), norm(x), tgt_mask) ---
    xn = _layer_norm(x, ln0_g_ref[...], ln0_b_ref[...])
    qkv = jnp.dot(xn, sa_wqkv_ref[...],
                  preferred_element_type=jnp.float32) + sa_bqkv_ref[...]      # (T, 3D)
    attn = _mha_core(qkv[:, 0:D_MODEL],
                     qkv[:, D_MODEL:2 * D_MODEL],
                     qkv[:, 2 * D_MODEL:3 * D_MODEL],
                     tgt_m, sa_wo_ref[...])
    x = x + attn + sa_bo_ref[...]

    # --- sublayer 1: x + src_attn(norm(x), memory, memory, src_mask) ---
    xn = _layer_norm(x, ln1_g_ref[...], ln1_b_ref[...])
    q = jnp.dot(xn, ca_wq_ref[...],
                preferred_element_type=jnp.float32) + ca_bq_ref[...]          # (T, D)
    kv = jnp.dot(mem, ca_wkv_ref[...],
                 preferred_element_type=jnp.float32) + ca_bkv_ref[...]        # (S, 2D)
    attn = _mha_core(q, kv[:, 0:D_MODEL], kv[:, D_MODEL:2 * D_MODEL],
                     src_m, ca_wo_ref[...])
    x = x + attn + ca_bo_ref[...]

    # --- sublayer 2: x + feed_forward(norm(x)) ---
    xn = _layer_norm(x, ln2_g_ref[...], ln2_b_ref[...])
    hdn = jnp.maximum(
        jnp.dot(xn, ff_w1_ref[...], preferred_element_type=jnp.float32) + ff_b1_ref[...],
        0.0)
    x = x + jnp.dot(hdn, ff_w2_ref[...],
                    preferred_element_type=jnp.float32) + ff_b2_ref[...]

    o_ref[...] = x.astype(o_ref.dtype)


# ------------------------------ wrapper / glue -------------------------------

_PARAM_ORDER = ("ln0_g", "ln0_b", "ln1_g", "ln1_b", "ln2_g", "ln2_b",
                "sa_wqkv", "sa_bqkv", "sa_wo", "sa_bo",
                "ca_wq", "ca_bq", "ca_wkv", "ca_bkv", "ca_wo", "ca_bo",
                "ff_w1", "ff_b1", "ff_w2", "ff_b2")


def pack_params(params):
    """Fold Q/K/V (and cross-attn K/V) weights into single matmuls; 2D biases."""
    sa, ca, ff = params["self_attn"], params["src_attn"], params["ffn"]
    return dict(
        ln0_g=params["ln0_g"][None, :], ln0_b=params["ln0_b"][None, :],
        ln1_g=params["ln1_g"][None, :], ln1_b=params["ln1_b"][None, :],
        ln2_g=params["ln2_g"][None, :], ln2_b=params["ln2_b"][None, :],
        sa_wqkv=jnp.concatenate([sa["wq"], sa["wk"], sa["wv"]], axis=1),
        sa_bqkv=jnp.concatenate([sa["bq"], sa["bk"], sa["bv"]])[None, :],
        sa_wo=sa["wo"], sa_bo=sa["bo"][None, :],
        ca_wq=ca["wq"], ca_bq=ca["bq"][None, :],
        ca_wkv=jnp.concatenate([ca["wk"], ca["wv"]], axis=1),
        ca_bkv=jnp.concatenate([ca["bk"], ca["bv"]])[None, :],
        ca_wo=ca["wo"], ca_bo=ca["bo"][None, :],
        ff_w1=ff["w1"], ff_b1=ff["b1"][None, :],
        ff_w2=ff["w2"], ff_b2=ff["b2"][None, :],
    )


def decoder_layer(x, memory, src_mask, tgt_mask, packed):
    """Forward pass of DecoderLayer (layer_past=None branch), eval mode."""
    B, T, D = x.shape
    S = memory.shape[1]
    tgt_full = jnp.broadcast_to(tgt_mask, (B, T, T)).astype(jnp.float32)
    src_full = jnp.broadcast_to(src_mask, (B, T, S)).astype(jnp.float32)

    weights = [packed[k] for k in _PARAM_ORDER]

    def _resident(shape):
        # Full-array block, same block index for every grid step -> stays in VMEM.
        return pl.BlockSpec(shape, lambda b, n=len(shape): (0,) * n)

    in_specs = [
        pl.BlockSpec((T, D), lambda b: (b, 0)),        # x rows of this batch
        pl.BlockSpec((S, D), lambda b: (b, 0)),        # memory rows of this batch
        pl.BlockSpec((1, T, T), lambda b: (b, 0, 0)),  # tgt mask
        pl.BlockSpec((1, T, S), lambda b: (b, 0, 0)),  # src mask
    ] + [_resident(w.shape) for w in weights]

    out = pl.pallas_call(
        _decoder_layer_kernel,
        out_shape=jax.ShapeDtypeStruct((B * T, D), x.dtype),
        grid=(B,),
        in_specs=in_specs,
        out_specs=pl.BlockSpec((T, D), lambda b: (b, 0)),
        compiler_params=pltpu.CompilerParams(
            dimension_semantics=("parallel",)),   # v7x: one batch per TensorCore
    )(x.reshape(B * T, D), memory.reshape(B * S, D), tgt_full, src_full, *weights)
    return out.reshape(B, T, D)


# --------------------------- pure-JAX reference -----------------------------

def _ref_layernorm(x, g, b):
    mean = jnp.mean(x, axis=-1, keepdims=True)
    xc = x - mean
    std = jnp.sqrt(jnp.sum(xc * xc, axis=-1, keepdims=True) / (x.shape[-1] - 1))
    return g * xc / (std + EPS) + b


def _ref_mha(xq, xk, xv, mask, p):
    B, Tq, D = xq.shape
    Tk = xk.shape[1]
    q = (xq @ p["wq"] + p["bq"]).reshape(B, Tq, N_HEADS, D_K).transpose(0, 2, 1, 3)
    k = (xk @ p["wk"] + p["bk"]).reshape(B, Tk, N_HEADS, D_K).transpose(0, 2, 1, 3)
    v = (xv @ p["wv"] + p["bv"]).reshape(B, Tk, N_HEADS, D_K).transpose(0, 2, 1, 3)
    s = jnp.einsum("bhqd,bhkd->bhqk", q, k) / jnp.sqrt(jnp.float32(D_K))
    s = jnp.where(mask[:, None] == 0, NEG_INF, s)
    p_attn = jax.nn.softmax(s, axis=-1)
    o = jnp.einsum("bhqk,bhkd->bhqd", p_attn, v).transpose(0, 2, 1, 3).reshape(B, Tq, D)
    return o @ p["wo"] + p["bo"]


def _ref_decoder(x, memory, src_mask, tgt_mask, params):
    B, T, D = x.shape
    S = memory.shape[1]
    tgt_m = jnp.broadcast_to(tgt_mask, (B, T, T)).astype(jnp.float32)
    src_m = jnp.broadcast_to(src_mask, (B, T, S)).astype(jnp.float32)
    xn = _ref_layernorm(x, params["ln0_g"], params["ln0_b"])
    x = x + _ref_mha(xn, xn, xn, tgt_m, params["self_attn"])
    xn = _ref_layernorm(x, params["ln1_g"], params["ln1_b"])
    x = x + _ref_mha(xn, memory, memory, src_m, params["src_attn"])
    xn = _ref_layernorm(x, params["ln2_g"], params["ln2_b"])
    p = params["ffn"]
    h = jnp.maximum(xn @ p["w1"] + p["b1"], 0.0)
    return x + h @ p["w2"] + p["b2"]


# --------------------------------- main -------------------------------------

def _init_params(key):
    ks = jax.random.split(key, 12)
    def w(k, shp): return (jax.random.normal(k, shp, jnp.float32) * 0.05)
    attn0 = dict(wq=w(ks[0], (D_MODEL, D_MODEL)), bq=jnp.zeros(D_MODEL),
                 wk=w(ks[1], (D_MODEL, D_MODEL)), bk=jnp.zeros(D_MODEL),
                 wv=w(ks[2], (D_MODEL, D_MODEL)), bv=jnp.zeros(D_MODEL),
                 wo=w(ks[3], (D_MODEL, D_MODEL)), bo=jnp.zeros(D_MODEL))
    attn1 = dict(wq=w(ks[4], (D_MODEL, D_MODEL)), bq=jnp.zeros(D_MODEL),
                 wk=w(ks[5], (D_MODEL, D_MODEL)), bk=jnp.zeros(D_MODEL),
                 wv=w(ks[6], (D_MODEL, D_MODEL)), bv=jnp.zeros(D_MODEL),
                 wo=w(ks[7], (D_MODEL, D_MODEL)), bo=jnp.zeros(D_MODEL))
    ffn = dict(w1=w(ks[8], (D_MODEL, D_FF)), b1=jnp.zeros(D_FF),
               w2=w(ks[9], (D_FF, D_MODEL)), b2=jnp.zeros(D_MODEL))
    return dict(self_attn=attn0, src_attn=attn1, ffn=ffn,
                ln0_g=jnp.ones(D_MODEL), ln0_b=jnp.zeros(D_MODEL),
                ln1_g=jnp.ones(D_MODEL), ln1_b=jnp.zeros(D_MODEL),
                ln2_g=jnp.ones(D_MODEL), ln2_b=jnp.zeros(D_MODEL))


if __name__ == "__main__":
    B, T, S = 2, 8, 16
    key = jax.random.PRNGKey(0)
    kx, km, kp = jax.random.split(key, 3)

    x = jax.random.normal(kx, (B, T, D_MODEL), jnp.float32)
    memory = jax.random.normal(km, (B, S, D_MODEL), jnp.float32)
    params = _init_params(kp)
    packed = pack_params(params)   # one-time packing, outside the jitted fn

    # causal target mask (1, T, T) and source padding mask (B, 1, S)
    tgt_mask = jnp.tril(jnp.ones((T, T), jnp.float32))[None]
    src_lens = jnp.array([S, S - 4])
    src_mask = (jnp.arange(S)[None, None, :] < src_lens[:, None, None]).astype(jnp.float32)

    out = jax.jit(decoder_layer)(x, memory, src_mask, tgt_mask, packed)
    out = jax.block_until_ready(out)

    ref = _ref_decoder(x, memory, src_mask, tgt_mask, params)
    assert out.shape == (B, T, D_MODEL)
    # tolerance accounts for the approximate-reciprocal softmax denominator
    assert jnp.allclose(out, ref, rtol=1e-3, atol=1e-3), "mismatch vs reference"

    print("KERNEL_OK")
</pallas_src>

<mosaic_0001>
module attributes {stable_mosaic.version = 11 : i64} {
  func.func @_decoder_layer_kernel(%arg0: i32, %arg1: memref<8x32xf32, #tpu.memory_space<vmem>>, %arg2: memref<16x32xf32, #tpu.memory_space<vmem>>, %arg3: memref<1x8x8xf32, #tpu.memory_space<vmem>>, %arg4: memref<1x8x16xf32, #tpu.memory_space<vmem>>, %arg5: memref<1x32xf32, #tpu.memory_space<vmem>>, %arg6: memref<1x32xf32, #tpu.memory_space<vmem>>, %arg7: memref<1x32xf32, #tpu.memory_space<vmem>>, %arg8: memref<1x32xf32, #tpu.memory_space<vmem>>, %arg9: memref<1x32xf32, #tpu.memory_space<vmem>>, %arg10: memref<1x32xf32, #tpu.memory_space<vmem>>, %arg11: memref<32x96xf32, #tpu.memory_space<vmem>>, %arg12: memref<1x96xf32, #tpu.memory_space<vmem>>, %arg13: memref<32x32xf32, #tpu.memory_space<vmem>>, %arg14: memref<1x32xf32, #tpu.memory_space<vmem>>, %arg15: memref<32x32xf32, #tpu.memory_space<vmem>>, %arg16: memref<1x32xf32, #tpu.memory_space<vmem>>, %arg17: memref<32x64xf32, #tpu.memory_space<vmem>>, %arg18: memref<1x64xf32, #tpu.memory_space<vmem>>, %arg19: memref<32x32xf32, #tpu.memory_space<vmem>>, %arg20: memref<1x32xf32, #tpu.memory_space<vmem>>, %arg21: memref<32x64xf32, #tpu.memory_space<vmem>>, %arg22: memref<1x64xf32, #tpu.memory_space<vmem>>, %arg23: memref<64x32xf32, #tpu.memory_space<vmem>>, %arg24: memref<1x32xf32, #tpu.memory_space<vmem>>, %arg25: memref<8x32xf32, #tpu.memory_space<vmem>>) attributes {dimension_semantics = [#tpu.dimension_semantics<parallel>], iteration_bounds = array<i64: 2>, scalar_prefetch = 0 : i64, scratch_operands = 0 : i64, tpu.core_type = #tpu.core_type<tc>, window_params = [{transform_indices = @transform_0, window_bounds = array<i64: 8, 32>}, {transform_indices = @transform_1, window_bounds = array<i64: 16, 32>}, {transform_indices = @transform_2, window_bounds = array<i64: 1, 8, 8>}, {transform_indices = @transform_3, window_bounds = array<i64: 1, 8, 16>}, {pipeline_mode = #tpu.pipeline_mode<synchronous>, transform_indices = @transform_4, window_bounds = array<i64: 1, 32>}, {pipeline_mode = #tpu.pipeline_mode<synchronous>, transform_indices = @transform_5, window_bounds = array<i64: 1, 32>}, {pipeline_mode = #tpu.pipeline_mode<synchronous>, transform_indices = @transform_6, window_bounds = array<i64: 1, 32>}, {pipeline_mode = #tpu.pipeline_mode<synchronous>, transform_indices = @transform_7, window_bounds = array<i64: 1, 32>}, {pipeline_mode = #tpu.pipeline_mode<synchronous>, transform_indices = @transform_8, window_bounds = array<i64: 1, 32>}, {pipeline_mode = #tpu.pipeline_mode<synchronous>, transform_indices = @transform_9, window_bounds = array<i64: 1, 32>}, {pipeline_mode = #tpu.pipeline_mode<synchronous>, transform_indices = @transform_10, window_bounds = array<i64: 32, 96>}, {pipeline_mode = #tpu.pipeline_mode<synchronous>, transform_indices = @transform_11, window_bounds = array<i64: 1, 96>}, {pipeline_mode = #tpu.pipeline_mode<synchronous>, transform_indices = @transform_12, window_bounds = array<i64: 32, 32>}, {pipeline_mode = #tpu.pipeline_mode<synchronous>, transform_indices = @transform_13, window_bounds = array<i64: 1, 32>}, {pipeline_mode = #tpu.pipeline_mode<synchronous>, transform_indices = @transform_14, window_bounds = array<i64: 32, 32>}, {pipeline_mode = #tpu.pipeline_mode<synchronous>, transform_indices = @transform_15, window_bounds = array<i64: 1, 32>}, {pipeline_mode = #tpu.pipeline_mode<synchronous>, transform_indices = @transform_16, window_bounds = array<i64: 32, 64>}, {pipeline_mode = #tpu.pipeline_mode<synchronous>, transform_indices = @transform_17, window_bounds = array<i64: 1, 64>}, {pipeline_mode = #tpu.pipeline_mode<synchronous>, transform_indices = @transform_18, window_bounds = array<i64: 32, 32>}, {pipeline_mode = #tpu.pipeline_mode<synchronous>, transform_indices = @transform_19, window_bounds = array<i64: 1, 32>}, {pipeline_mode = #tpu.pipeline_mode<synchronous>, transform_indices = @transform_20, window_bounds = array<i64: 32, 64>}, {pipeline_mode = #tpu.pipeline_mode<synchronous>, transform_indices = @transform_21, window_bounds = array<i64: 1, 64>}, {pipeline_mode = #tpu.pipeline_mode<synchronous>, transform_indices = @transform_22, window_bounds = array<i64: 64, 32>}, {pipeline_mode = #tpu.pipeline_mode<synchronous>, transform_indices = @transform_23, window_bounds = array<i64: 1, 32>}, {transform_indices = @transform_24, window_bounds = array<i64: 8, 32>}]} {
    %c0 = arith.constant 0 : index
    %c0_0 = arith.constant 0 : index
    %0 = vector.load %arg1[%c0, %c0_0] : memref<8x32xf32, #tpu.memory_space<vmem>>, vector<8x32xf32>
    %c0_1 = arith.constant 0 : index
    %c0_2 = arith.constant 0 : index
    %1 = vector.load %arg2[%c0_1, %c0_2] : memref<16x32xf32, #tpu.memory_space<vmem>>, vector<16x32xf32>
    %c0_3 = arith.constant 0 : index
    %c0_4 = arith.constant 0 : index
    %c0_5 = arith.constant 0 : index
    %2 = vector.load %arg3[%c0_3, %c0_4, %c0_5] : memref<1x8x8xf32, #tpu.memory_space<vmem>>, vector<1x8x8xf32>
    %3 = vector.shape_cast %2 : vector<1x8x8xf32> to vector<8x8xf32>
    %c0_6 = arith.constant 0 : index
    %c0_7 = arith.constant 0 : index
    %c0_8 = arith.constant 0 : index
    %4 = vector.load %arg4[%c0_6, %c0_7, %c0_8] : memref<1x8x16xf32, #tpu.memory_space<vmem>>, vector<1x8x16xf32>
    %5 = vector.shape_cast %4 : vector<1x8x16xf32> to vector<8x16xf32>
    %c0_9 = arith.constant 0 : index
    %c0_10 = arith.constant 0 : index
    %6 = vector.load %arg5[%c0_9, %c0_10] : memref<1x32xf32, #tpu.memory_space<vmem>>, vector<1x32xf32>
    %c0_11 = arith.constant 0 : index
    %c0_12 = arith.constant 0 : index
    %7 = vector.load %arg6[%c0_11, %c0_12] : memref<1x32xf32, #tpu.memory_space<vmem>>, vector<1x32xf32>
    %cst = arith.constant dense<0.000000e+00> : vector<8xf32>
    %8 = vector.multi_reduction <add>, %0, %cst [1] : vector<8x32xf32> to vector<8xf32>
    %9 = vector.shape_cast %8 : vector<8xf32> to vector<8x1xf32>
    %cst_13 = arith.constant 3.200000e+01 : f32
    %10 = vector.broadcast %cst_13 : f32 to vector<8x1xf32>
    %11 = arith.divf %9, %10 : vector<8x1xf32>
    %12 = vector.broadcast %11 : vector<8x1xf32> to vector<8x32xf32>
    %13 = arith.subf %0, %12 : vector<8x32xf32>
    %14 = arith.mulf %13, %13 : vector<8x32xf32>
    %cst_14 = arith.constant dense<0.000000e+00> : vector<8xf32>
    %15 = vector.multi_reduction <add>, %14, %cst_14 [1] : vector<8x32xf32> to vector<8xf32>
    %16 = vector.shape_cast %15 : vector<8xf32> to vector<8x1xf32>
    %cst_15 = arith.constant 3.100000e+01 : f32
    %17 = vector.broadcast %cst_15 : f32 to vector<8x1xf32>
    %18 = arith.divf %16, %17 : vector<8x1xf32>
    %19 = math.sqrt %18 : vector<8x1xf32>
    %20 = vector.broadcast %6 : vector<1x32xf32> to vector<8x32xf32>
    %21 = arith.mulf %20, %13 : vector<8x32xf32>
    %cst_16 = arith.constant 9.99999997E-7 : f32
    %22 = vector.broadcast %cst_16 : f32 to vector<8x1xf32>
    %23 = arith.addf %19, %22 : vector<8x1xf32>
    %24 = vector.broadcast %23 : vector<8x1xf32> to vector<8x32xf32>
    %25 = arith.divf %21, %24 : vector<8x32xf32>
    %26 = vector.broadcast %7 : vector<1x32xf32> to vector<8x32xf32>
    %27 = arith.addf %25, %26 : vector<8x32xf32>
    %c0_17 = arith.constant 0 : index
    %c0_18 = arith.constant 0 : index
    %28 = vector.load %arg11[%c0_17, %c0_18] : memref<32x96xf32, #tpu.memory_space<vmem>>, vector<32x96xf32>
    %cst_19 = arith.constant dense<0.000000e+00> : vector<8x96xf32>
    %29 = tpu.matmul %27, %28, %cst_19 {dimension_numbers = #tpu.dot_dimension_numbers<[1], [0], [0], [1], [0, 0, 1, 1], [], []>} : vector<8x32xf32>, vector<32x96xf32>, vector<8x96xf32> -> vector<8x96xf32>
    %c0_20 = arith.constant 0 : index
    %c0_21 = arith.constant 0 : index
    %30 = vector.load %arg12[%c0_20, %c0_21] : memref<1x96xf32, #tpu.memory_space<vmem>>, vector<1x96xf32>
    %31 = vector.broadcast %30 : vector<1x96xf32> to vector<8x96xf32>
    %32 = arith.addf %29, %31 : vector<8x96xf32>
    %33 = vector.extract_strided_slice %32 {offsets = [0, 0], sizes = [8, 32], strides = [1, 1]} : vector<8x96xf32> to vector<8x32xf32>
    %34 = vector.extract_strided_slice %32 {offsets = [0, 32], sizes = [8, 32], strides = [1, 1]} : vector<8x96xf32> to vector<8x32xf32>
    %35 = vector.extract_strided_slice %32 {offsets = [0, 64], sizes = [8, 32], strides = [1, 1]} : vector<8x96xf32> to vector<8x32xf32>
    %c0_22 = arith.constant 0 : index
    %c0_23 = arith.constant 0 : index
    %36 = vector.load %arg13[%c0_22, %c0_23] : memref<32x32xf32, #tpu.memory_space<vmem>>, vector<32x32xf32>
    %37 = vector.extract_strided_slice %33 {offsets = [0, 0], sizes = [8, 8], strides = [1, 1]} : vector<8x32xf32> to vector<8x8xf32>
    %38 = vector.extract_strided_slice %34 {offsets = [0, 0], sizes = [8, 8], strides = [1, 1]} : vector<8x32xf32> to vector<8x8xf32>
    %cst_24 = arith.constant dense<0.000000e+00> : vector<8x8xf32>
    %39 = tpu.matmul %37, %38, %cst_24 {dimension_numbers = #tpu.dot_dimension_numbers<[1], [1], [0], [0], [0, 0, 1, 0], [], []>} : vector<8x8xf32>, vector<8x8xf32>, vector<8x8xf32> -> vector<8x8xf32>
    %cst_25 = arith.constant 0.353553385 : f32
    %40 = vector.broadcast %cst_25 : f32 to vector<8x8xf32>
    %41 = arith.mulf %39, %40 : vector<8x8xf32>
    %cst_26 = arith.constant 0.000000e+00 : f32
    %42 = vector.broadcast %cst_26 : f32 to vector<8x8xf32>
    %43 = arith.cmpf oeq, %3, %42 : vector<8x8xf32>
    %cst_27 = arith.constant -1.000000e+09 : f32
    %44 = vector.broadcast %cst_27 : f32 to vector<8x8xf32>
    %45 = arith.select %43, %44, %41 : vector<8x8xi1>, vector<8x8xf32>
    %cst_28 = arith.constant dense<0xFF800000> : vector<8xf32>
    %46 = vector.multi_reduction <maximumf>, %45, %cst_28 [1] : vector<8x8xf32> to vector<8xf32>
    %47 = vector.shape_cast %46 : vector<8xf32> to vector<8x1xf32>
    %48 = vector.broadcast %47 : vector<8x1xf32> to vector<8x8xf32>
    %49 = arith.subf %45, %48 : vector<8x8xf32>
    %50 = math.exp %49 : vector<8x8xf32>
    %cst_29 = arith.constant dense<0.000000e+00> : vector<8xf32>
    %51 = vector.multi_reduction <add>, %50, %cst_29 [1] : vector<8x8xf32> to vector<8xf32>
    %52 = vector.shape_cast %51 : vector<8xf32> to vector<8x1xf32>
    %53 = tpu.reciprocal %52 {approx = true} : vector<8x1xf32> -> vector<8x1xf32>
    %54 = vector.broadcast %53 : vector<8x1xf32> to vector<8x8xf32>
    %55 = arith.mulf %50, %54 : vector<8x8xf32>
    %56 = vector.extract_strided_slice %35 {offsets = [0, 0], sizes = [8, 8], strides = [1, 1]} : vector<8x32xf32> to vector<8x8xf32>
    %cst_30 = arith.constant dense<0.000000e+00> : vector<8x8xf32>
    %57 = tpu.matmul %55, %56, %cst_30 {dimension_numbers = #tpu.dot_dimension_numbers<[1], [0], [0], [1], [0, 0, 1, 1], [], []>} : vector<8x8xf32>, vector<8x8xf32>, vector<8x8xf32> -> vector<8x8xf32>
    %58 = vector.extract_strided_slice %36 {offsets = [0, 0], sizes = [8, 32], strides = [1, 1]} : vector<32x32xf32> to vector<8x32xf32>
    %cst_31 = arith.constant dense<0.000000e+00> : vector<8x32xf32>
    %59 = tpu.matmul %57, %58, %cst_31 {dimension_numbers = #tpu.dot_dimension_numbers<[1], [0], [0], [1], [0, 0, 1, 1], [], []>} : vector<8x8xf32>, vector<8x32xf32>, vector<8x32xf32> -> vector<8x32xf32>
    %60 = vector.extract_strided_slice %33 {offsets = [0, 8], sizes = [8, 8], strides = [1, 1]} : vector<8x32xf32> to vector<8x8xf32>
    %61 = vector.extract_strided_slice %34 {offsets = [0, 8], sizes = [8, 8], strides = [1, 1]} : vector<8x32xf32> to vector<8x8xf32>
    %cst_32 = arith.constant dense<0.000000e+00> : vector<8x8xf32>
    %62 = tpu.matmul %60, %61, %cst_32 {dimension_numbers = #tpu.dot_dimension_numbers<[1], [1], [0], [0], [0, 0, 1, 0], [], []>} : vector<8x8xf32>, vector<8x8xf32>, vector<8x8xf32> -> vector<8x8xf32>
    %cst_33 = arith.constant 0.353553385 : f32
    %63 = vector.broadcast %cst_33 : f32 to vector<8x8xf32>
    %64 = arith.mulf %62, %63 : vector<8x8xf32>
    %cst_34 = arith.constant 0.000000e+00 : f32
    %65 = vector.broadcast %cst_34 : f32 to vector<8x8xf32>
    %66 = arith.cmpf oeq, %3, %65 : vector<8x8xf32>
    %cst_35 = arith.constant -1.000000e+09 : f32
    %67 = vector.broadcast %cst_35 : f32 to vector<8x8xf32>
    %68 = arith.select %66, %67, %64 : vector<8x8xi1>, vector<8x8xf32>
    %cst_36 = arith.constant dense<0xFF800000> : vector<8xf32>
    %69 = vector.multi_reduction <maximumf>, %68, %cst_36 [1] : vector<8x8xf32> to vector<8xf32>
    %70 = vector.shape_cast %69 : vector<8xf32> to vector<8x1xf32>
    %71 = vector.broadcast %70 : vector<8x1xf32> to vector<8x8xf32>
    %72 = arith.subf %68, %71 : vector<8x8xf32>
    %73 = math.exp %72 : vector<8x8xf32>
    %cst_37 = arith.constant dense<0.000000e+00> : vector<8xf32>
    %74 = vector.multi_reduction <add>, %73, %cst_37 [1] : vector<8x8xf32> to vector<8xf32>
    %75 = vector.shape_cast %74 : vector<8xf32> to vector<8x1xf32>
    %76 = tpu.reciprocal %75 {approx = true} : vector<8x1xf32> -> vector<8x1xf32>
    %77 = vector.broadcast %76 : vector<8x1xf32> to vector<8x8xf32>
    %78 = arith.mulf %73, %77 : vector<8x8xf32>
    %79 = vector.extract_strided_slice %35 {offsets = [0, 8], sizes = [8, 8], strides = [1, 1]} : vector<8x32xf32> to vector<8x8xf32>
    %cst_38 = arith.constant dense<0.000000e+00> : vector<8x8xf32>
    %80 = tpu.matmul %78, %79, %cst_38 {dimension_numbers = #tpu.dot_dimension_numbers<[1], [0], [0], [1], [0, 0, 1, 1], [], []>} : vector<8x8xf32>, vector<8x8xf32>, vector<8x8xf32> -> vector<8x8xf32>
    %81 = vector.extract_strided_slice %36 {offsets = [8, 0], sizes = [8, 32], strides = [1, 1]} : vector<32x32xf32> to vector<8x32xf32>
    %cst_39 = arith.constant dense<0.000000e+00> : vector<8x32xf32>
    %82 = tpu.matmul %80, %81, %cst_39 {dimension_numbers = #tpu.dot_dimension_numbers<[1], [0], [0], [1], [0, 0, 1, 1], [], []>} : vector<8x8xf32>, vector<8x32xf32>, vector<8x32xf32> -> vector<8x32xf32>
    %83 = arith.addf %59, %82 : vector<8x32xf32>
    %84 = vector.extract_strided_slice %33 {offsets = [0, 16], sizes = [8, 8], strides = [1, 1]} : vector<8x32xf32> to vector<8x8xf32>
    %85 = vector.extract_strided_slice %34 {offsets = [0, 16], sizes = [8, 8], strides = [1, 1]} : vector<8x32xf32> to vector<8x8xf32>
    %cst_40 = arith.constant dense<0.000000e+00> : vector<8x8xf32>
    %86 = tpu.matmul %84, %85, %cst_40 {dimension_numbers = #tpu.dot_dimension_numbers<[1], [1], [0], [0], [0, 0, 1, 0], [], []>} : vector<8x8xf32>, vector<8x8xf32>, vector<8x8xf32> -> vector<8x8xf32>
    %cst_41 = arith.constant 0.353553385 : f32
    %87 = vector.broadcast %cst_41 : f32 to vector<8x8xf32>
    %88 = arith.mulf %86, %87 : vector<8x8xf32>
    %cst_42 = arith.constant 0.000000e+00 : f32
    %89 = vector.broadcast %cst_42 : f32 to vector<8x8xf32>
    %90 = arith.cmpf oeq, %3, %89 : vector<8x8xf32>
    %cst_43 = arith.constant -1.000000e+09 : f32
    %91 = vector.broadcast %cst_43 : f32 to vector<8x8xf32>
    %92 = arith.select %90, %91, %88 : vector<8x8xi1>, vector<8x8xf32>
    %cst_44 = arith.constant dense<0xFF800000> : vector<8xf32>
    %93 = vector.multi_reduction <maximumf>, %92, %cst_44 [1] : vector<8x8xf32> to vector<8xf32>
    %94 = vector.shape_cast %93 : vector<8xf32> to vector<8x1xf32>
    %95 = vector.broadcast %94 : vector<8x1xf32> to vector<8x8xf32>
    %96 = arith.subf %92, %95 : vector<8x8xf32>
    %97 = math.exp %96 : vector<8x8xf32>
    %cst_45 = arith.constant dense<0.000000e+00> : vector<8xf32>
    %98 = vector.multi_reduction <add>, %97, %cst_45 [1] : vector<8x8xf32> to vector<8xf32>
    %99 = vector.shape_cast %98 : vector<8xf32> to vector<8x1xf32>
    %100 = tpu.reciprocal %99 {approx = true} : vector<8x1xf32> -> vector<8x1xf32>
    %101 = vector.broadcast %100 : vector<8x1xf32> to vector<8x8xf32>
    %102 = arith.mulf %97, %101 : vector<8x8xf32>
    %103 = vector.extract_strided_slice %35 {offsets = [0, 16], sizes = [8, 8], strides = [1, 1]} : vector<8x32xf32> to vector<8x8xf32>
    %cst_46 = arith.constant dense<0.000000e+00> : vector<8x8xf32>
    %104 = tpu.matmul %102, %103, %cst_46 {dimension_numbers = #tpu.dot_dimension_numbers<[1], [0], [0], [1], [0, 0, 1, 1], [], []>} : vector<8x8xf32>, vector<8x8xf32>, vector<8x8xf32> -> vector<8x8xf32>
    %105 = vector.extract_strided_slice %36 {offsets = [16, 0], sizes = [8, 32], strides = [1, 1]} : vector<32x32xf32> to vector<8x32xf32>
    %cst_47 = arith.constant dense<0.000000e+00> : vector<8x32xf32>
    %106 = tpu.matmul %104, %105, %cst_47 {dimension_numbers = #tpu.dot_dimension_numbers<[1], [0], [0], [1], [0, 0, 1, 1], [], []>} : vector<8x8xf32>, vector<8x32xf32>, vector<8x32xf32> -> vector<8x32xf32>
    %107 = arith.addf %83, %106 : vector<8x32xf32>
    %108 = vector.extract_strided_slice %33 {offsets = [0, 24], sizes = [8, 8], strides = [1, 1]} : vector<8x32xf32> to vector<8x8xf32>
    %109 = vector.extract_strided_slice %34 {offsets = [0, 24], sizes = [8, 8], strides = [1, 1]} : vector<8x32xf32> to vector<8x8xf32>
    %cst_48 = arith.constant dense<0.000000e+00> : vector<8x8xf32>
    %110 = tpu.matmul %108, %109, %cst_48 {dimension_numbers = #tpu.dot_dimension_numbers<[1], [1], [0], [0], [0, 0, 1, 0], [], []>} : vector<8x8xf32>, vector<8x8xf32>, vector<8x8xf32> -> vector<8x8xf32>
    %cst_49 = arith.constant 0.353553385 : f32
    %111 = vector.broadcast %cst_49 : f32 to vector<8x8xf32>
    %112 = arith.mulf %110, %111 : vector<8x8xf32>
    %cst_50 = arith.constant 0.000000e+00 : f32
    %113 = vector.broadcast %cst_50 : f32 to vector<8x8xf32>
    %114 = arith.cmpf oeq, %3, %113 : vector<8x8xf32>
    %cst_51 = arith.constant -1.000000e+09 : f32
    %115 = vector.broadcast %cst_51 : f32 to vector<8x8xf32>
    %116 = arith.select %114, %115, %112 : vector<8x8xi1>, vector<8x8xf32>
    %cst_52 = arith.constant dense<0xFF800000> : vector<8xf32>
    %117 = vector.multi_reduction <maximumf>, %116, %cst_52 [1] : vector<8x8xf32> to vector<8xf32>
    %118 = vector.shape_cast %117 : vector<8xf32> to vector<8x1xf32>
    %119 = vector.broadcast %118 : vector<8x1xf32> to vector<8x8xf32>
    %120 = arith.subf %116, %119 : vector<8x8xf32>
    %121 = math.exp %120 : vector<8x8xf32>
    %cst_53 = arith.constant dense<0.000000e+00> : vector<8xf32>
    %122 = vector.multi_reduction <add>, %121, %cst_53 [1] : vector<8x8xf32> to vector<8xf32>
    %123 = vector.shape_cast %122 : vector<8xf32> to vector<8x1xf32>
    %124 = tpu.reciprocal %123 {approx = true} : vector<8x1xf32> -> vector<8x1xf32>
    %125 = vector.broadcast %124 : vector<8x1xf32> to vector<8x8xf32>
    %126 = arith.mulf %121, %125 : vector<8x8xf32>
    %127 = vector.extract_strided_slice %35 {offsets = [0, 24], sizes = [8, 8], strides = [1, 1]} : vector<8x32xf32> to vector<8x8xf32>
    %cst_54 = arith.constant dense<0.000000e+00> : vector<8x8xf32>
    %128 = tpu.matmul %126, %127, %cst_54 {dimension_numbers = #tpu.dot_dimension_numbers<[1], [0], [0], [1], [0, 0, 1, 1], [], []>} : vector<8x8xf32>, vector<8x8xf32>, vector<8x8xf32> -> vector<8x8xf32>
    %129 = vector.extract_strided_slice %36 {offsets = [24, 0], sizes = [8, 32], strides = [1, 1]} : vector<32x32xf32> to vector<8x32xf32>
    %cst_55 = arith.constant dense<0.000000e+00> : vector<8x32xf32>
    %130 = tpu.matmul %128, %129, %cst_55 {dimension_numbers = #tpu.dot_dimension_numbers<[1], [0], [0], [1], [0, 0, 1, 1], [], []>} : vector<8x8xf32>, vector<8x32xf32>, vector<8x32xf32> -> vector<8x32xf32>
    %131 = arith.addf %107, %130 : vector<8x32xf32>
    %132 = arith.addf %0, %131 : vector<8x32xf32>
    %c0_56 = arith.constant 0 : index
    %c0_57 = arith.constant 0 : index
    %133 = vector.load %arg14[%c0_56, %c0_57] : memref<1x32xf32, #tpu.memory_space<vmem>>, vector<1x32xf32>
    %134 = vector.broadcast %133 : vector<1x32xf32> to vector<8x32xf32>
    %135 = arith.addf %132, %134 : vector<8x32xf32>
    %c0_58 = arith.constant 0 : index
    %c0_59 = arith.constant 0 : index
    %136 = vector.load %arg7[%c0_58, %c0_59] : memref<1x32xf32, #tpu.memory_space<vmem>>, vector<1x32xf32>
    %c0_60 = arith.constant 0 : index
    %c0_61 = arith.constant 0 : index
    %137 = vector.load %arg8[%c0_60, %c0_61] : memref<1x32xf32, #tpu.memory_space<vmem>>, vector<1x32xf32>
    %cst_62 = arith.constant dense<0.000000e+00> : vector<8xf32>
    %138 = vector.multi_reduction <add>, %135, %cst_62 [1] : vector<8x32xf32> to vector<8xf32>
    %139 = vector.shape_cast %138 : vector<8xf32> to vector<8x1xf32>
    %cst_63 = arith.constant 3.200000e+01 : f32
    %140 = vector.broadcast %cst_63 : f32 to vector<8x1xf32>
    %141 = arith.divf %139, %140 : vector<8x1xf32>
    %142 = vector.broadcast %141 : vector<8x1xf32> to vector<8x32xf32>
    %143 = arith.subf %135, %142 : vector<8x32xf32>
    %144 = arith.mulf %143, %143 : vector<8x32xf32>
    %cst_64 = arith.constant dense<0.000000e+00> : vector<8xf32>
    %145 = vector.multi_reduction <add>, %144, %cst_64 [1] : vector<8x32xf32> to vector<8xf32>
    %146 = vector.shape_cast %145 : vector<8xf32> to vector<8x1xf32>
    %cst_65 = arith.constant 3.100000e+01 : f32
    %147 = vector.broadcast %cst_65 : f32 to vector<8x1xf32>
    %148 = arith.divf %146, %147 : vector<8x1xf32>
    %149 = math.sqrt %148 : vector<8x1xf32>
    %150 = vector.broadcast %136 : vector<1x32xf32> to vector<8x32xf32>
    %151 = arith.mulf %150, %143 : vector<8x32xf32>
    %cst_66 = arith.constant 9.99999997E-7 : f32
    %152 = vector.broadcast %cst_66 : f32 to vector<8x1xf32>
    %153 = arith.addf %149, %152 : vector<8x1xf32>
    %154 = vector.broadcast %153 : vector<8x1xf32> to vector<8x32xf32>
    %155 = arith.divf %151, %154 : vector<8x32xf32>
    %156 = vector.broadcast %137 : vector<1x32xf32> to vector<8x32xf32>
    %157 = arith.addf %155, %156 : vector<8x32xf32>
    %c0_67 = arith.constant 0 : index
    %c0_68 = arith.constant 0 : index
    %158 = vector.load %arg15[%c0_67, %c0_68] : memref<32x32xf32, #tpu.memory_space<vmem>>, vector<32x32xf32>
    %cst_69 = arith.constant dense<0.000000e+00> : vector<8x32xf32>
    %159 = tpu.matmul %157, %158, %cst_69 {dimension_numbers = #tpu.dot_dimension_numbers<[1], [0], [0], [1], [0, 0, 1, 1], [], []>} : vector<8x32xf32>, vector<32x32xf32>, vector<8x32xf32> -> vector<8x32xf32>
    %c0_70 = arith.constant 0 : index
    %c0_71 = arith.constant 0 : index
    %160 = vector.load %arg16[%c0_70, %c0_71] : memref<1x32xf32, #tpu.memory_space<vmem>>, vector<1x32xf32>
    %161 = vector.broadcast %160 : vector<1x32xf32> to vector<8x32xf32>
    %162 = arith.addf %159, %161 : vector<8x32xf32>
    %c0_72 = arith.constant 0 : index
    %c0_73 = arith.constant 0 : index
    %163 = vector.load %arg17[%c0_72, %c0_73] : memref<32x64xf32, #tpu.memory_space<vmem>>, vector<32x64xf32>
    %cst_74 = arith.constant dense<0.000000e+00> : vector<16x64xf32>
    %164 = tpu.matmul %1, %163, %cst_74 {dimension_numbers = #tpu.dot_dimension_numbers<[1], [0], [0], [1], [0, 0, 1, 1], [], []>} : vector<16x32xf32>, vector<32x64xf32>, vector<16x64xf32> -> vector<16x64xf32>
    %c0_75 = arith.constant 0 : index
    %c0_76 = arith.constant 0 : index
    %165 = vector.load %arg18[%c0_75, %c0_76] : memref<1x64xf32, #tpu.memory_space<vmem>>, vector<1x64xf32>
    %166 = vector.broadcast %165 : vector<1x64xf32> to vector<16x64xf32>
    %167 = arith.addf %164, %166 : vector<16x64xf32>
    %168 = vector.extract_strided_slice %167 {offsets = [0, 0], sizes = [16, 32], strides = [1, 1]} : vector<16x64xf32> to vector<16x32xf32>
    %169 = vector.extract_strided_slice %167 {offsets = [0, 32], sizes = [16, 32], strides = [1, 1]} : vector<16x64xf32> to vector<16x32xf32>
    %c0_77 = arith.constant 0 : index
    %c0_78 = arith.constant 0 : index
    %170 = vector.load %arg19[%c0_77, %c0_78] : memref<32x32xf32, #tpu.memory_space<vmem>>, vector<32x32xf32>
    %171 = vector.extract_strided_slice %162 {offsets = [0, 0], sizes = [8, 8], strides = [1, 1]} : vector<8x32xf32> to vector<8x8xf32>
    %172 = vector.extract_strided_slice %168 {offsets = [0, 0], sizes = [16, 8], strides = [1, 1]} : vector<16x32xf32> to vector<16x8xf32>
    %cst_79 = arith.constant dense<0.000000e+00> : vector<8x16xf32>
    %173 = tpu.matmul %171, %172, %cst_79 {dimension_numbers = #tpu.dot_dimension_numbers<[1], [1], [0], [0], [0, 0, 1, 0], [], []>} : vector<8x8xf32>, vector<16x8xf32>, vector<8x16xf32> -> vector<8x16xf32>
    %cst_80 = arith.constant 0.353553385 : f32
    %174 = vector.broadcast %cst_80 : f32 to vector<8x16xf32>
    %175 = arith.mulf %173, %174 : vector<8x16xf32>
    %cst_81 = arith.constant 0.000000e+00 : f32
    %176 = vector.broadcast %cst_81 : f32 to vector<8x16xf32>
    %177 = arith.cmpf oeq, %5, %176 : vector<8x16xf32>
    %cst_82 = arith.constant -1.000000e+09 : f32
    %178 = vector.broadcast %cst_82 : f32 to vector<8x16xf32>
    %179 = arith.select %177, %178, %175 : vector<8x16xi1>, vector<8x16xf32>
    %cst_83 = arith.constant dense<0xFF800000> : vector<8xf32>
    %180 = vector.multi_reduction <maximumf>, %179, %cst_83 [1] : vector<8x16xf32> to vector<8xf32>
    %181 = vector.shape_cast %180 : vector<8xf32> to vector<8x1xf32>
    %182 = vector.broadcast %181 : vector<8x1xf32> to vector<8x16xf32>
    %183 = arith.subf %179, %182 : vector<8x16xf32>
    %184 = math.exp %183 : vector<8x16xf32>
    %cst_84 = arith.constant dense<0.000000e+00> : vector<8xf32>
    %185 = vector.multi_reduction <add>, %184, %cst_84 [1] : vector<8x16xf32> to vector<8xf32>
    %186 = vector.shape_cast %185 : vector<8xf32> to vector<8x1xf32>
    %187 = tpu.reciprocal %186 {approx = true} : vector<8x1xf32> -> vector<8x1xf32>
    %188 = vector.broadcast %187 : vector<8x1xf32> to vector<8x16xf32>
    %189 = arith.mulf %184, %188 : vector<8x16xf32>
    %190 = vector.extract_strided_slice %169 {offsets = [0, 0], sizes = [16, 8], strides = [1, 1]} : vector<16x32xf32> to vector<16x8xf32>
    %cst_85 = arith.constant dense<0.000000e+00> : vector<8x8xf32>
    %191 = tpu.matmul %189, %190, %cst_85 {dimension_numbers = #tpu.dot_dimension_numbers<[1], [0], [0], [1], [0, 0, 1, 1], [], []>} : vector<8x16xf32>, vector<16x8xf32>, vector<8x8xf32> -> vector<8x8xf32>
    %192 = vector.extract_strided_slice %170 {offsets = [0, 0], sizes = [8, 32], strides = [1, 1]} : vector<32x32xf32> to vector<8x32xf32>
    %cst_86 = arith.constant dense<0.000000e+00> : vector<8x32xf32>
    %193 = tpu.matmul %191, %192, %cst_86 {dimension_numbers = #tpu.dot_dimension_numbers<[1], [0], [0], [1], [0, 0, 1, 1], [], []>} : vector<8x8xf32>, vector<8x32xf32>, vector<8x32xf32> -> vector<8x32xf32>
    %194 = vector.extract_strided_slice %162 {offsets = [0, 8], sizes = [8, 8], strides = [1, 1]} : vector<8x32xf32> to vector<8x8xf32>
    %195 = vector.extract_strided_slice %168 {offsets = [0, 8], sizes = [16, 8], strides = [1, 1]} : vector<16x32xf32> to vector<16x8xf32>
    %cst_87 = arith.constant dense<0.000000e+00> : vector<8x16xf32>
    %196 = tpu.matmul %194, %195, %cst_87 {dimension_numbers = #tpu.dot_dimension_numbers<[1], [1], [0], [0], [0, 0, 1, 0], [], []>} : vector<8x8xf32>, vector<16x8xf32>, vector<8x16xf32> -> vector<8x16xf32>
    %cst_88 = arith.constant 0.353553385 : f32
    %197 = vector.broadcast %cst_88 : f32 to vector<8x16xf32>
    %198 = arith.mulf %196, %197 : vector<8x16xf32>
    %cst_89 = arith.constant 0.000000e+00 : f32
    %199 = vector.broadcast %cst_89 : f32 to vector<8x16xf32>
    %200 = arith.cmpf oeq, %5, %199 : vector<8x16xf32>
    %cst_90 = arith.constant -1.000000e+09 : f32
    %201 = vector.broadcast %cst_90 : f32 to vector<8x16xf32>
    %202 = arith.select %200, %201, %198 : vector<8x16xi1>, vector<8x16xf32>
    %cst_91 = arith.constant dense<0xFF800000> : vector<8xf32>
    %203 = vector.multi_reduction <maximumf>, %202, %cst_91 [1] : vector<8x16xf32> to vector<8xf32>
    %204 = vector.shape_cast %203 : vector<8xf32> to vector<8x1xf32>
    %205 = vector.broadcast %204 : vector<8x1xf32> to vector<8x16xf32>
    %206 = arith.subf %202, %205 : vector<8x16xf32>
    %207 = math.exp %206 : vector<8x16xf32>
    %cst_92 = arith.constant dense<0.000000e+00> : vector<8xf32>
    %208 = vector.multi_reduction <add>, %207, %cst_92 [1] : vector<8x16xf32> to vector<8xf32>
    %209 = vector.shape_cast %208 : vector<8xf32> to vector<8x1xf32>
    %210 = tpu.reciprocal %209 {approx = true} : vector<8x1xf32> -> vector<8x1xf32>
    %211 = vector.broadcast %210 : vector<8x1xf32> to vector<8x16xf32>
    %212 = arith.mulf %207, %211 : vector<8x16xf32>
    %213 = vector.extract_strided_slice %169 {offsets = [0, 8], sizes = [16, 8], strides = [1, 1]} : vector<16x32xf32> to vector<16x8xf32>
    %cst_93 = arith.constant dense<0.000000e+00> : vector<8x8xf32>
    %214 = tpu.matmul %212, %213, %cst_93 {dimension_numbers = #tpu.dot_dimension_numbers<[1], [0], [0], [1], [0, 0, 1, 1], [], []>} : vector<8x16xf32>, vector<16x8xf32>, vector<8x8xf32> -> vector<8x8xf32>
    %215 = vector.extract_strided_slice %170 {offsets = [8, 0], sizes = [8, 32], strides = [1, 1]} : vector<32x32xf32> to vector<8x32xf32>
    %cst_94 = arith.constant dense<0.000000e+00> : vector<8x32xf32>
    %216 = tpu.matmul %214, %215, %cst_94 {dimension_numbers = #tpu.dot_dimension_numbers<[1], [0], [0], [1], [0, 0, 1, 1], [], []>} : vector<8x8xf32>, vector<8x32xf32>, vector<8x32xf32> -> vector<8x32xf32>
    %217 = arith.addf %193, %216 : vector<8x32xf32>
    %218 = vector.extract_strided_slice %162 {offsets = [0, 16], sizes = [8, 8], strides = [1, 1]} : vector<8x32xf32> to vector<8x8xf32>
    %219 = vector.extract_strided_slice %168 {offsets = [0, 16], sizes = [16, 8], strides = [1, 1]} : vector<16x32xf32> to vector<16x8xf32>
    %cst_95 = arith.constant dense<0.000000e+00> : vector<8x16xf32>
    %220 = tpu.matmul %218, %219, %cst_95 {dimension_numbers = #tpu.dot_dimension_numbers<[1], [1], [0], [0], [0, 0, 1, 0], [], []>} : vector<8x8xf32>, vector<16x8xf32>, vector<8x16xf32> -> vector<8x16xf32>
    %cst_96 = arith.constant 0.353553385 : f32
    %221 = vector.broadcast %cst_96 : f32 to vector<8x16xf32>
    %222 = arith.mulf %220, %221 : vector<8x16xf32>
    %cst_97 = arith.constant 0.000000e+00 : f32
    %223 = vector.broadcast %cst_97 : f32 to vector<8x16xf32>
    %224 = arith.cmpf oeq, %5, %223 : vector<8x16xf32>
    %cst_98 = arith.constant -1.000000e+09 : f32
    %225 = vector.broadcast %cst_98 : f32 to vector<8x16xf32>
    %226 = arith.select %224, %225, %222 : vector<8x16xi1>, vector<8x16xf32>
    %cst_99 = arith.constant dense<0xFF800000> : vector<8xf32>
    %227 = vector.multi_reduction <maximumf>, %226, %cst_99 [1] : vector<8x16xf32> to vector<8xf32>
    %228 = vector.shape_cast %227 : vector<8xf32> to vector<8x1xf32>
    %229 = vector.broadcast %228 : vector<8x1xf32> to vector<8x16xf32>
    %230 = arith.subf %226, %229 : vector<8x16xf32>
    %231 = math.exp %230 : vector<8x16xf32>
    %cst_100 = arith.constant dense<0.000000e+00> : vector<8xf32>
    %232 = vector.multi_reduction <add>, %231, %cst_100 [1] : vector<8x16xf32> to vector<8xf32>
    %233 = vector.shape_cast %232 : vector<8xf32> to vector<8x1xf32>
    %234 = tpu.reciprocal %233 {approx = true} : vector<8x1xf32> -> vector<8x1xf32>
    %235 = vector.broadcast %234 : vector<8x1xf32> to vector<8x16xf32>
    %236 = arith.mulf %231, %235 : vector<8x16xf32>
    %237 = vector.extract_strided_slice %169 {offsets = [0, 16], sizes = [16, 8], strides = [1, 1]} : vector<16x32xf32> to vector<16x8xf32>
    %cst_101 = arith.constant dense<0.000000e+00> : vector<8x8xf32>
    %238 = tpu.matmul %236, %237, %cst_101 {dimension_numbers = #tpu.dot_dimension_numbers<[1], [0], [0], [1], [0, 0, 1, 1], [], []>} : vector<8x16xf32>, vector<16x8xf32>, vector<8x8xf32> -> vector<8x8xf32>
    %239 = vector.extract_strided_slice %170 {offsets = [16, 0], sizes = [8, 32], strides = [1, 1]} : vector<32x32xf32> to vector<8x32xf32>
    %cst_102 = arith.constant dense<0.000000e+00> : vector<8x32xf32>
    %240 = tpu.matmul %238, %239, %cst_102 {dimension_numbers = #tpu.dot_dimension_numbers<[1], [0], [0], [1], [0, 0, 1, 1], [], []>} : vector<8x8xf32>, vector<8x32xf32>, vector<8x32xf32> -> vector<8x32xf32>
    %241 = arith.addf %217, %240 : vector<8x32xf32>
    %242 = vector.extract_strided_slice %162 {offsets = [0, 24], sizes = [8, 8], strides = [1, 1]} : vector<8x32xf32> to vector<8x8xf32>
    %243 = vector.extract_strided_slice %168 {offsets = [0, 24], sizes = [16, 8], strides = [1, 1]} : vector<16x32xf32> to vector<16x8xf32>
    %cst_103 = arith.constant dense<0.000000e+00> : vector<8x16xf32>
    %244 = tpu.matmul %242, %243, %cst_103 {dimension_numbers = #tpu.dot_dimension_numbers<[1], [1], [0], [0], [0, 0, 1, 0], [], []>} : vector<8x8xf32>, vector<16x8xf32>, vector<8x16xf32> -> vector<8x16xf32>
    %cst_104 = arith.constant 0.353553385 : f32
    %245 = vector.broadcast %cst_104 : f32 to vector<8x16xf32>
    %246 = arith.mulf %244, %245 : vector<8x16xf32>
    %cst_105 = arith.constant 0.000000e+00 : f32
    %247 = vector.broadcast %cst_105 : f32 to vector<8x16xf32>
    %248 = arith.cmpf oeq, %5, %247 : vector<8x16xf32>
    %cst_106 = arith.constant -1.000000e+09 : f32
    %249 = vector.broadcast %cst_106 : f32 to vector<8x16xf32>
    %250 = arith.select %248, %249, %246 : vector<8x16xi1>, vector<8x16xf32>
    %cst_107 = arith.constant dense<0xFF800000> : vector<8xf32>
    %251 = vector.multi_reduction <maximumf>, %250, %cst_107 [1] : vector<8x16xf32> to vector<8xf32>
    %252 = vector.shape_cast %251 : vector<8xf32> to vector<8x1xf32>
    %253 = vector.broadcast %252 : vector<8x1xf32> to vector<8x16xf32>
    %254 = arith.subf %250, %253 : vector<8x16xf32>
    %255 = math.exp %254 : vector<8x16xf32>
    %cst_108 = arith.constant dense<0.000000e+00> : vector<8xf32>
    %256 = vector.multi_reduction <add>, %255, %cst_108 [1] : vector<8x16xf32> to vector<8xf32>
    %257 = vector.shape_cast %256 : vector<8xf32> to vector<8x1xf32>
    %258 = tpu.reciprocal %257 {approx = true} : vector<8x1xf32> -> vector<8x1xf32>
    %259 = vector.broadcast %258 : vector<8x1xf32> to vector<8x16xf32>
    %260 = arith.mulf %255, %259 : vector<8x16xf32>
    %261 = vector.extract_strided_slice %169 {offsets = [0, 24], sizes = [16, 8], strides = [1, 1]} : vector<16x32xf32> to vector<16x8xf32>
    %cst_109 = arith.constant dense<0.000000e+00> : vector<8x8xf32>
    %262 = tpu.matmul %260, %261, %cst_109 {dimension_numbers = #tpu.dot_dimension_numbers<[1], [0], [0], [1], [0, 0, 1, 1], [], []>} : vector<8x16xf32>, vector<16x8xf32>, vector<8x8xf32> -> vector<8x8xf32>
    %263 = vector.extract_strided_slice %170 {offsets = [24, 0], sizes = [8, 32], strides = [1, 1]} : vector<32x32xf32> to vector<8x32xf32>
    %cst_110 = arith.constant dense<0.000000e+00> : vector<8x32xf32>
    %264 = tpu.matmul %262, %263, %cst_110 {dimension_numbers = #tpu.dot_dimension_numbers<[1], [0], [0], [1], [0, 0, 1, 1], [], []>} : vector<8x8xf32>, vector<8x32xf32>, vector<8x32xf32> -> vector<8x32xf32>
    %265 = arith.addf %241, %264 : vector<8x32xf32>
    %266 = arith.addf %135, %265 : vector<8x32xf32>
    %c0_111 = arith.constant 0 : index
    %c0_112 = arith.constant 0 : index
    %267 = vector.load %arg20[%c0_111, %c0_112] : memref<1x32xf32, #tpu.memory_space<vmem>>, vector<1x32xf32>
    %268 = vector.broadcast %267 : vector<1x32xf32> to vector<8x32xf32>
    %269 = arith.addf %266, %268 : vector<8x32xf32>
    %c0_113 = arith.constant 0 : index
    %c0_114 = arith.constant 0 : index
    %270 = vector.load %arg9[%c0_113, %c0_114] : memref<1x32xf32, #tpu.memory_space<vmem>>, vector<1x32xf32>
    %c0_115 = arith.constant 0 : index
    %c0_116 = arith.constant 0 : index
    %271 = vector.load %arg10[%c0_115, %c0_116] : memref<1x32xf32, #tpu.memory_space<vmem>>, vector<1x32xf32>
    %cst_117 = arith.constant dense<0.000000e+00> : vector<8xf32>
    %272 = vector.multi_reduction <add>, %269, %cst_117 [1] : vector<8x32xf32> to vector<8xf32>
    %273 = vector.shape_cast %272 : vector<8xf32> to vector<8x1xf32>
    %cst_118 = arith.constant 3.200000e+01 : f32
    %274 = vector.broadcast %cst_118 : f32 to vector<8x1xf32>
    %275 = arith.divf %273, %274 : vector<8x1xf32>
    %276 = vector.broadcast %275 : vector<8x1xf32> to vector<8x32xf32>
    %277 = arith.subf %269, %276 : vector<8x32xf32>
    %278 = arith.mulf %277, %277 : vector<8x32xf32>
    %cst_119 = arith.constant dense<0.000000e+00> : vector<8xf32>
    %279 = vector.multi_reduction <add>, %278, %cst_119 [1] : vector<8x32xf32> to vector<8xf32>
    %280 = vector.shape_cast %279 : vector<8xf32> to vector<8x1xf32>
    %cst_120 = arith.constant 3.100000e+01 : f32
    %281 = vector.broadcast %cst_120 : f32 to vector<8x1xf32>
    %282 = arith.divf %280, %281 : vector<8x1xf32>
    %283 = math.sqrt %282 : vector<8x1xf32>
    %284 = vector.broadcast %270 : vector<1x32xf32> to vector<8x32xf32>
    %285 = arith.mulf %284, %277 : vector<8x32xf32>
    %cst_121 = arith.constant 9.99999997E-7 : f32
    %286 = vector.broadcast %cst_121 : f32 to vector<8x1xf32>
    %287 = arith.addf %283, %286 : vector<8x1xf32>
    %288 = vector.broadcast %287 : vector<8x1xf32> to vector<8x32xf32>
    %289 = arith.divf %285, %288 : vector<8x32xf32>
    %290 = vector.broadcast %271 : vector<1x32xf32> to vector<8x32xf32>
    %291 = arith.addf %289, %290 : vector<8x32xf32>
    %c0_122 = arith.constant 0 : index
    %c0_123 = arith.constant 0 : index
    %292 = vector.load %arg21[%c0_122, %c0_123] : memref<32x64xf32, #tpu.memory_space<vmem>>, vector<32x64xf32>
    %cst_124 = arith.constant dense<0.000000e+00> : vector<8x64xf32>
    %293 = tpu.matmul %291, %292, %cst_124 {dimension_numbers = #tpu.dot_dimension_numbers<[1], [0], [0], [1], [0, 0, 1, 1], [], []>} : vector<8x32xf32>, vector<32x64xf32>, vector<8x64xf32> -> vector<8x64xf32>
    %c0_125 = arith.constant 0 : index
    %c0_126 = arith.constant 0 : index
    %294 = vector.load %arg22[%c0_125, %c0_126] : memref<1x64xf32, #tpu.memory_space<vmem>>, vector<1x64xf32>
    %295 = vector.broadcast %294 : vector<1x64xf32> to vector<8x64xf32>
    %296 = arith.addf %293, %295 : vector<8x64xf32>
    %cst_127 = arith.constant 0.000000e+00 : f32
    %297 = vector.broadcast %cst_127 : f32 to vector<8x64xf32>
    %298 = arith.maximumf %296, %297 : vector<8x64xf32>
    %c0_128 = arith.constant 0 : index
    %c0_129 = arith.constant 0 : index
    %299 = vector.load %arg23[%c0_128, %c0_129] : memref<64x32xf32, #tpu.memory_space<vmem>>, vector<64x32xf32>
    %cst_130 = arith.constant dense<0.000000e+00> : vector<8x32xf32>
    %300 = tpu.matmul %298, %299, %cst_130 {dimension_numbers = #tpu.dot_dimension_numbers<[1], [0], [0], [1], [0, 0, 1, 1], [], []>} : vector<8x64xf32>, vector<64x32xf32>, vector<8x32xf32> -> vector<8x32xf32>
    %301 = arith.addf %269, %300 : vector<8x32xf32>
    %c0_131 = arith.constant 0 : index
    %c0_132 = arith.constant 0 : index
    %302 = vector.load %arg24[%c0_131, %c0_132] : memref<1x32xf32, #tpu.memory_space<vmem>>, vector<1x32xf32>
    %303 = vector.broadcast %302 : vector<1x32xf32> to vector<8x32xf32>
    %304 = arith.addf %301, %303 : vector<8x32xf32>
    %c0_133 = arith.constant 0 : index
    %c0_134 = arith.constant 0 : index
    %305 = vector.load %arg25[%c0_133, %c0_134] : memref<8x32xf32, #tpu.memory_space<vmem>>, vector<8x32xf32>
    tpu.vector_store %arg25[%c0_133, %c0_134], %304 {strides = array<i32>} : memref<8x32xf32, #tpu.memory_space<vmem>>, vector<8x32xf32>,
    return
  }
  func.func @transform_0(%arg0: i32) -> (i32, i32) {
    %c0_i32 = arith.constant 0 : i32
    %c0_i32_0 = arith.constant 0 : i32
    return %arg0, %c0_i32 : i32, i32
  }
  func.func @transform_1(%arg0: i32) -> (i32, i32) {
    %c0_i32 = arith.constant 0 : i32
    %c0_i32_0 = arith.constant 0 : i32
    return %arg0, %c0_i32 : i32, i32
  }
  func.func @transform_2(%arg0: i32) -> (i32, i32, i32) {
    %c0_i32 = arith.constant 0 : i32
    %c0_i32_0 = arith.constant 0 : i32
    %c0_i32_1 = arith.constant 0 : i32
    return %arg0, %c0_i32, %c0_i32_0 : i32, i32, i32
  }
  func.func @transform_3(%arg0: i32) -> (i32, i32, i32) {
    %c0_i32 = arith.constant 0 : i32
    %c0_i32_0 = arith.constant 0 : i32
    %c0_i32_1 = arith.constant 0 : i32
    return %arg0, %c0_i32, %c0_i32_0 : i32, i32, i32
  }
  func.func @transform_4(%arg0: i32) -> (i32, i32) {
    %c0_i32 = arith.constant 0 : i32
    %c0_i32_0 = arith.constant 0 : i32
    %c0_i32_1 = arith.constant 0 : i32
    return %c0_i32, %c0_i32_0 : i32, i32
  }
  func.func @transform_5(%arg0: i32) -> (i32, i32) {
    %c0_i32 = arith.constant 0 : i32
    %c0_i32_0 = arith.constant 0 : i32
    %c0_i32_1 = arith.constant 0 : i32
    return %c0_i32, %c0_i32_0 : i32, i32
  }
  func.func @transform_6(%arg0: i32) -> (i32, i32) {
    %c0_i32 = arith.constant 0 : i32
    %c0_i32_0 = arith.constant 0 : i32
    %c0_i32_1 = arith.constant 0 : i32
    return %c0_i32, %c0_i32_0 : i32, i32
  }
  func.func @transform_7(%arg0: i32) -> (i32, i32) {
    %c0_i32 = arith.constant 0 : i32
    %c0_i32_0 = arith.constant 0 : i32
    %c0_i32_1 = arith.constant 0 : i32
    return %c0_i32, %c0_i32_0 : i32, i32
  }
  func.func @transform_8(%arg0: i32) -> (i32, i32) {
    %c0_i32 = arith.constant 0 : i32
    %c0_i32_0 = arith.constant 0 : i32
    %c0_i32_1 = arith.constant 0 : i32
    return %c0_i32, %c0_i32_0 : i32, i32
  }
  func.func @transform_9(%arg0: i32) -> (i32, i32) {
    %c0_i32 = arith.constant 0 : i32
    %c0_i32_0 = arith.constant 0 : i32
    %c0_i32_1 = arith.constant 0 : i32
    return %c0_i32, %c0_i32_0 : i32, i32
  }
  func.func @transform_10(%arg0: i32) -> (i32, i32) {
    %c0_i32 = arith.constant 0 : i32
    %c0_i32_0 = arith.constant 0 : i32
    %c0_i32_1 = arith.constant 0 : i32
    return %c0_i32, %c0_i32_0 : i32, i32
  }
  func.func @transform_11(%arg0: i32) -> (i32, i32) {
    %c0_i32 = arith.constant 0 : i32
    %c0_i32_0 = arith.constant 0 : i32
    %c0_i32_1 = arith.constant 0 : i32
    return %c0_i32, %c0_i32_0 : i32, i32
  }
  func.func @transform_12(%arg0: i32) -> (i32, i32) {
    %c0_i32 = arith.constant 0 : i32
    %c0_i32_0 = arith.constant 0 : i32
    %c0_i32_1 = arith.constant 0 : i32
    return %c0_i32, %c0_i32_0 : i32, i32
  }
  func.func @transform_13(%arg0: i32) -> (i32, i32) {
    %c0_i32 = arith.constant 0 : i32
    %c0_i32_0 = arith.constant 0 : i32
    %c0_i32_1 = arith.constant 0 : i32
    return %c0_i32, %c0_i32_0 : i32, i32
  }
  func.func @transform_14(%arg0: i32) -> (i32, i32) {
    %c0_i32 = arith.constant 0 : i32
    %c0_i32_0 = arith.constant 0 : i32
    %c0_i32_1 = arith.constant 0 : i32
    return %c0_i32, %c0_i32_0 : i32, i32
  }
  func.func @transform_15(%arg0: i32) -> (i32, i32) {
    %c0_i32 = arith.constant 0 : i32
    %c0_i32_0 = arith.constant 0 : i32
    %c0_i32_1 = arith.constant 0 : i32
    return %c0_i32, %c0_i32_0 : i32, i32
  }
  func.func @transform_16(%arg0: i32) -> (i32, i32) {
    %c0_i32 = arith.constant 0 : i32
    %c0_i32_0 = arith.constant 0 : i32
    %c0_i32_1 = arith.constant 0 : i32
    return %c0_i32, %c0_i32_0 : i32, i32
  }
  func.func @transform_17(%arg0: i32) -> (i32, i32) {
    %c0_i32 = arith.constant 0 : i32
    %c0_i32_0 = arith.constant 0 : i32
    %c0_i32_1 = arith.constant 0 : i32
    return %c0_i32, %c0_i32_0 : i32, i32
  }
  func.func @transform_18(%arg0: i32) -> (i32, i32) {
    %c0_i32 = arith.constant 0 : i32
    %c0_i32_0 = arith.constant 0 : i32
    %c0_i32_1 = arith.constant 0 : i32
    return %c0_i32, %c0_i32_0 : i32, i32
  }
  func.func @transform_19(%arg0: i32) -> (i32, i32) {
    %c0_i32 = arith.constant 0 : i32
    %c0_i32_0 = arith.constant 0 : i32
    %c0_i32_1 = arith.constant 0 : i32
    return %c0_i32, %c0_i32_0 : i32, i32
  }
  func.func @transform_20(%arg0: i32) -> (i32, i32) {
    %c0_i32 = arith.constant 0 : i32
    %c0_i32_0 = arith.constant 0 : i32
    %c0_i32_1 = arith.constant 0 : i32
    return %c0_i32, %c0_i32_0 : i32, i32
  }
  func.func @transform_21(%arg0: i32) -> (i32, i32) {
    %c0_i32 = arith.constant 0 : i32
    %c0_i32_0 = arith.constant 0 : i32
    %c0_i32_1 = arith.constant 0 : i32
    return %c0_i32, %c0_i32_0 : i32, i32
  }
  func.func @transform_22(%arg0: i32) -> (i32, i32) {
    %c0_i32 = arith.constant 0 : i32
    %c0_i32_0 = arith.constant 0 : i32
    %c0_i32_1 = arith.constant 0 : i32
    return %c0_i32, %c0_i32_0 : i32, i32
  }
  func.func @transform_23(%arg0: i32) -> (i32, i32) {
    %c0_i32 = arith.constant 0 : i32
    %c0_i32_0 = arith.constant 0 : i32
    %c0_i32_1 = arith.constant 0 : i32
    return %c0_i32, %c0_i32_0 : i32, i32
  }
  func.func @transform_24(%arg0: i32) -> (i32, i32) {
    %c0_i32 = arith.constant 0 : i32
    %c0_i32_0 = arith.constant 0 : i32
    return %arg0, %c0_i32 : i32, i32
  }
}

</mosaic_0001>

<llo_original>
// kernel: decoder_layer.1
$region0: #{decoder_layer.1}
  #allocation0 [shape = 'u32[]', space=smem, size = 0x4, offset = 0x4, fixed_abs, tag = 'smem constant byte address 0x4 - core index']
  #allocation1 [shape = 'u32[144,128]{1,0:T(1,128)}', space=vmem, size = 0x12000, scoped, tag = 'internal scratch']
  %s0 = inlined_call_operand.hbm [shape: f32[16,32], index: 0, kind: input, shape index: {}]
  %s1 = inlined_call_operand.vmem [shape: f32[32,32], index: 1, kind: input, shape index: {}]
  %s2 = inlined_call_operand.vmem [shape: f32[2,8,8], index: 2, kind: input, shape index: {}]
  %s3 = inlined_call_operand.vmem [shape: f32[2,8,16], index: 3, kind: input, shape index: {}]
  %s4 = inlined_call_operand.vmem [shape: f32[1,32], index: 4, kind: input, shape index: {}]
  %s5 = inlined_call_operand.vmem [shape: f32[1,32], index: 5, kind: input, shape index: {}]
  %s6 = inlined_call_operand.vmem [shape: f32[1,32], index: 6, kind: input, shape index: {}]
  %s7 = inlined_call_operand.vmem [shape: f32[1,32], index: 7, kind: input, shape index: {}]
  %s8 = inlined_call_operand.vmem [shape: f32[1,32], index: 8, kind: input, shape index: {}]
  %s9 = inlined_call_operand.vmem [shape: f32[1,32], index: 9, kind: input, shape index: {}]
  %s10 = inlined_call_operand.vmem [shape: f32[32,96], index: 10, kind: input, shape index: {}]
  %s11 = inlined_call_operand.vmem [shape: f32[1,96], index: 11, kind: input, shape index: {}]
  %s12 = inlined_call_operand.vmem [shape: f32[32,32], index: 12, kind: input, shape index: {}]
  %s13 = inlined_call_operand.vmem [shape: f32[1,32], index: 13, kind: input, shape index: {}]
  %s14 = inlined_call_operand.vmem [shape: f32[32,32], index: 14, kind: input, shape index: {}]
  %s15 = inlined_call_operand.hbm [shape: f32[1,32], index: 15, kind: input, shape index: {}]
  %s16 = inlined_call_operand.hbm [shape: f32[32,64], index: 16, kind: input, shape index: {}]
  %s17 = inlined_call_operand.hbm [shape: f32[1,64], index: 17, kind: input, shape index: {}]
  %s18 = inlined_call_operand.hbm [shape: f32[32,32], index: 18, kind: input, shape index: {}]
  %s19 = inlined_call_operand.hbm [shape: f32[1,32], index: 19, kind: input, shape index: {}]
  %s20 = inlined_call_operand.vmem [shape: f32[32,64], index: 20, kind: input, shape index: {}]
  %s21 = inlined_call_operand.hbm [shape: f32[1,64], index: 21, kind: input, shape index: {}]
  %s22 = inlined_call_operand.vmem [shape: f32[64,32], index: 22, kind: input, shape index: {}]
  %s23 = inlined_call_operand.hbm [shape: f32[1,32], index: 23, kind: input, shape index: {}]
  %s24 = inlined_call_operand.hbm [shape: f32[16,32], index: 24, kind: output, shape index: {}]
  %s25 = sld [smem:[#allocation0]]
  $region161: #{decoder_layer.1} parent=0
    _
  %s27 = ssub.s32 1, %s25
  %s28 = scalar_select 0, %s27, %s25
  $region1: #{decoder_layer.1} parent=0
    #allocation2 [shape = 'u8[8192]{0}', space=vmem, size = 0x2000, scoped, tag = 'input window, operand 0']
    #allocation3 [shape = 's32[2]{0}', space=sflag, size = 0x8, scoped, tag = 'scoped memory for decoder_layer.1']
    #allocation4 [shape = 's32[2]{0}', space=sflag, size = 0x8, scoped, tag = 'scoped memory for decoder_layer.1']
    #allocation5 [shape = 'u8[512]{0}', space=vmem, size = 0x400, scoped, tag = 'input window, operand 15, single buffered']
    #allocation6 [shape = 's32[1]{0}', space=sflag, size = 0x4, scoped, tag = 'scoped memory for decoder_layer.1']
    #allocation7 [shape = 'u8[16384]{0}', space=vmem, size = 0x4000, scoped, tag = 'input window, operand 16, single buffered']
    #allocation8 [shape = 'u8[512]{0}', space=vmem, size = 0x400, scoped, tag = 'input window, operand 17, single buffered']
    #allocation9 [shape = 's32[1]{0}', space=sflag, size = 0x4, scoped, tag = 'scoped memory for decoder_layer.1']
    #allocation10 [shape = 'u8[16384]{0}', space=vmem, size = 0x4000, scoped, tag = 'input window, operand 18, single buffered']
    #allocation11 [shape = 'u8[512]{0}', space=vmem, size = 0x400, scoped, tag = 'input window, operand 19, single buffered']
    #allocation12 [shape = 's32[1]{0}', space=sflag, size = 0x4, scoped, tag = 'scoped memory for decoder_layer.1']
    #allocation13 [shape = 'u8[512]{0}', space=vmem, size = 0x400, scoped, tag = 'input window, operand 21, single buffered']
    #allocation14 [shape = 'u8[512]{0}', space=vmem, size = 0x400, scoped, tag = 'input window, operand 23, single buffered']
    #allocation15 [shape = 's32[1]{0}', space=sflag, size = 0x4, scoped, tag = 'scoped memory for decoder_layer.1']
    #allocation16 [shape = 'u8[8192]{0}', space=vmem, size = 0x2000, scoped, tag = 'output window, operand 0']
    %29 = vsyncpa [#allocation3], 0
    %s30 = scalar_lea.sflag [#allocation3], 1
    %31 = vsyncpa %s30, 0
    %32 = vsyncpa [#allocation6], 0
    %33 = vsyncpa [#allocation9], 0
    %34 = vsyncpa [#allocation12], 0
    %35 = vsyncpa [#allocation15], 0
    %36 = vsyncpa [#allocation4], 0
    %s37 = scalar_lea.sflag [#allocation4], 1
    %38 = vsyncpa %s37, 0
    loop: start=0, step=1, limit=4
    $region2: #{decoder_layer.1} parent=1 // loop_pre_header
      _
    $region3: #{decoder_layer.1} parent=1 // loop_header
      %s40 = sphi 0, %s44
      %p41 = scmp.ge.s32.totalorder %s40, 4
      %s50 = sphi 0, %s52
      %s53 = sphi 0, %s50
      %s54 = sphi 0, %s53
      %s70 = sphi 0, %s54
      %s76 = sphi 0, %s78
      %s79 = sphi 0, %s76
      %s80 = sphi 0, %s79
      %s96 = sphi 0, %s80
      %s102 = sphi 0, %s104
      %s105 = sphi 0, %s102
      %s106 = sphi 0, %s105
      %s122 = sphi 0, %s106
      %s128 = sphi 0, %s130
      %s131 = sphi 0, %s128
      %s132 = sphi 0, %s131
      %s148 = sphi 0, %s132
      %s152 = sphi 0, %s152
      %s154 = sphi 0, %s152
      %s155 = sphi 0, %s154
      %s169 = sphi 0, %s155
      %s173 = sphi 0, %s173
      %s175 = sphi 0, %s173
      %s176 = sphi 0, %s175
      %s190 = sphi 0, %s176
      %s194 = sphi 0, %s194
      %s196 = sphi 0, %s194
      %s197 = sphi 0, %s196
      %s211 = sphi 0, %s197
      %s215 = sphi 0, %s215
      %s217 = sphi 0, %s215
      %s218 = sphi 0, %s217
      %s232 = sphi 0, %s218
      %s236 = sphi 0, %s236
      %s238 = sphi 0, %s236
      %s239 = sphi 0, %s238
      %s253 = sphi 0, %s239
      %s257 = sphi 0, %s257
      %s259 = sphi 0, %s257
      %s260 = sphi 0, %s259
      %s274 = sphi 0, %s260
      %s278 = sphi 0, %s278
      %s280 = sphi 0, %s278
      %s281 = sphi 0, %s280
      %s295 = sphi 0, %s281
      %s299 = sphi 0, %s299
      %s301 = sphi 0, %s299
      %s302 = sphi 0, %s301
      %s316 = sphi 0, %s302
      %s320 = sphi 0, %s320
      %s322 = sphi 0, %s320
      %s323 = sphi 0, %s322
      %s337 = sphi 0, %s323
      %s341 = sphi 0, %s341
      %s343 = sphi 0, %s341
      %s344 = sphi 0, %s343
      %s358 = sphi 0, %s344
      %s362 = sphi 0, %s362
      %s364 = sphi 0, %s362
      %s365 = sphi 0, %s364
      %s379 = sphi 0, %s365
      %s383 = sphi 0, %s383
      %s385 = sphi 0, %s383
      %s386 = sphi 0, %s385
      %s400 = sphi 0, %s386
      %s404 = sphi 0, %s404
      %s406 = sphi 0, %s404
      %s407 = sphi 0, %s406
      %s421 = sphi 0, %s407
      %s425 = sphi 0, %s425
      %s427 = sphi 0, %s425
      %s428 = sphi 0, %s427
      %s442 = sphi 0, %s428
      %s446 = sphi 0, %s446
      %s448 = sphi 0, %s446
      %s449 = sphi 0, %s448
      %s463 = sphi 0, %s449
      %s467 = sphi 0, %s467
      %s469 = sphi 0, %s467
      %s470 = sphi 0, %s469
      %s484 = sphi 0, %s470
      %s488 = sphi 0, %s488
      %s490 = sphi 0, %s488
      %s491 = sphi 0, %s490
      %s505 = sphi 0, %s491
      %s509 = sphi 0, %s509
      %s511 = sphi 0, %s509
      %s512 = sphi 0, %s511
      %s526 = sphi 0, %s512
      %s530 = sphi 0, %s530
      %s532 = sphi 0, %s530
      %s533 = sphi 0, %s532
      %s547 = sphi 0, %s533
      %s551 = sphi 0, %s551
      %s553 = sphi 0, %s551
      %s554 = sphi 0, %s553
      %s568 = sphi 0, %s554
      %s574 = sphi 0, %s576
      %s577 = sphi 0, %s574
      %s578 = sphi 0, %s577
      %s594 = sphi 0, %s578
    $region4: #{decoder_layer.1} parent=1 // loop_header_branch
      %43 = sbr.rel (%p41) target = $region8
    $region5: #{decoder_layer.1} parent=1 // loop_body
      %s45 = ssub.s32 %s40, 1
      %s46 = ssub.s32 %s40, 2
      %s47 = sadd.s32 %s40, 1
      %s48 = ssub.s32 %s40, %s47
      %p49 = scmp.eq.s32.totalorder %s48, 0
      %s51 = sadd.s32 %s50, 1
      %s52 = scalar_select %p49, %s50, %s51
      %p55 = pneg %p49
      %p56 = scmp.eq.s32.totalorder %s40, 1
      %p57 = por %p55, %p56
      %p58 = scmp.ne.s32.totalorder %s50, %s53
      %p59 = scmp.eq.s32.totalorder %s40, 0
      %p60 = por %p58, %p59
      %p61 = scmp.ne.s32.totalorder %s50, %s53
      %p62 = scmp.eq.s32.totalorder %s45, 1
      %p63 = por %p61, %p62
      %p64 = scmp.ne.s32.totalorder %s53, %s54
      %p65 = scmp.eq.s32.totalorder %s45, 0
      %p66 = por %p64, %p65
      %p67 = scmp.ne.s32.totalorder %s53, %s54
      %p68 = scmp.eq.s32.totalorder %s46, 1
      %p69 = por %p67, %p68
      %p71 = scmp.ne.s32.totalorder %s54, %s70
      %p72 = scmp.eq.s32.totalorder %s46, 0
      %p73 = por %p71, %p72
      %s74 = ssub.s32 %s40, %s47
      %p75 = scmp.eq.s32.totalorder %s74, 0
      %s77 = sadd.s32 %s76, 1
      %s78 = scalar_select %p75, %s76, %s77
      %p81 = pneg %p75
      %p82 = scmp.eq.s32.totalorder %s40, 1
      %p83 = por %p81, %p82
      %p84 = scmp.ne.s32.totalorder %s76, %s79
      %p85 = scmp.eq.s32.totalorder %s40, 0
      %p86 = por %p84, %p85
      %p87 = scmp.ne.s32.totalorder %s76, %s79
      %p88 = scmp.eq.s32.totalorder %s45, 1
      %p89 = por %p87, %p88
      %p90 = scmp.ne.s32.totalorder %s79, %s80
      %p91 = scmp.eq.s32.totalorder %s45, 0
      %p92 = por %p90, %p91
      %p93 = scmp.ne.s32.totalorder %s79, %s80
      %p94 = scmp.eq.s32.totalorder %s46, 1
      %p95 = por %p93, %p94
      %p97 = scmp.ne.s32.totalorder %s80, %s96
      %p98 = scmp.eq.s32.totalorder %s46, 0
      %p99 = por %p97, %p98
      %s100 = ssub.s32 %s40, %s47
      %p101 = scmp.eq.s32.totalorder %s100, 0
      %s103 = sadd.s32 %s102, 1
      %s104 = scalar_select %p101, %s102, %s103
      %p107 = pneg %p101
      %p108 = scmp.eq.s32.totalorder %s40, 1
      %p109 = por %p107, %p108
      %p110 = scmp.ne.s32.totalorder %s102, %s105
      %p111 = scmp.eq.s32.totalorder %s40, 0
      %p112 = por %p110, %p111
      %p113 = scmp.ne.s32.totalorder %s102, %s105
      %p114 = scmp.eq.s32.totalorder %s45, 1
      %p115 = por %p113, %p114
      %p116 = scmp.ne.s32.totalorder %s105, %s106
      %p117 = scmp.eq.s32.totalorder %s45, 0
      %p118 = por %p116, %p117
      %p119 = scmp.ne.s32.totalorder %s105, %s106
      %p120 = scmp.eq.s32.totalorder %s46, 1
      %p121 = por %p119, %p120
      %p123 = scmp.ne.s32.totalorder %s106, %s122
      %p124 = scmp.eq.s32.totalorder %s46, 0
      %p125 = por %p123, %p124
      %s126 = ssub.s32 %s40, %s47
      %p127 = scmp.eq.s32.totalorder %s126, 0
      %s129 = sadd.s32 %s128, 1
      %s130 = scalar_select %p127, %s128, %s129
      %p133 = pneg %p127
      %p134 = scmp.eq.s32.totalorder %s40, 1
      %p135 = por %p133, %p134
      %p136 = scmp.ne.s32.totalorder %s128, %s131
      %p137 = scmp.eq.s32.totalorder %s40, 0
      %p138 = por %p136, %p137
      %p139 = scmp.ne.s32.totalorder %s128, %s131
      %p140 = scmp.eq.s32.totalorder %s45, 1
      %p141 = por %p139, %p140
      %p142 = scmp.ne.s32.totalorder %s131, %s132
      %p143 = scmp.eq.s32.totalorder %s45, 0
      %p144 = por %p142, %p143
      %p145 = scmp.ne.s32.totalorder %s131, %s132
      %p146 = scmp.eq.s32.totalorder %s46, 1
      %p147 = por %p145, %p146
      %p149 = scmp.ne.s32.totalorder %s132, %s148
      %p150 = scmp.eq.s32.totalorder %s46, 0
      %p151 = por %p149, %p150
      %s153 = sadd.s32 %s152, 1
      %p156 = scmp.eq.s32.totalorder %s40, 1
      %p157 = scmp.ne.s32.totalorder %s152, %s154
      %p158 = scmp.eq.s32.totalorder %s40, 0
      %p159 = por %p157, %p158
      %p160 = scmp.ne.s32.totalorder %s152, %s154
      %p161 = scmp.eq.s32.totalorder %s45, 1
      %p162 = por %p160, %p161
      %p163 = scmp.ne.s32.totalorder %s154, %s155
      %p164 = scmp.eq.s32.totalorder %s45, 0
      %p165 = por %p163, %p164
      %p166 = scmp.ne.s32.totalorder %s154, %s155
      %p167 = scmp.eq.s32.totalorder %s46, 1
      %p168 = por %p166, %p167
      %p170 = scmp.ne.s32.totalorder %s155, %s169
      %p171 = scmp.eq.s32.totalorder %s46, 0
      %p172 = por %p170, %p171
      %s174 = sadd.s32 %s173, 1
      %p177 = scmp.eq.s32.totalorder %s40, 1
      %p178 = scmp.ne.s32.totalorder %s173, %s175
      %p179 = scmp.eq.s32.totalorder %s40, 0
      %p180 = por %p178, %p179
      %p181 = scmp.ne.s32.totalorder %s173, %s175
      %p182 = scmp.eq.s32.totalorder %s45, 1
      %p183 = por %p181, %p182
      %p184 = scmp.ne.s32.totalorder %s175, %s176
      %p185 = scmp.eq.s32.totalorder %s45, 0
      %p186 = por %p184, %p185
      %p187 = scmp.ne.s32.totalorder %s175, %s176
      %p188 = scmp.eq.s32.totalorder %s46, 1
      %p189 = por %p187, %p188
      %p191 = scmp.ne.s32.totalorder %s176, %s190
      %p192 = scmp.eq.s32.totalorder %s46, 0
      %p193 = por %p191, %p192
      %s195 = sadd.s32 %s194, 1
      %p198 = scmp.eq.s32.totalorder %s40, 1
      %p199 = scmp.ne.s32.totalorder %s194, %s196
      %p200 = scmp.eq.s32.totalorder %s40, 0
      %p201 = por %p199, %p200
      %p202 = scmp.ne.s32.totalorder %s194, %s196
      %p203 = scmp.eq.s32.totalorder %s45, 1
      %p204 = por %p202, %p203
      %p205 = scmp.ne.s32.totalorder %s196, %s197
      %p206 = scmp.eq.s32.totalorder %s45, 0
      %p207 = por %p205, %p206
      %p208 = scmp.ne.s32.totalorder %s196, %s197
      %p209 = scmp.eq.s32.totalorder %s46, 1
      %p210 = por %p208, %p209
      %p212 = scmp.ne.s32.totalorder %s197, %s211
      %p213 = scmp.eq.s32.totalorder %s46, 0
      %p214 = por %p212, %p213
      %s216 = sadd.s32 %s215, 1
      %p219 = scmp.eq.s32.totalorder %s40, 1
      %p220 = scmp.ne.s32.totalorder %s215, %s217
      %p221 = scmp.eq.s32.totalorder %s40, 0
      %p222 = por %p220, %p221
      %p223 = scmp.ne.s32.totalorder %s215, %s217
      %p224 = scmp.eq.s32.totalorder %s45, 1
      %p225 = por %p223, %p224
      %p226 = scmp.ne.s32.totalorder %s217, %s218
      %p227 = scmp.eq.s32.totalorder %s45, 0
      %p228 = por %p226, %p227
      %p229 = scmp.ne.s32.totalorder %s217, %s218
      %p230 = scmp.eq.s32.totalorder %s46, 1
      %p231 = por %p229, %p230
      %p233 = scmp.ne.s32.totalorder %s218, %s232
      %p234 = scmp.eq.s32.totalorder %s46, 0
      %p235 = por %p233, %p234
      %s237 = sadd.s32 %s236, 1
      %p240 = scmp.eq.s32.totalorder %s40, 1
      %p241 = scmp.ne.s32.totalorder %s236, %s238
      %p242 = scmp.eq.s32.totalorder %s40, 0
      %p243 = por %p241, %p242
      %p244 = scmp.ne.s32.totalorder %s236, %s238
      %p245 = scmp.eq.s32.totalorder %s45, 1
      %p246 = por %p244, %p245
      %p247 = scmp.ne.s32.totalorder %s238, %s239
      %p248 = scmp.eq.s32.totalorder %s45, 0
      %p249 = por %p247, %p248
      %p250 = scmp.ne.s32.totalorder %s238, %s239
      %p251 = scmp.eq.s32.totalorder %s46, 1
      %p252 = por %p250, %p251
      %p254 = scmp.ne.s32.totalorder %s239, %s253
      %p255 = scmp.eq.s32.totalorder %s46, 0
      %p256 = por %p254, %p255
      %s258 = sadd.s32 %s257, 1
      %p261 = scmp.eq.s32.totalorder %s40, 1
      %p262 = scmp.ne.s32.totalorder %s257, %s259
      %p263 = scmp.eq.s32.totalorder %s40, 0
      %p264 = por %p262, %p263
      %p265 = scmp.ne.s32.totalorder %s257, %s259
      %p266 = scmp.eq.s32.totalorder %s45, 1
      %p267 = por %p265, %p266
      %p268 = scmp.ne.s32.totalorder %s259, %s260
      %p269 = scmp.eq.s32.totalorder %s45, 0
      %p270 = por %p268, %p269
      %p271 = scmp.ne.s32.totalorder %s259, %s260
      %p272 = scmp.eq.s32.totalorder %s46, 1
      %p273 = por %p271, %p272
      %p275 = scmp.ne.s32.totalorder %s260, %s274
      %p276 = scmp.eq.s32.totalorder %s46, 0
      %p277 = por %p275, %p276
      %s279 = sadd.s32 %s278, 1
      %p282 = scmp.eq.s32.totalorder %s40, 1
      %p283 = scmp.ne.s32.totalorder %s278, %s280
      %p284 = scmp.eq.s32.totalorder %s40, 0
      %p285 = por %p283, %p284
      %p286 = scmp.ne.s32.totalorder %s278, %s280
      %p287 = scmp.eq.s32.totalorder %s45, 1
      %p288 = por %p286, %p287
      %p289 = scmp.ne.s32.totalorder %s280, %s281
      %p290 = scmp.eq.s32.totalorder %s45, 0
      %p291 = por %p289, %p290
      %p292 = scmp.ne.s32.totalorder %s280, %s281
      %p293 = scmp.eq.s32.totalorder %s46, 1
      %p294 = por %p292, %p293
      %p296 = scmp.ne.s32.totalorder %s281, %s295
      %p297 = scmp.eq.s32.totalorder %s46, 0
      %p298 = por %p296, %p297
      %s300 = sadd.s32 %s299, 1
      %p303 = scmp.eq.s32.totalorder %s40, 1
      %p304 = scmp.ne.s32.totalorder %s299, %s301
      %p305 = scmp.eq.s32.totalorder %s40, 0
      %p306 = por %p304, %p305
      %p307 = scmp.ne.s32.totalorder %s299, %s301
      %p308 = scmp.eq.s32.totalorder %s45, 1
      %p309 = por %p307, %p308
      %p310 = scmp.ne.s32.totalorder %s301, %s302
      %p311 = scmp.eq.s32.totalorder %s45, 0
      %p312 = por %p310, %p311
      %p313 = scmp.ne.s32.totalorder %s301, %s302
      %p314 = scmp.eq.s32.totalorder %s46, 1
      %p315 = por %p313, %p314
      %p317 = scmp.ne.s32.totalorder %s302, %s316
      %p318 = scmp.eq.s32.totalorder %s46, 0
      %p319 = por %p317, %p318
      %s321 = sadd.s32 %s320, 1
      %p324 = scmp.eq.s32.totalorder %s40, 1
      %p325 = scmp.ne.s32.totalorder %s320, %s322
      %p326 = scmp.eq.s32.totalorder %s40, 0
      %p327 = por %p325, %p326
      %p328 = scmp.ne.s32.totalorder %s320, %s322
      %p329 = scmp.eq.s32.totalorder %s45, 1
      %p330 = por %p328, %p329
      %p331 = scmp.ne.s32.totalorder %s322, %s323
      %p332 = scmp.eq.s32.totalorder %s45, 0
      %p333 = por %p331, %p332
      %p334 = scmp.ne.s32.totalorder %s322, %s323
      %p335 = scmp.eq.s32.totalorder %s46, 1
      %p336 = por %p334, %p335
      %p338 = scmp.ne.s32.totalorder %s323, %s337
      %p339 = scmp.eq.s32.totalorder %s46, 0
      %p340 = por %p338, %p339
      %s342 = sadd.s32 %s341, 1
      %p345 = scmp.eq.s32.totalorder %s40, 1
      %p346 = scmp.ne.s32.totalorder %s341, %s343
      %p347 = scmp.eq.s32.totalorder %s40, 0
      %p348 = por %p346, %p347
      %p349 = scmp.ne.s32.totalorder %s341, %s343
      %p350 = scmp.eq.s32.totalorder %s45, 1
      %p351 = por %p349, %p350
      %p352 = scmp.ne.s32.totalorder %s343, %s344
      %p353 = scmp.eq.s32.totalorder %s45, 0
      %p354 = por %p352, %p353
      %p355 = scmp.ne.s32.totalorder %s343, %s344
      %p356 = scmp.eq.s32.totalorder %s46, 1
      %p357 = por %p355, %p356
      %p359 = scmp.ne.s32.totalorder %s344, %s358
      %p360 = scmp.eq.s32.totalorder %s46, 0
      %p361 = por %p359, %p360
      %s363 = sadd.s32 %s362, 1
      %p366 = scmp.eq.s32.totalorder %s40, 1
      %p367 = scmp.ne.s32.totalorder %s362, %s364
      %p368 = scmp.eq.s32.totalorder %s40, 0
      %p369 = por %p367, %p368
      %p370 = scmp.ne.s32.totalorder %s362, %s364
      %p371 = scmp.eq.s32.totalorder %s45, 1
      %p372 = por %p370, %p371
      %p373 = scmp.ne.s32.totalorder %s364, %s365
      %p374 = scmp.eq.s32.totalorder %s45, 0
      %p375 = por %p373, %p374
      %p376 = scmp.ne.s32.totalorder %s364, %s365
      %p377 = scmp.eq.s32.totalorder %s46, 1
      %p378 = por %p376, %p377
      %p380 = scmp.ne.s32.totalorder %s365, %s379
      %p381 = scmp.eq.s32.totalorder %s46, 0
      %p382 = por %p380, %p381
      %s384 = sadd.s32 %s383, 1
      %p387 = scmp.eq.s32.totalorder %s40, 1
      %p388 = scmp.ne.s32.totalorder %s383, %s385
      %p389 = scmp.eq.s32.totalorder %s40, 0
      %p390 = por %p388, %p389
      %p391 = scmp.ne.s32.totalorder %s383, %s385
      %p392 = scmp.eq.s32.totalorder %s45, 1
      %p393 = por %p391, %p392
      %p394 = scmp.ne.s32.totalorder %s385, %s386
      %p395 = scmp.eq.s32.totalorder %s45, 0
      %p396 = por %p394, %p395
      %p397 = scmp.ne.s32.totalorder %s385, %s386
      %p398 = scmp.eq.s32.totalorder %s46, 1
      %p399 = por %p397, %p398
      %p401 = scmp.ne.s32.totalorder %s386, %s400
      %p402 = scmp.eq.s32.totalorder %s46, 0
      %p403 = por %p401, %p402
      %s405 = sadd.s32 %s404, 1
      %p408 = scmp.eq.s32.totalorder %s40, 1
      %p409 = scmp.ne.s32.totalorder %s404, %s406
      %p410 = scmp.eq.s32.totalorder %s40, 0
      %p411 = por %p409, %p410
      %p412 = scmp.ne.s32.totalorder %s404, %s406
      %p413 = scmp.eq.s32.totalorder %s45, 1
      %p414 = por %p412, %p413
      %p415 = scmp.ne.s32.totalorder %s406, %s407
      %p416 = scmp.eq.s32.totalorder %s45, 0
      %p417 = por %p415, %p416
      %p418 = scmp.ne.s32.totalorder %s406, %s407
      %p419 = scmp.eq.s32.totalorder %s46, 1
      %p420 = por %p418, %p419
      %p422 = scmp.ne.s32.totalorder %s407, %s421
      %p423 = scmp.eq.s32.totalorder %s46, 0
      %p424 = por %p422, %p423
      %s426 = sadd.s32 %s425, 1
      %p429 = scmp.eq.s32.totalorder %s40, 1
      %p430 = scmp.ne.s32.totalorder %s425, %s427
      %p431 = scmp.eq.s32.totalorder %s40, 0
      %p432 = por %p430, %p431
      %p433 = scmp.ne.s32.totalorder %s425, %s427
      %p434 = scmp.eq.s32.totalorder %s45, 1
      %p435 = por %p433, %p434
      %p436 = scmp.ne.s32.totalorder %s427, %s428
      %p437 = scmp.eq.s32.totalorder %s45, 0
      %p438 = por %p436, %p437
      %p439 = scmp.ne.s32.totalorder %s427, %s428
      %p440 = scmp.eq.s32.totalorder %s46, 1
      %p441 = por %p439, %p440
      %p443 = scmp.ne.s32.totalorder %s428, %s442
      %p444 = scmp.eq.s32.totalorder %s46, 0
      %p445 = por %p443, %p444
      %s447 = sadd.s32 %s446, 1
      %p450 = scmp.eq.s32.totalorder %s40, 1
      %p451 = scmp.ne.s32.totalorder %s446, %s448
      %p452 = scmp.eq.s32.totalorder %s40, 0
      %p453 = por %p451, %p452
      %p454 = scmp.ne.s32.totalorder %s446, %s448
      %p455 = scmp.eq.s32.totalorder %s45, 1
      %p456 = por %p454, %p455
      %p457 = scmp.ne.s32.totalorder %s448, %s449
      %p458 = scmp.eq.s32.totalorder %s45, 0
      %p459 = por %p457, %p458
      %p460 = scmp.ne.s32.totalorder %s448, %s449
      %p461 = scmp.eq.s32.totalorder %s46, 1
      %p462 = por %p460, %p461
      %p464 = scmp.ne.s32.totalorder %s449, %s463
      %p465 = scmp.eq.s32.totalorder %s46, 0
      %p466 = por %p464, %p465
      %s468 = sadd.s32 %s467, 1
      %p471 = scmp.eq.s32.totalorder %s40, 1
      %p472 = scmp.ne.s32.totalorder %s467, %s469
      %p473 = scmp.eq.s32.totalorder %s40, 0
      %p474 = por %p472, %p473
      %p475 = scmp.ne.s32.totalorder %s467, %s469
      %p476 = scmp.eq.s32.totalorder %s45, 1
      %p477 = por %p475, %p476
      %p478 = scmp.ne.s32.totalorder %s469, %s470
      %p479 = scmp.eq.s32.totalorder %s45, 0
      %p480 = por %p478, %p479
      %p481 = scmp.ne.s32.totalorder %s469, %s470
      %p482 = scmp.eq.s32.totalorder %s46, 1
      %p483 = por %p481, %p482
      %p485 = scmp.ne.s32.totalorder %s470, %s484
      %p486 = scmp.eq.s32.totalorder %s46, 0
      %p487 = por %p485, %p486
      %s489 = sadd.s32 %s488, 1
      %p492 = scmp.eq.s32.totalorder %s40, 1
      %p493 = scmp.ne.s32.totalorder %s488, %s490
      %p494 = scmp.eq.s32.totalorder %s40, 0
      %p495 = por %p493, %p494
      %p496 = scmp.ne.s32.totalorder %s488, %s490
      %p497 = scmp.eq.s32.totalorder %s45, 1
      %p498 = por %p496, %p497
      %p499 = scmp.ne.s32.totalorder %s490, %s491
      %p500 = scmp.eq.s32.totalorder %s45, 0
      %p501 = por %p499, %p500
      %p502 = scmp.ne.s32.totalorder %s490, %s491
      %p503 = scmp.eq.s32.totalorder %s46, 1
      %p504 = por %p502, %p503
      %p506 = scmp.ne.s32.totalorder %s491, %s505
      %p507 = scmp.eq.s32.totalorder %s46, 0
      %p508 = por %p506, %p507
      %s510 = sadd.s32 %s509, 1
      %p513 = scmp.eq.s32.totalorder %s40, 1
      %p514 = scmp.ne.s32.totalorder %s509, %s511
      %p515 = scmp.eq.s32.totalorder %s40, 0
      %p516 = por %p514, %p515
      %p517 = scmp.ne.s32.totalorder %s509, %s511
      %p518 = scmp.eq.s32.totalorder %s45, 1
      %p519 = por %p517, %p518
      %p520 = scmp.ne.s32.totalorder %s511, %s512
      %p521 = scmp.eq.s32.totalorder %s45, 0
      %p522 = por %p520, %p521
      %p523 = scmp.ne.s32.totalorder %s511, %s512
      %p524 = scmp.eq.s32.totalorder %s46, 1
      %p525 = por %p523, %p524
      %p527 = scmp.ne.s32.totalorder %s512, %s526
      %p528 = scmp.eq.s32.totalorder %s46, 0
      %p529 = por %p527, %p528
      %s531 = sadd.s32 %s530, 1
      %p534 = scmp.eq.s32.totalorder %s40, 1
      %p535 = scmp.ne.s32.totalorder %s530, %s532
      %p536 = scmp.eq.s32.totalorder %s40, 0
      %p537 = por %p535, %p536
      %p538 = scmp.ne.s32.totalorder %s530, %s532
      %p539 = scmp.eq.s32.totalorder %s45, 1
      %p540 = por %p538, %p539
      %p541 = scmp.ne.s32.totalorder %s532, %s533
      %p542 = scmp.eq.s32.totalorder %s45, 0
      %p543 = por %p541, %p542
      %p544 = scmp.ne.s32.totalorder %s532, %s533
      %p545 = scmp.eq.s32.totalorder %s46, 1
      %p546 = por %p544, %p545
      %p548 = scmp.ne.s32.totalorder %s533, %s547
      %p549 = scmp.eq.s32.totalorder %s46, 0
      %p550 = por %p548, %p549
      %s552 = sadd.s32 %s551, 1
      %p555 = scmp.eq.s32.totalorder %s40, 1
      %p556 = scmp.ne.s32.totalorder %s551, %s553
      %p557 = scmp.eq.s32.totalorder %s40, 0
      %p558 = por %p556, %p557
      %p559 = scmp.ne.s32.totalorder %s551, %s553
      %p560 = scmp.eq.s32.totalorder %s45, 1
      %p561 = por %p559, %p560
      %p562 = scmp.ne.s32.totalorder %s553, %s554
      %p563 = scmp.eq.s32.totalorder %s45, 0
      %p564 = por %p562, %p563
      %p565 = scmp.ne.s32.totalorder %s553, %s554
      %p566 = scmp.eq.s32.totalorder %s46, 1
      %p567 = por %p565, %p566
      %p569 = scmp.ne.s32.totalorder %s554, %s568
      %p570 = scmp.eq.s32.totalorder %s46, 0
      %p571 = por %p569, %p570
      %s572 = ssub.s32 %s40, %s47
      %p573 = scmp.eq.s32.totalorder %s572, 0
      %s575 = sadd.s32 %s574, 1
      %s576 = scalar_select %p573, %s574, %s575
      %p579 = pneg %p573
      %p580 = scmp.eq.s32.totalorder %s40, 1
      %p581 = por %p579, %p580
      %p582 = scmp.ne.s32.totalorder %s574, %s577
      %p583 = scmp.eq.s32.totalorder %s40, 0
      %p584 = por %p582, %p583
      %p585 = scmp.ne.s32.totalorder %s574, %s577
      %p586 = scmp.eq.s32.totalorder %s45, 1
      %p587 = por %p585, %p586
      %p588 = scmp.ne.s32.totalorder %s577, %s578
      %p589 = scmp.eq.s32.totalorder %s45, 0
      %p590 = por %p588, %p589
      %p591 = scmp.ne.s32.totalorder %s577, %s578
      %p592 = scmp.eq.s32.totalorder %s46, 1
      %p593 = por %p591, %p592
      %p595 = scmp.ne.s32.totalorder %s578, %s594
      %p596 = scmp.eq.s32.totalorder %s46, 0
      %p597 = por %p595, %p596
      %p598 = scmp.le.s32.totalorder 1, %s40
      %p599 = scmp.lt.s32.totalorder %s40, 3
      %p600 = pnand %p598, %p599
      %p601 = pneg %p600
      // Predicated region
      $region9: #{decoder_layer.1} parent=5 // pred_check
        _
      $region10: #{decoder_layer.1} parent=5 // pred_check_branch
        %603 = sbr.rel (%p600) target = $region12
      $region11: #{decoder_layer.1} parent=5 // pred_region
        %s604 = ssub.s32 %s40, 1
        // Predicated region
        $region13: #{decoder_layer.1} parent=11 // pred_check
          %p605 = pneg %p165
        $region14: #{decoder_layer.1} parent=11 // pred_check_branch
          %607 = sbr.rel (%p605) target = $region16
        $region15: #{decoder_layer.1} parent=11 // pred_region
          _
        $region16: #{decoder_layer.1} parent=11 // pred_fallthru
          _
        // Predicated region
        $region17: #{decoder_layer.1} parent=11 // pred_check
          %p608 = pneg %p186
        $region18: #{decoder_layer.1} parent=11 // pred_check_branch
          %610 = sbr.rel (%p608) target = $region20
        $region19: #{decoder_layer.1} parent=11 // pred_region
          _
        $region20: #{decoder_layer.1} parent=11 // pred_fallthru
          _
        // Predicated region
        $region21: #{decoder_layer.1} parent=11 // pred_check
          %p611 = pneg %p207
        $region22: #{decoder_layer.1} parent=11 // pred_check_branch
          %613 = sbr.rel (%p611) target = $region24
        $region23: #{decoder_layer.1} parent=11 // pred_region
          _
        $region24: #{decoder_layer.1} parent=11 // pred_fallthru
          _
        // Predicated region
        $region25: #{decoder_layer.1} parent=11 // pred_check
          %p614 = pneg %p228
        $region26: #{decoder_layer.1} parent=11 // pred_check_branch
          %616 = sbr.rel (%p614) target = $region28
        $region27: #{decoder_layer.1} parent=11 // pred_region
          _
        $region28: #{decoder_layer.1} parent=11 // pred_fallthru
          _
        // Predicated region
        $region29: #{decoder_layer.1} parent=11 // pred_check
          %p617 = pneg %p249
        $region30: #{decoder_layer.1} parent=11 // pred_check_branch
          %619 = sbr.rel (%p617) target = $region32
        $region31: #{decoder_layer.1} parent=11 // pred_region
          _
        $region32: #{decoder_layer.1} parent=11 // pred_fallthru
          _
        // Predicated region
        $region33: #{decoder_layer.1} parent=11 // pred_check
          %p620 = pneg %p270
        $region34: #{decoder_layer.1} parent=11 // pred_check_branch
          %622 = sbr.rel (%p620) target = $region36
        $region35: #{decoder_layer.1} parent=11 // pred_region
          _
        $region36: #{decoder_layer.1} parent=11 // pred_fallthru
          _
        // Predicated region
        $region37: #{decoder_layer.1} parent=11 // pred_check
          %p623 = pneg %p291
        $region38: #{decoder_layer.1} parent=11 // pred_check_branch
          %625 = sbr.rel (%p623) target = $region40
        $region39: #{decoder_layer.1} parent=11 // pred_region
          _
        $region40: #{decoder_layer.1} parent=11 // pred_fallthru
          _
        // Predicated region
        $region41: #{decoder_layer.1} parent=11 // pred_check
          %p626 = pneg %p312
        $region42: #{decoder_layer.1} parent=11 // pred_check_branch
          %628 = sbr.rel (%p626) target = $region44
        $region43: #{decoder_layer.1} parent=11 // pred_region
          _
        $region44: #{decoder_layer.1} parent=11 // pred_fallthru
          _
        // Predicated region
        $region45: #{decoder_layer.1} parent=11 // pred_check
          %p629 = pneg %p333
        $region46: #{decoder_layer.1} parent=11 // pred_check_branch
          %631 = sbr.rel (%p629) target = $region48
        $region47: #{decoder_layer.1} parent=11 // pred_region
          _
        $region48: #{decoder_layer.1} parent=11 // pred_fallthru
          _
        // Predicated region
        $region49: #{decoder_layer.1} parent=11 // pred_check
          %p632 = pneg %p354
        $region50: #{decoder_layer.1} parent=11 // pred_check_branch
          %634 = sbr.rel (%p632) target = $region52
        $region51: #{decoder_layer.1} parent=11 // pred_region
          _
        $region52: #{decoder_layer.1} parent=11 // pred_fallthru
          _
        // Predicated region
        $region53: #{decoder_layer.1} parent=11 // pred_check
          %p635 = pneg %p375
        $region54: #{decoder_layer.1} parent=11 // pred_check_branch
          %637 = sbr.rel (%p635) target = $region56
        $region55: #{decoder_layer.1} parent=11 // pred_region
          _
        $region56: #{decoder_layer.1} parent=11 // pred_fallthru
          _
        // Predicated region
        $region57: #{decoder_layer.1} parent=11 // pred_check
          %p638 = pneg %p396
        $region58: #{decoder_layer.1} parent=11 // pred_check_branch
          %640 = sbr.rel (%p638) target = $region60
        $region59: #{decoder_layer.1} parent=11 // pred_region
          %s642 = ssub.s32 16, 16
          %643 = vsyncadd [#allocation6], %s642
          %s645 = sshll.u32 [#allocation5], 4
          %s646 = int_to_ptr.vmem [resolvable:$true] %s645
          %648 = dma.hbm_to_vmem [thread:$0]  %s15, 16, %s646, [#allocation6]
        $region60: #{decoder_layer.1} parent=11 // pred_fallthru
          _
        // Predicated region
        $region61: #{decoder_layer.1} parent=11 // pred_check
          %p649 = pneg %p417
        $region62: #{decoder_layer.1} parent=11 // pred_check_branch
          %651 = sbr.rel (%p649) target = $region64
        $region63: #{decoder_layer.1} parent=11 // pred_region
          %s653 = ssub.s32 512, 512
          %654 = vsyncadd [#allocation6], %s653
          %s655 = sshll.u32 [#allocation7], 4
          %s656 = int_to_ptr.vmem [resolvable:$true] %s655
          %661 = dma.hbm_to_vmem [thread:$0]  %s16, 512, %s656, [#allocation6], 128, 128, 8
        $region64: #{decoder_layer.1} parent=11 // pred_fallthru
          _
        // Predicated region
        $region65: #{decoder_layer.1} parent=11 // pred_check
          %p662 = pneg %p438
        $region66: #{decoder_layer.1} parent=11 // pred_check_branch
          %664 = sbr.rel (%p662) target = $region68
        $region67: #{decoder_layer.1} parent=11 // pred_region
          %s666 = ssub.s32 16, 16
          %667 = vsyncadd [#allocation9], %s666
          %s669 = sshll.u32 [#allocation8], 4
          %s670 = int_to_ptr.vmem [resolvable:$true] %s669
          %672 = dma.hbm_to_vmem [thread:$0]  %s17, 16, %s670, [#allocation9]
        $region68: #{decoder_layer.1} parent=11 // pred_fallthru
          _
        // Predicated region
        $region69: #{decoder_layer.1} parent=11 // pred_check
          %p673 = pneg %p459
        $region70: #{decoder_layer.1} parent=11 // pred_check_branch
          %675 = sbr.rel (%p673) target = $region72
        $region71: #{decoder_layer.1} parent=11 // pred_region
          %s677 = ssub.s32 512, 512
          %678 = vsyncadd [#allocation9], %s677
          %s679 = sshll.u32 [#allocation10], 4
          %s680 = int_to_ptr.vmem [resolvable:$true] %s679
          %685 = dma.hbm_to_vmem [thread:$0]  %s18, 512, %s680, [#allocation9], 128, 128, 8
        $region72: #{decoder_layer.1} parent=11 // pred_fallthru
          _
        // Predicated region
        $region73: #{decoder_layer.1} parent=11 // pred_check
          %p686 = pneg %p480
        $region74: #{decoder_layer.1} parent=11 // pred_check_branch
          %688 = sbr.rel (%p686) target = $region76
        $region75: #{decoder_layer.1} parent=11 // pred_region
          %s690 = ssub.s32 16, 16
          %691 = vsyncadd [#allocation12], %s690
          %s693 = sshll.u32 [#allocation11], 4
          %s694 = int_to_ptr.vmem [resolvable:$true] %s693
          %696 = dma.hbm_to_vmem [thread:$0]  %s19, 16, %s694, [#allocation12]
        $region76: #{decoder_layer.1} parent=11 // pred_fallthru
          _
        // Predicated region
        $region77: #{decoder_layer.1} parent=11 // pred_check
          %p697 = pneg %p501
        $region78: #{decoder_layer.1} parent=11 // pred_check_branch
          %699 = sbr.rel (%p697) target = $region80
        $region79: #{decoder_layer.1} parent=11 // pred_region
          _
        $region80: #{decoder_layer.1} parent=11 // pred_fallthru
          _
        // Predicated region
        $region81: #{decoder_layer.1} parent=11 // pred_check
          %p700 = pneg %p522
        $region82: #{decoder_layer.1} parent=11 // pred_check_branch
          %702 = sbr.rel (%p700) target = $region84
        $region83: #{decoder_layer.1} parent=11 // pred_region
          %s704 = ssub.s32 16, 16
          %705 = vsyncadd [#allocation12], %s704
          %s707 = sshll.u32 [#allocation13], 4
          %s708 = int_to_ptr.vmem [resolvable:$true] %s707
          %710 = dma.hbm_to_vmem [thread:$0]  %s21, 16, %s708, [#allocation12]
        $region84: #{decoder_layer.1} parent=11 // pred_fallthru
          _
        // Predicated region
        $region85: #{decoder_layer.1} parent=11 // pred_check
          %p711 = pneg %p543
        $region86: #{decoder_layer.1} parent=11 // pred_check_branch
          %713 = sbr.rel (%p711) target = $region88
        $region87: #{decoder_layer.1} parent=11 // pred_region
          _
        $region88: #{decoder_layer.1} parent=11 // pred_fallthru
          _
        // Predicated region
        $region89: #{decoder_layer.1} parent=11 // pred_check
          %p714 = pneg %p564
        $region90: #{decoder_layer.1} parent=11 // pred_check_branch
          %716 = sbr.rel (%p714) target = $region92
        $region91: #{decoder_layer.1} parent=11 // pred_region
          %s718 = ssub.s32 16, 16
          %719 = vsyncadd [#allocation15], %s718
          %s721 = sshll.u32 [#allocation14], 4
          %s722 = int_to_ptr.vmem [resolvable:$true] %s721
          %724 = dma.hbm_to_vmem [thread:$0]  %s23, 16, %s722, [#allocation15]
        $region92: #{decoder_layer.1} parent=11 // pred_fallthru
          _
      $region12: #{decoder_layer.1} parent=5 // pred_fallthru
        _
      %p725 = scmp.lt.s32.totalorder %s40, 2
      // Predicated region
      $region93: #{decoder_layer.1} parent=5 // pred_check
        %p726 = pneg %p725
      $region94: #{decoder_layer.1} parent=5 // pred_check_branch
        %728 = sbr.rel (%p726) target = $region96
      $region95: #{decoder_layer.1} parent=5 // pred_region
        // Predicated region
        $region97: #{decoder_layer.1} parent=95 // pred_check
          %p729 = pneg %p60
        $region98: #{decoder_layer.1} parent=95 // pred_check_branch
          %731 = sbr.rel (%p729) target = $region100
        $region99: #{decoder_layer.1} parent=95 // pred_region
          %s732 = sand.u32 %s50, 1
          %s733 = scalar_lea.sflag [#allocation3], %s732
          %s734 = sand.u32 %s50, 1
          %s735 = smul.addr %s734, 8
          %s736 = scalar_lea.vmem [#allocation2], %s735
          %s738 = ssub.s32 128, 128
          %739 = vsyncadd %s733, %s738
          %s740 = smul.addr %s40, 128
          %s741 = scalar_lea.hbm %s0, %s740
          %s743 = sshll.u32 %s736, 4
          %s744 = int_to_ptr.vmem [resolvable:$true] %s743
          %746 = dma.hbm_to_vmem [thread:$0]  %s741, 128, %s744, %s733
        $region100: #{decoder_layer.1} parent=95 // pred_fallthru
          _
        // Predicated region
        $region101: #{decoder_layer.1} parent=95 // pred_check
          %p747 = pneg %p86
        $region102: #{decoder_layer.1} parent=95 // pred_check_branch
          %749 = sbr.rel (%p747) target = $region104
        $region103: #{decoder_layer.1} parent=95 // pred_region
          %s750 = smul.u32 2, %s40
          %p751 = scmp.lt.s32.totalorder %s750, 3
          %s752 = scalar_select %p751, %s750, 3
          %s753 = smul.addr %s752, 8
          %s754 = scalar_lea.vmem %s1, %s753
          %s755 = smul.u32 2, %s40
        $region104: #{decoder_layer.1} parent=95 // pred_fallthru
          _
        // Predicated region
        $region105: #{decoder_layer.1} parent=95 // pred_check
          %p756 = pneg %p112
        $region106: #{decoder_layer.1} parent=95 // pred_check_branch
          %758 = sbr.rel (%p756) target = $region108
        $region107: #{decoder_layer.1} parent=95 // pred_region
          %p759 = scmp.lt.s32.totalorder %s40, 1
          %s760 = scalar_select %p759, %s40, 1
          %s761 = smul.addr %s760, 8
          %s762 = scalar_lea.vmem %s2, %s761
        $region108: #{decoder_layer.1} parent=95 // pred_fallthru
          _
        // Predicated region
        $region109: #{decoder_layer.1} parent=95 // pred_check
          %p763 = pneg %p138
        $region110: #{decoder_layer.1} parent=95 // pred_check_branch
          %765 = sbr.rel (%p763) target = $region112
        $region111: #{decoder_layer.1} parent=95 // pred_region
          %p766 = scmp.lt.s32.totalorder %s40, 1
          %s767 = scalar_select %p766, %s40, 1
          %s768 = smul.addr %s767, 8
          %s769 = scalar_lea.vmem %s3, %s768
        $region112: #{decoder_layer.1} parent=95 // pred_fallthru
          _
      $region96: #{decoder_layer.1} parent=5 // pred_fallthru
        _
      %p770 = scmp.le.s32.totalorder 1, %s40
      %p771 = scmp.lt.s32.totalorder %s40, 3
      %p772 = pnand %p770, %p771
      %p773 = pneg %p772
      // Predicated region
      $region113: #{decoder_layer.1} parent=5 // pred_check
        _
      $region114: #{decoder_layer.1} parent=5 // pred_check_branch
        %775 = sbr.rel (%p772) target = $region116
      $region115: #{decoder_layer.1} parent=5 // pred_region
        %s776 = ssub.s32 %s40, 1
        %s777 = sand.u32 %s53, 1
        %s778 = scalar_lea.sflag [#allocation3], %s777
        %s779 = sand.u32 %s53, 1
        %s780 = smul.addr %s779, 8
        %s781 = scalar_lea.vmem [#allocation2], %s780
        // Predicated region
        $region117: #{decoder_layer.1} parent=115 // pred_check
          %p782 = pneg %p66
        $region118: #{decoder_layer.1} parent=115 // pred_check_branch
          %784 = sbr.rel (%p782) target = $region120
        $region119: #{decoder_layer.1} parent=115 // pred_region
          %785 = dma.done %s778, 128
        $region120: #{decoder_layer.1} parent=115 // pred_fallthru
          _
        // Predicated region
        $region121: #{decoder_layer.1} parent=115 // pred_check
          %p786 = pneg %p396
        $region122: #{decoder_layer.1} parent=115 // pred_check_branch
          %788 = sbr.rel (%p786) target = $region124
        $region123: #{decoder_layer.1} parent=115 // pred_region
          %789 = dma.done [#allocation6], 16
        $region124: #{decoder_layer.1} parent=115 // pred_fallthru
          _
        // Predicated region
        $region125: #{decoder_layer.1} parent=115 // pred_check
          %p790 = pneg %p417
        $region126: #{decoder_layer.1} parent=115 // pred_check_branch
          %792 = sbr.rel (%p790) target = $region128
        $region127: #{decoder_layer.1} parent=115 // pred_region
          %793 = dma.done [#allocation6], 512
        $region128: #{decoder_layer.1} parent=115 // pred_fallthru
          _
        // Predicated region
        $region129: #{decoder_layer.1} parent=115 // pred_check
          %p794 = pneg %p438
        $region130: #{decoder_layer.1} parent=115 // pred_check_branch
          %796 = sbr.rel (%p794) target = $region132
        $region131: #{decoder_layer.1} parent=115 // pred_region
          %797 = dma.done [#allocation9], 16
        $region132: #{decoder_layer.1} parent=115 // pred_fallthru
          _
        // Predicated region
        $region133: #{decoder_layer.1} parent=115 // pred_check
          %p798 = pneg %p459
        $region134: #{decoder_layer.1} parent=115 // pred_check_branch
          %800 = sbr.rel (%p798) target = $region136
        $region135: #{decoder_layer.1} parent=115 // pred_region
          %801 = dma.done [#allocation9], 512
        $region136: #{decoder_layer.1} parent=115 // pred_fallthru
          _
        // Predicated region
        $region137: #{decoder_layer.1} parent=115 // pred_check
          %p802 = pneg %p480
        $region138: #{decoder_layer.1} parent=115 // pred_check_branch
          %804 = sbr.rel (%p802) target = $region140
        $region139: #{decoder_layer.1} parent=115 // pred_region
          %805 = dma.done [#allocation12], 16
        $region140: #{decoder_layer.1} parent=115 // pred_fallthru
          _
        // Predicated region
        $region141: #{decoder_layer.1} parent=115 // pred_check
          %p806 = pneg %p522
        $region142: #{decoder_layer.1} parent=115 // pred_check_branch
          %808 = sbr.rel (%p806) target = $region144
        $region143: #{decoder_layer.1} parent=115 // pred_region
          %809 = dma.done [#allocation12], 16
        $region144: #{decoder_layer.1} parent=115 // pred_fallthru
          _
        // Predicated region
        $region145: #{decoder_layer.1} parent=115 // pred_check
          %p810 = pneg %p564
        $region146: #{decoder_layer.1} parent=115 // pred_check_branch
          %812 = sbr.rel (%p810) target = $region148
        $region147: #{decoder_layer.1} parent=115 // pred_region
          %813 = dma.done [#allocation15], 16
        $region148: #{decoder_layer.1} parent=115 // pred_fallthru
          _
        %s814 = sand.u32 %s53, 1
        %s815 = scalar_lea.sflag [#allocation3], %s814
        %s816 = sand.u32 %s53, 1
        %s817 = smul.addr %s816, 8
        %s818 = scalar_lea.vmem [#allocation2], %s817
        %p819 = pneg %p66
        %p820 = pneg %p63
        %s821 = smul.u32 2, %s45
        %p822 = scmp.lt.s32.totalorder %s821, 3
        %s823 = scalar_select %p822, %s821, 3
        %s824 = smul.addr %s823, 8
        %s825 = scalar_lea.vmem %s1, %s824
        %p826 = pneg %p92
        %p827 = pneg %p89
        %p828 = scmp.lt.s32.totalorder %s45, 1
        %s829 = scalar_select %p828, %s45, 1
        %s830 = smul.addr %s829, 8
        %s831 = scalar_lea.vmem %s2, %s830
        %p832 = pneg %p118
        %p833 = pneg %p115
        %p834 = scmp.lt.s32.totalorder %s45, 1
        %s835 = scalar_select %p834, %s45, 1
        %s836 = smul.addr %s835, 8
        %s837 = scalar_lea.vmem %s3, %s836
        %p838 = pneg %p144
        %p839 = pneg %p141
        %p840 = pneg %p165
        %p841 = pneg %p162
        %p842 = pneg %p186
        %p843 = pneg %p183
        %p844 = pneg %p207
        %p845 = pneg %p204
        %p846 = pneg %p228
        %p847 = pneg %p225
        %p848 = pneg %p249
        %p849 = pneg %p246
        %p850 = pneg %p270
        %p851 = pneg %p267
        %p852 = pneg %p291
        %p853 = pneg %p288
        %p854 = pneg %p312
        %p855 = pneg %p309
        %p856 = pneg %p333
        %p857 = pneg %p330
        %p858 = pneg %p354
        %p859 = pneg %p351
        %p860 = pneg %p375
        %p861 = pneg %p372
        %p862 = pneg %p396
        %p863 = pneg %p393
        %p864 = pneg %p417
        %p865 = pneg %p414
        %p866 = pneg %p438
        %p867 = pneg %p435
        %p868 = pneg %p459
        %p869 = pneg %p456
        %p870 = pneg %p480
        %p871 = pneg %p477
        %p872 = pneg %p501
        %p873 = pneg %p498
        %p874 = pneg %p522
        %p875 = pneg %p519
        %p876 = pneg %p543
        %p877 = pneg %p540
        %p878 = pneg %p564
        %p879 = pneg %p561
        %p880 = pneg %p590
        %p881 = pneg %p587
        %s882 = sand.u32 %s577, 1
        %s883 = scalar_lea.sflag [#allocation4], %s882
        %s884 = sand.u32 %s577, 1
        %s885 = smul.addr %s884, 8
        %s886 = scalar_lea.vmem [#allocation16], %s885
        %s887 = smul.u32 2, %s45
        %p888 = scmp.lt.s32.totalorder %s887, 3
        %s889 = scalar_select %p888, %s887, 3
        %s890 = smul.addr %s889, 8
        %s891 = scalar_lea.vmem %s1, %s890
        %s892 = smul.u32 2, %s45
        %p893 = scmp.lt.s32.totalorder %s45, 1
        %s894 = scalar_select %p893, %s45, 1
        %s895 = smul.addr %s894, 8
        %s896 = scalar_lea.vmem %s2, %s895
        %p897 = scmp.lt.s32.totalorder %s45, 1
        %s898 = scalar_select %p897, %s45, 1
        %s899 = smul.addr %s898, 8
        %s900 = scalar_lea.vmem %s3, %s899
        %v901 = vld [vmem:[%s781] sm:$0xff]
        %v902 = vld [vmem:[%s891] sm:$0xff]
        %v903 = vld [vmem:[%s891 + $0x8] sm:$0xff]
        %v904 = vld [vmem:[%s896] sm:$0xff]
        %v905 = vld [vmem:[%s900] sm:$0xff]
        %v906 = vld [vmem:[%s4] sm:$0x1]
        %v907 = vld [vmem:[%s5] sm:$0x1]
        %vm908 = vcmask 261120
        %v909 = vsel %vm908, %v901, 0.0
        %910 = vadd.xlane.f32.xlu0 %v909
        %v911 = vpop.xlane.xlu0 %910
        %v912 = vrcp.pop 32.0
        %v913 = vmul.f32 %v911, %v912
        %v914 = vsub.f32 %v901, %v913
        %v915 = vmul.f32 %v914, %v914
        %v916 = vsel %vm908, %v915, 0.0
        %917 = vadd.xlane.f32.xlu0 %v916
        %v918 = vpop.xlane.xlu0 %917
        %v919 = vrcp.pop 31.0
        %v920 = vmul.f32 %v918, %v919
        %v921 = vrsqrt.pop %v920
        %v922 = vmul.f32 %v920, %v921
        %vm923 = vcmp.eq.f32.partialorder %v920, inf
        %v924 = vsel %vm923, %v920, %v922
        %vm925 = vcmp.eq.f32.partialorder %v920, 0.0
        %v926 = vand.u32 %v920, 2147483648
        %v927 = vsel %vm925, %v926, %v924
        %v929 = vlaneseq
        %v930 = vshrl.u32 %v929, 7
        %v931 = vsub.s32 0, %v930
        %v932 = vrot.slane %v906, %v931
        %v934 = vmul.f32 %v932, %v914
        %v935 = vadd.f32 %v927, 1e-06
        %v936 = vrcp.pop %v935
        %v937 = vmul.f32 %v934, %v936
        %v939 = vlaneseq
        %v940 = vshrl.u32 %v939, 7
        %v941 = vsub.s32 0, %v940
        %v942 = vrot.slane %v907, %v941
        %v944 = vadd.f32 %v937, %v942
        %v945 = vld [vmem:[%s10] sm:$0xff]
        %v946 = vld [vmem:[%s10 + $0x8] sm:$0xff]
        %v947 = vld [vmem:[%s10 + $0x10] sm:$0xff]
        %v948 = vld [vmem:[%s10 + $0x18] sm:$0xff]
        %v949 = vld [vmem:[%s11] sm:$0x1]
        %v951 = vlaneseq
        %v952 = vshrl.u32 %v951, 7
        %v953 = vsub.s32 0, %v952
        %v954 = vrot.slane %v949, %v953
        %v957 = vsel %vm908, %v944, 0
        %959 = vmatprep.subr.mxu0 0.0
        %960 = vmatpush1.msra.mxu0 %v945
        %961 = vmatprep.subr.mxu0 0.0
        %962 = vmatpush1.msra.mxu0 %v946
        %963 = vmatprep.subr.mxu0 0.0
        %964 = vmatpush1.msra.mxu0 %v947
        %965 = vmatprep.subr.mxu0 0.0
        %966 = vmatpush1.msra.mxu0 %v948
        %967 = vmatprep.subr.mxu0 0.0
        %968 = vmatpush1.msra.mxu0 0.0
        %969 = vmatprep.subr.mxu0 0.0
        %970 = vmatpush1.msra.mxu0 0.0
        %971 = vmatprep.subr.mxu0 0.0
        %972 = vmatpush1.msra.mxu0 0.0
        %973 = vmatprep.subr.mxu0 0.0
        %974 = vmatpush1.msra.mxu0 0.0
        %975 = vmatprep.subr.mxu0 0.0
        %976 = vmatpush1.msra.mxu0 0.0
        %977 = vmatprep.subr.mxu0 0.0
        %978 = vmatpush1.msra.mxu0 0.0
        %979 = vmatprep.subr.mxu0 0.0
        %980 = vmatpush1.msra.mxu0 0.0
        %981 = vmatprep.subr.mxu0 0.0
        %982 = vmatpush1.msra.mxu0 0.0
        %983 = vmatprep.subr.mxu0 0.0
        %984 = vmatpush1.msra.mxu0 0.0
        %985 = vmatprep.subr.mxu0 0.0
        %986 = vmatpush1.msra.mxu0 0.0
        %987 = vmatprep.subr.mxu0 0.0
        %988 = vmatpush1.msra.mxu0 0.0
        %989 = vmatprep.subr.mxu0 0.0
        %990 = vmatpush1.msra.mxu0 0.0
        %991 = vmatprep.subr.mxu0 0.0
        %992 = vmatpush1.msra.mxu0 0.0
        %993 = vmatprep.subr.mxu0 0.0
        %994 = vmatpush1.msra.mxu0 0.0
        %995 = vmatprep.subr.mxu0 0.0
        %996 = vmatpush1.msra.mxu0 0.0
        %997 = vmatprep.subr.mxu0 0.0
        %998 = vmatpush1.msra.mxu0 0.0
        %999 = vmatprep.subr.mxu0 0.0
        %1000 = vmatpush1.msra.mxu0 0.0
        %1001 = vmatprep.subr.mxu0 0.0
        %1002 = vmatpush1.msra.mxu0 0.0
        %1003 = vmatprep.subr.mxu0 0.0
        %1004 = vmatpush1.msra.mxu0 0.0
        %1005 = vmatprep.subr.mxu0 0.0
        %1006 = vmatpush1.msra.mxu0 0.0
        %1007 = vmatprep.subr.mxu0 0.0
        %1008 = vmatpush1.msra.mxu0 0.0
        %1009 = vmatprep.subr.mxu0 0.0
        %1010 = vmatpush1.msra.mxu0 0.0
        %1011 = vmatprep.subr.mxu0 0.0
        %1012 = vmatpush1.msra.mxu0 0.0
        %1013 = vmatprep.subr.mxu0 0.0
        %1014 = vmatpush1.msra.mxu0 0.0
        %1015 = vmatprep.subr.mxu0 0.0
        %1016 = vmatpush1.msra.mxu0 0.0
        %1017 = vmatprep.subr.mxu0 0.0
        %1018 = vmatpush1.msra.mxu0 0.0
        %1019 = vmatprep.subr.mxu0 0.0
        %1020 = vmatpush1.msra.mxu0 0.0
        %1021 = vmatprep.subr.mxu0 0.0
        %1022 = vmatpush1.msra.mxu0 0.0
        %1023 = vmatprep.mubr.f32.mxu0 0.0
        %1024 = vmatmul.mubr.f32.gmra.mrb[0].mxu0 %v957
        %v1025 = vpop.f32.mrb[0].mxu0
        %v1026 = vadd.f32 %v954, %v1025
        %v1027 = vpop.f32.mrb[0].mxu0
        %1028 = vdwg.mxu0
        %v1029 = vld [vmem:[%s12] sm:$0xff]
        %v1030 = vld [vmem:[%s12 + $0x8] sm:$0xff]
        %v1031 = vld [vmem:[%s12 + $0x10] sm:$0xff]
        %v1032 = vld [vmem:[%s12 + $0x18] sm:$0xff]
        %1034 = vrot.lane.b32.xlu0 %v1026, 96
        %v1035 = vpop.permute.xlu0 %1034
        %vm1036 = vcmask 64512
        %v1037 = vsel %vm1036, %v1026, 0
        %v1039 = vsel %vm1036, %v1035, 0
        %1041 = vmatprep.subr.mxu0 0.0
        %1042 = vmatpush1.xpose.msra.mxu0 %v1039
        %1043 = vmatprep.subr.mxu0 0.0
        %1044 = vmatpush1.xpose.msra.mxu0 0.0
        %1045 = vmatprep.subr.mxu0 0.0
        %1046 = vmatpush1.xpose.msra.mxu0 0.0
        %1047 = vmatprep.subr.mxu0 0.0
        %1048 = vmatpush1.xpose.msra.mxu0 0.0
        %1049 = vmatprep.subr.mxu0 0.0
        %1050 = vmatpush1.xpose.msra.mxu0 0.0
        %1051 = vmatprep.subr.mxu0 0.0
        %1052 = vmatpush1.xpose.msra.mxu0 0.0
        %1053 = vmatprep.subr.mxu0 0.0
        %1054 = vmatpush1.xpose.msra.mxu0 0.0
        %1055 = vmatprep.subr.mxu0 0.0
        %1056 = vmatpush1.xpose.msra.mxu0 0.0
        %1057 = vmatprep.subr.mxu0 0.0
        %1058 = vmatpush1.xpose.msra.mxu0 0.0
        %1059 = vmatprep.subr.mxu0 0.0
        %1060 = vmatpush1.xpose.msra.mxu0 0.0
        %1061 = vmatprep.subr.mxu0 0.0
        %1062 = vmatpush1.xpose.msra.mxu0 0.0
        %1063 = vmatprep.subr.mxu0 0.0
        %1064 = vmatpush1.xpose.msra.mxu0 0.0
        %1065 = vmatprep.subr.mxu0 0.0
        %1066 = vmatpush1.xpose.msra.mxu0 0.0
        %1067 = vmatprep.subr.mxu0 0.0
        %1068 = vmatpush1.xpose.msra.mxu0 0.0
        %1069 = vmatprep.subr.mxu0 0.0
        %1070 = vmatpush1.xpose.msra.mxu0 0.0
        %1071 = vmatprep.subr.mxu0 0.0
        %1072 = vmatpush1.xpose.msra.mxu0 0.0
        %1073 = vmatprep.subr.mxu0 0.0
        %1074 = vmatpush1.xpose.msra.mxu0 0.0
        %1075 = vmatprep.subr.mxu0 0.0
        %1076 = vmatpush1.xpose.msra.mxu0 0.0
        %1077 = vmatprep.subr.mxu0 0.0
        %1078 = vmatpush1.xpose.msra.mxu0 0.0
        %1079 = vmatprep.subr.mxu0 0.0
        %1080 = vmatpush1.xpose.msra.mxu0 0.0
        %1081 = vmatprep.subr.mxu0 0.0
        %1082 = vmatpush1.xpose.msra.mxu0 0.0
        %1083 = vmatprep.subr.mxu0 0.0
        %1084 = vmatpush1.xpose.msra.mxu0 0.0
        %1085 = vmatprep.subr.mxu0 0.0
        %1086 = vmatpush1.xpose.msra.mxu0 0.0
        %1087 = vmatprep.subr.mxu0 0.0
        %1088 = vmatpush1.xpose.msra.mxu0 0.0
        %1089 = vmatprep.subr.mxu0 0.0
        %1090 = vmatpush1.xpose.msra.mxu0 0.0
        %1091 = vmatprep.subr.mxu0 0.0
        %1092 = vmatpush1.xpose.msra.mxu0 0.0
        %1093 = vmatprep.subr.mxu0 0.0
        %1094 = vmatpush1.xpose.msra.mxu0 0.0
        %1095 = vmatprep.subr.mxu0 0.0
        %1096 = vmatpush1.xpose.msra.mxu0 0.0
        %1097 = vmatprep.subr.mxu0 0.0
        %1098 = vmatpush1.xpose.msra.mxu0 0.0
        %1099 = vmatprep.subr.mxu0 0.0
        %1100 = vmatpush1.xpose.msra.mxu0 0.0
        %1101 = vmatprep.subr.mxu0 0.0
        %1102 = vmatpush1.xpose.msra.mxu0 0.0
        %1103 = vmatprep.subr.mxu0 0.0
        %1104 = vmatpush1.xpose.msra.mxu0 0.0
        %1105 = vmatprep.mubr.f32.mxu0 0.0
        %1106 = vmatmul.mubr.f32.gmra.mrb[0].mxu0 %v1037
        %v1107 = vpop.f32.mrb[0].mxu0
        %v1108 = vadd.f32 0.0, %v1107
        %v1109 = vpop.f32.mrb[0].mxu0
        %1110 = vdwg.mxu0
        %v1111 = vmul.f32 %v1108, 0.35355338
        %vm1112 = vcmp.eq.f32.partialorder %v904, 0.0
        %v1113 = vsel %vm1112, -1e+09, %v1111
        %v1114 = vsel %vm1036, %v1113, -inf
        %1115 = vmax.xlane.f32.xlu0 %v1114
        %v1116 = vpop.xlane.xlu0 %1115
        %v1117 = vsub.f32 %v1113, %v1116
        %v1118 = vmul.f32 %v1117, 1.442695
        %v1119 = vpow.pop %v1118
        %v1120 = vsel %vm1036, %v1119, 0.0
        %1121 = vadd.xlane.f32.xlu0 %v1120
        %v1122 = vpop.xlane.xlu0 %1121
        %v1123 = vrcp.pop %v1122
        %v1124 = vmul.f32 %v1119, %v1123
        %1125 = vrot.lane.b32.xlu0 %v1026, 64
        %v1126 = vpop.permute.xlu0 %1125
        %v1129 = vsel %vm1036, %v1124, 0
        %1131 = vmatprep.subr.mxu0 0.0
        %1132 = vmatpush1.msra.mxu0 %v1126
        %1133 = vmatprep.subr.mxu0 0.0
        %1134 = vmatpush1.msra.mxu0 0.0
        %1135 = vmatprep.subr.mxu0 0.0
        %1136 = vmatpush1.msra.mxu0 0.0
        %1137 = vmatprep.subr.mxu0 0.0
        %1138 = vmatpush1.msra.mxu0 0.0
        %1139 = vmatprep.subr.mxu0 0.0
        %1140 = vmatpush1.msra.mxu0 0.0
        %1141 = vmatprep.subr.mxu0 0.0
        %1142 = vmatpush1.msra.mxu0 0.0
        %1143 = vmatprep.subr.mxu0 0.0
        %1144 = vmatpush1.msra.mxu0 0.0
        %1145 = vmatprep.subr.mxu0 0.0
        %1146 = vmatpush1.msra.mxu0 0.0
        %1147 = vmatprep.subr.mxu0 0.0
        %1148 = vmatpush1.msra.mxu0 0.0
        %1149 = vmatprep.subr.mxu0 0.0
        %1150 = vmatpush1.msra.mxu0 0.0
        %1151 = vmatprep.subr.mxu0 0.0
        %1152 = vmatpush1.msra.mxu0 0.0
        %1153 = vmatprep.subr.mxu0 0.0
        %1154 = vmatpush1.msra.mxu0 0.0
        %1155 = vmatprep.subr.mxu0 0.0
        %1156 = vmatpush1.msra.mxu0 0.0
        %1157 = vmatprep.subr.mxu0 0.0
        %1158 = vmatpush1.msra.mxu0 0.0
        %1159 = vmatprep.subr.mxu0 0.0
        %1160 = vmatpush1.msra.mxu0 0.0
        %1161 = vmatprep.subr.mxu0 0.0
        %1162 = vmatpush1.msra.mxu0 0.0
        %1163 = vmatprep.subr.mxu0 0.0
        %1164 = vmatpush1.msra.mxu0 0.0
        %1165 = vmatprep.subr.mxu0 0.0
        %1166 = vmatpush1.msra.mxu0 0.0
        %1167 = vmatprep.subr.mxu0 0.0
        %1168 = vmatpush1.msra.mxu0 0.0
        %1169 = vmatprep.subr.mxu0 0.0
        %1170 = vmatpush1.msra.mxu0 0.0
        %1171 = vmatprep.subr.mxu0 0.0
        %1172 = vmatpush1.msra.mxu0 0.0
        %1173 = vmatprep.subr.mxu0 0.0
        %1174 = vmatpush1.msra.mxu0 0.0
        %1175 = vmatprep.subr.mxu0 0.0
        %1176 = vmatpush1.msra.mxu0 0.0
        %1177 = vmatprep.subr.mxu0 0.0
        %1178 = vmatpush1.msra.mxu0 0.0
        %1179 = vmatprep.subr.mxu0 0.0
        %1180 = vmatpush1.msra.mxu0 0.0
        %1181 = vmatprep.subr.mxu0 0.0
        %1182 = vmatpush1.msra.mxu0 0.0
        %1183 = vmatprep.subr.mxu0 0.0
        %1184 = vmatpush1.msra.mxu0 0.0
        %1185 = vmatprep.subr.mxu0 0.0
        %1186 = vmatpush1.msra.mxu0 0.0
        %1187 = vmatprep.subr.mxu0 0.0
        %1188 = vmatpush1.msra.mxu0 0.0
        %1189 = vmatprep.subr.mxu0 0.0
        %1190 = vmatpush1.msra.mxu0 0.0
        %1191 = vmatprep.subr.mxu0 0.0
        %1192 = vmatpush1.msra.mxu0 0.0
        %1193 = vmatprep.subr.mxu0 0.0
        %1194 = vmatpush1.msra.mxu0 0.0
        %1195 = vmatprep.mubr.f32.mxu0 0.0
        %1196 = vmatmul.mubr.f32.gmra.mrb[0].mxu0 %v1129
        %v1197 = vpop.f32.mrb[0].mxu0
        %v1198 = vadd.f32 0.0, %v1197
        %v1199 = vpop.f32.mrb[0].mxu0
        %1200 = vdwg.mxu0
        %1201 = vrot.lane.b32.xlu0 %v1026, 120
        %v1202 = vpop.permute.xlu0 %1201
        %1203 = vrot.lane.b32.xlu0 %v1026, 88
        %v1204 = vpop.permute.xlu0 %1203
        %v1205 = vsel %vm1036, %v1202, 0
        %v1207 = vsel %vm1036, %v1204, 0
        %1209 = vmatprep.subr.mxu0 0.0
        %1210 = vmatpush1.xpose.msra.mxu0 %v1207
        %1211 = vmatprep.subr.mxu0 0.0
        %1212 = vmatpush1.xpose.msra.mxu0 0.0
        %1213 = vmatprep.subr.mxu0 0.0
        %1214 = vmatpush1.xpose.msra.mxu0 0.0
        %1215 = vmatprep.subr.mxu0 0.0
        %1216 = vmatpush1.xpose.msra.mxu0 0.0
        %1217 = vmatprep.subr.mxu0 0.0
        %1218 = vmatpush1.xpose.msra.mxu0 0.0
        %1219 = vmatprep.subr.mxu0 0.0
        %1220 = vmatpush1.xpose.msra.mxu0 0.0
        %1221 = vmatprep.subr.mxu0 0.0
        %1222 = vmatpush1.xpose.msra.mxu0 0.0
        %1223 = vmatprep.subr.mxu0 0.0
        %1224 = vmatpush1.xpose.msra.mxu0 0.0
        %1225 = vmatprep.subr.mxu0 0.0
        %1226 = vmatpush1.xpose.msra.mxu0 0.0
        %1227 = vmatprep.subr.mxu0 0.0
        %1228 = vmatpush1.xpose.msra.mxu0 0.0
        %1229 = vmatprep.subr.mxu0 0.0
        %1230 = vmatpush1.xpose.msra.mxu0 0.0
        %1231 = vmatprep.subr.mxu0 0.0
        %1232 = vmatpush1.xpose.msra.mxu0 0.0
        %1233 = vmatprep.subr.mxu0 0.0
        %1234 = vmatpush1.xpose.msra.mxu0 0.0
        %1235 = vmatprep.subr.mxu0 0.0
        %1236 = vmatpush1.xpose.msra.mxu0 0.0
        %1237 = vmatprep.subr.mxu0 0.0
        %1238 = vmatpush1.xpose.msra.mxu0 0.0
        %1239 = vmatprep.subr.mxu0 0.0
        %1240 = vmatpush1.xpose.msra.mxu0 0.0
        %1241 = vmatprep.subr.mxu0 0.0
        %1242 = vmatpush1.xpose.msra.mxu0 0.0
        %1243 = vmatprep.subr.mxu0 0.0
        %1244 = vmatpush1.xpose.msra.mxu0 0.0
        %1245 = vmatprep.subr.mxu0 0.0
        %1246 = vmatpush1.xpose.msra.mxu0 0.0
        %1247 = vmatprep.subr.mxu0 0.0
        %1248 = vmatpush1.xpose.msra.mxu0 0.0
        %1249 = vmatprep.subr.mxu0 0.0
        %1250 = vmatpush1.xpose.msra.mxu0 0.0
        %1251 = vmatprep.subr.mxu0 0.0
        %1252 = vmatpush1.xpose.msra.mxu0 0.0
        %1253 = vmatprep.subr.mxu0 0.0
        %1254 = vmatpush1.xpose.msra.mxu0 0.0
        %1255 = vmatprep.subr.mxu0 0.0
        %1256 = vmatpush1.xpose.msra.mxu0 0.0
        %1257 = vmatprep.subr.mxu0 0.0
        %1258 = vmatpush1.xpose.msra.mxu0 0.0
        %1259 = vmatprep.subr.mxu0 0.0
        %1260 = vmatpush1.xpose.msra.mxu0 0.0
        %1261 = vmatprep.subr.mxu0 0.0
        %1262 = vmatpush1.xpose.msra.mxu0 0.0
        %1263 = vmatprep.subr.mxu0 0.0
        %1264 = vmatpush1.xpose.msra.mxu0 0.0
        %1265 = vmatprep.subr.mxu0 0.0
        %1266 = vmatpush1.xpose.msra.mxu0 0.0
        %1267 = vmatprep.subr.mxu0 0.0
        %1268 = vmatpush1.xpose.msra.mxu0 0.0
        %1269 = vmatprep.subr.mxu0 0.0
        %1270 = vmatpush1.xpose.msra.mxu0 0.0
        %1271 = vmatprep.subr.mxu0 0.0
        %1272 = vmatpush1.xpose.msra.mxu0 0.0
        %1273 = vmatprep.mubr.f32.mxu0 0.0
        %1274 = vmatmul.mubr.f32.gmra.mrb[0].mxu0 %v1205
        %v1275 = vpop.f32.mrb[0].mxu0
        %v1276 = vadd.f32 0.0, %v1275
        %v1277 = vpop.f32.mrb[0].mxu0
        %1278 = vdwg.mxu0
        %v1279 = vmul.f32 %v1276, 0.35355338
        %v1280 = vsel %vm1112, -1e+09, %v1279
        %v1281 = vsel %vm1036, %v1280, -inf
        %1282 = vmax.xlane.f32.xlu0 %v1281
        %v1283 = vpop.xlane.xlu0 %1282
        %v1284 = vsub.f32 %v1280, %v1283
        %v1285 = vmul.f32 %v1284, 1.442695
        %v1286 = vpow.pop %v1285
        %v1287 = vsel %vm1036, %v1286, 0.0
        %1288 = vadd.xlane.f32.xlu0 %v1287
        %v1289 = vpop.xlane.xlu0 %1288
        %v1290 = vrcp.pop %v1289
        %v1291 = vmul.f32 %v1286, %v1290
        %1292 = vrot.lane.b32.xlu0 %v1026, 56
        %v1293 = vpop.permute.xlu0 %1292
        %v1296 = vsel %vm1036, %v1291, 0
        %1298 = vmatprep.subr.mxu0 0.0
        %1299 = vmatpush1.msra.mxu0 %v1293
        %1300 = vmatprep.subr.mxu0 0.0
        %1301 = vmatpush1.msra.mxu0 0.0
        %1302 = vmatprep.subr.mxu0 0.0
        %1303 = vmatpush1.msra.mxu0 0.0
        %1304 = vmatprep.subr.mxu0 0.0
        %1305 = vmatpush1.msra.mxu0 0.0
        %1306 = vmatprep.subr.mxu0 0.0
        %1307 = vmatpush1.msra.mxu0 0.0
        %1308 = vmatprep.subr.mxu0 0.0
        %1309 = vmatpush1.msra.mxu0 0.0
        %1310 = vmatprep.subr.mxu0 0.0
        %1311 = vmatpush1.msra.mxu0 0.0
        %1312 = vmatprep.subr.mxu0 0.0
        %1313 = vmatpush1.msra.mxu0 0.0
        %1314 = vmatprep.subr.mxu0 0.0
        %1315 = vmatpush1.msra.mxu0 0.0
        %1316 = vmatprep.subr.mxu0 0.0
        %1317 = vmatpush1.msra.mxu0 0.0
        %1318 = vmatprep.subr.mxu0 0.0
        %1319 = vmatpush1.msra.mxu0 0.0
        %1320 = vmatprep.subr.mxu0 0.0
        %1321 = vmatpush1.msra.mxu0 0.0
        %1322 = vmatprep.subr.mxu0 0.0
        %1323 = vmatpush1.msra.mxu0 0.0
        %1324 = vmatprep.subr.mxu0 0.0
        %1325 = vmatpush1.msra.mxu0 0.0
        %1326 = vmatprep.subr.mxu0 0.0
        %1327 = vmatpush1.msra.mxu0 0.0
        %1328 = vmatprep.subr.mxu0 0.0
        %1329 = vmatpush1.msra.mxu0 0.0
        %1330 = vmatprep.subr.mxu0 0.0
        %1331 = vmatpush1.msra.mxu0 0.0
        %1332 = vmatprep.subr.mxu0 0.0
        %1333 = vmatpush1.msra.mxu0 0.0
        %1334 = vmatprep.subr.mxu0 0.0
        %1335 = vmatpush1.msra.mxu0 0.0
        %1336 = vmatprep.subr.mxu0 0.0
        %1337 = vmatpush1.msra.mxu0 0.0
        %1338 = vmatprep.subr.mxu0 0.0
        %1339 = vmatpush1.msra.mxu0 0.0
        %1340 = vmatprep.subr.mxu0 0.0
        %1341 = vmatpush1.msra.mxu0 0.0
        %1342 = vmatprep.subr.mxu0 0.0
        %1343 = vmatpush1.msra.mxu0 0.0
        %1344 = vmatprep.subr.mxu0 0.0
        %1345 = vmatpush1.msra.mxu0 0.0
        %1346 = vmatprep.subr.mxu0 0.0
        %1347 = vmatpush1.msra.mxu0 0.0
        %1348 = vmatprep.subr.mxu0 0.0
        %1349 = vmatpush1.msra.mxu0 0.0
        %1350 = vmatprep.subr.mxu0 0.0
        %1351 = vmatpush1.msra.mxu0 0.0
        %1352 = vmatprep.subr.mxu0 0.0
        %1353 = vmatpush1.msra.mxu0 0.0
        %1354 = vmatprep.subr.mxu0 0.0
        %1355 = vmatpush1.msra.mxu0 0.0
        %1356 = vmatprep.subr.mxu0 0.0
        %1357 = vmatpush1.msra.mxu0 0.0
        %1358 = vmatprep.subr.mxu0 0.0
        %1359 = vmatpush1.msra.mxu0 0.0
        %1360 = vmatprep.subr.mxu0 0.0
        %1361 = vmatpush1.msra.mxu0 0.0
        %1362 = vmatprep.mubr.f32.mxu0 0.0
        %1363 = vmatmul.mubr.f32.gmra.mrb[0].mxu0 %v1296
        %v1364 = vpop.f32.mrb[0].mxu0
        %v1365 = vadd.f32 0.0, %v1364
        %v1366 = vpop.f32.mrb[0].mxu0
        %1367 = vdwg.mxu0
        %v1369 = vsel %vm1036, %v1365, 0
        %1371 = vmatprep.subr.mxu0 0.0
        %1372 = vmatpush1.msra.mxu0 %v1030
        %1373 = vmatprep.subr.mxu0 0.0
        %1374 = vmatpush1.msra.mxu0 0.0
        %1375 = vmatprep.subr.mxu0 0.0
        %1376 = vmatpush1.msra.mxu0 0.0
        %1377 = vmatprep.subr.mxu0 0.0
        %1378 = vmatpush1.msra.mxu0 0.0
        %1379 = vmatprep.subr.mxu0 0.0
        %1380 = vmatpush1.msra.mxu0 0.0
        %1381 = vmatprep.subr.mxu0 0.0
        %1382 = vmatpush1.msra.mxu0 0.0
        %1383 = vmatprep.subr.mxu0 0.0
        %1384 = vmatpush1.msra.mxu0 0.0
        %1385 = vmatprep.subr.mxu0 0.0
        %1386 = vmatpush1.msra.mxu0 0.0
        %1387 = vmatprep.subr.mxu0 0.0
        %1388 = vmatpush1.msra.mxu0 0.0
        %1389 = vmatprep.subr.mxu0 0.0
        %1390 = vmatpush1.msra.mxu0 0.0
        %1391 = vmatprep.subr.mxu0 0.0
        %1392 = vmatpush1.msra.mxu0 0.0
        %1393 = vmatprep.subr.mxu0 0.0
        %1394 = vmatpush1.msra.mxu0 0.0
        %1395 = vmatprep.subr.mxu0 0.0
        %1396 = vmatpush1.msra.mxu0 0.0
        %1397 = vmatprep.subr.mxu0 0.0
        %1398 = vmatpush1.msra.mxu0 0.0
        %1399 = vmatprep.subr.mxu0 0.0
        %1400 = vmatpush1.msra.mxu0 0.0
        %1401 = vmatprep.subr.mxu0 0.0
        %1402 = vmatpush1.msra.mxu0 0.0
        %1403 = vmatprep.subr.mxu0 0.0
        %1404 = vmatpush1.msra.mxu0 0.0
        %1405 = vmatprep.subr.mxu0 0.0
        %1406 = vmatpush1.msra.mxu0 0.0
        %1407 = vmatprep.subr.mxu0 0.0
        %1408 = vmatpush1.msra.mxu0 0.0
        %1409 = vmatprep.subr.mxu0 0.0
        %1410 = vmatpush1.msra.mxu0 0.0
        %1411 = vmatprep.subr.mxu0 0.0
        %1412 = vmatpush1.msra.mxu0 0.0
        %1413 = vmatprep.subr.mxu0 0.0
        %1414 = vmatpush1.msra.mxu0 0.0
        %1415 = vmatprep.subr.mxu0 0.0
        %1416 = vmatpush1.msra.mxu0 0.0
        %1417 = vmatprep.subr.mxu0 0.0
        %1418 = vmatpush1.msra.mxu0 0.0
        %1419 = vmatprep.subr.mxu0 0.0
        %1420 = vmatpush1.msra.mxu0 0.0
        %1421 = vmatprep.subr.mxu0 0.0
        %1422 = vmatpush1.msra.mxu0 0.0
        %1423 = vmatprep.subr.mxu0 0.0
        %1424 = vmatpush1.msra.mxu0 0.0
        %1425 = vmatprep.subr.mxu0 0.0
        %1426 = vmatpush1.msra.mxu0 0.0
        %1427 = vmatprep.subr.mxu0 0.0
        %1428 = vmatpush1.msra.mxu0 0.0
        %1429 = vmatprep.subr.mxu0 0.0
        %1430 = vmatpush1.msra.mxu0 0.0
        %1431 = vmatprep.subr.mxu0 0.0
        %1432 = vmatpush1.msra.mxu0 0.0
        %1433 = vmatprep.subr.mxu0 0.0
        %1434 = vmatpush1.msra.mxu0 0.0
        %1435 = vmatprep.mubr.f32.mxu0 0.0
        %1436 = vmatmul.mubr.f32.gmra.mrb[0].mxu0 %v1369
        %v1437 = vpop.f32.mrb[0].mxu0
        %v1438 = vadd.f32 0.0, %v1437
        %v1439 = vpop.f32.mrb[0].mxu0
        %1440 = vdwg.mxu0
        %v1442 = vsel %vm1036, %v1198, 0
        %1444 = vmatprep.subr.mxu0 0.0
        %1445 = vmatpush1.msra.mxu0 %v1029
        %1446 = vmatprep.subr.mxu0 0.0
        %1447 = vmatpush1.msra.mxu0 0.0
        %1448 = vmatprep.subr.mxu0 0.0
        %1449 = vmatpush1.msra.mxu0 0.0
        %1450 = vmatprep.subr.mxu0 0.0
        %1451 = vmatpush1.msra.mxu0 0.0
        %1452 = vmatprep.subr.mxu0 0.0
        %1453 = vmatpush1.msra.mxu0 0.0
        %1454 = vmatprep.subr.mxu0 0.0
        %1455 = vmatpush1.msra.mxu0 0.0
        %1456 = vmatprep.subr.mxu0 0.0
        %1457 = vmatpush1.msra.mxu0 0.0
        %1458 = vmatprep.subr.mxu0 0.0
        %1459 = vmatpush1.msra.mxu0 0.0
        %1460 = vmatprep.subr.mxu0 0.0
        %1461 = vmatpush1.msra.mxu0 0.0
        %1462 = vmatprep.subr.mxu0 0.0
        %1463 = vmatpush1.msra.mxu0 0.0
        %1464 = vmatprep.subr.mxu0 0.0
        %1465 = vmatpush1.msra.mxu0 0.0
        %1466 = vmatprep.subr.mxu0 0.0
        %1467 = vmatpush1.msra.mxu0 0.0
        %1468 = vmatprep.subr.mxu0 0.0
        %1469 = vmatpush1.msra.mxu0 0.0
        %1470 = vmatprep.subr.mxu0 0.0
        %1471 = vmatpush1.msra.mxu0 0.0
        %1472 = vmatprep.subr.mxu0 0.0
        %1473 = vmatpush1.msra.mxu0 0.0
        %1474 = vmatprep.subr.mxu0 0.0
        %1475 = vmatpush1.msra.mxu0 0.0
        %1476 = vmatprep.subr.mxu0 0.0
        %1477 = vmatpush1.msra.mxu0 0.0
        %1478 = vmatprep.subr.mxu0 0.0
        %1479 = vmatpush1.msra.mxu0 0.0
        %1480 = vmatprep.subr.mxu0 0.0
        %1481 = vmatpush1.msra.mxu0 0.0
        %1482 = vmatprep.subr.mxu0 0.0
        %1483 = vmatpush1.msra.mxu0 0.0
        %1484 = vmatprep.subr.mxu0 0.0
        %1485 = vmatpush1.msra.mxu0 0.0
        %1486 = vmatprep.subr.mxu0 0.0
        %1487 = vmatpush1.msra.mxu0 0.0
        %1488 = vmatprep.subr.mxu0 0.0
        %1489 = vmatpush1.msra.mxu0 0.0
        %1490 = vmatprep.subr.mxu0 0.0
        %1491 = vmatpush1.msra.mxu0 0.0
        %1492 = vmatprep.subr.mxu0 0.0
        %1493 = vmatpush1.msra.mxu0 0.0
        %1494 = vmatprep.subr.mxu0 0.0
        %1495 = vmatpush1.msra.mxu0 0.0
        %1496 = vmatprep.subr.mxu0 0.0
        %1497 = vmatpush1.msra.mxu0 0.0
        %1498 = vmatprep.subr.mxu0 0.0
        %1499 = vmatpush1.msra.mxu0 0.0
        %1500 = vmatprep.subr.mxu0 0.0
        %1501 = vmatpush1.msra.mxu0 0.0
        %1502 = vmatprep.subr.mxu0 0.0
        %1503 = vmatpush1.msra.mxu0 0.0
        %1504 = vmatprep.subr.mxu0 0.0
        %1505 = vmatpush1.msra.mxu0 0.0
        %1506 = vmatprep.subr.mxu0 0.0
        %1507 = vmatpush1.msra.mxu0 0.0
        %1508 = vmatprep.mubr.f32.mxu0 0.0
        %1509 = vmatmul.mubr.f32.gmra.mrb[0].mxu0 %v1442
        %v1510 = vpop.f32.mrb[0].mxu0
        %v1511 = vadd.f32 %v1438, %v1510
        %v1512 = vpop.f32.mrb[0].mxu0
        %1513 = vdwg.mxu0
        %1514 = vrot.lane.b32.xlu0 %v1026, 112
        %v1515 = vpop.permute.xlu0 %1514
        %1516 = vrot.lane.b32.xlu0 %v1026, 80
        %v1517 = vpop.permute.xlu0 %1516
        %v1518 = vsel %vm1036, %v1515, 0
        %v1520 = vsel %vm1036, %v1517, 0
        %1522 = vmatprep.subr.mxu0 0.0
        %1523 = vmatpush1.xpose.msra.mxu0 %v1520
        %1524 = vmatprep.subr.mxu0 0.0
        %1525 = vmatpush1.xpose.msra.mxu0 0.0
        %1526 = vmatprep.subr.mxu0 0.0
        %1527 = vmatpush1.xpose.msra.mxu0 0.0
        %1528 = vmatprep.subr.mxu0 0.0
        %1529 = vmatpush1.xpose.msra.mxu0 0.0
        %1530 = vmatprep.subr.mxu0 0.0
        %1531 = vmatpush1.xpose.msra.mxu0 0.0
        %1532 = vmatprep.subr.mxu0 0.0
        %1533 = vmatpush1.xpose.msra.mxu0 0.0
        %1534 = vmatprep.subr.mxu0 0.0
        %1535 = vmatpush1.xpose.msra.mxu0 0.0
        %1536 = vmatprep.subr.mxu0 0.0
        %1537 = vmatpush1.xpose.msra.mxu0 0.0
        %1538 = vmatprep.subr.mxu0 0.0
        %1539 = vmatpush1.xpose.msra.mxu0 0.0
        %1540 = vmatprep.subr.mxu0 0.0
        %1541 = vmatpush1.xpose.msra.mxu0 0.0
        %1542 = vmatprep.subr.mxu0 0.0
        %1543 = vmatpush1.xpose.msra.mxu0 0.0
        %1544 = vmatprep.subr.mxu0 0.0
        %1545 = vmatpush1.xpose.msra.mxu0 0.0
        %1546 = vmatprep.subr.mxu0 0.0
        %1547 = vmatpush1.xpose.msra.mxu0 0.0
        %1548 = vmatprep.subr.mxu0 0.0
        %1549 = vmatpush1.xpose.msra.mxu0 0.0
        %1550 = vmatprep.subr.mxu0 0.0
        %1551 = vmatpush1.xpose.msra.mxu0 0.0
        %1552 = vmatprep.subr.mxu0 0.0
        %1553 = vmatpush1.xpose.msra.mxu0 0.0
        %1554 = vmatprep.subr.mxu0 0.0
        %1555 = vmatpush1.xpose.msra.mxu0 0.0
        %1556 = vmatprep.subr.mxu0 0.0
        %1557 = vmatpush1.xpose.msra.mxu0 0.0
        %1558 = vmatprep.subr.mxu0 0.0
        %1559 = vmatpush1.xpose.msra.mxu0 0.0
        %1560 = vmatprep.subr.mxu0 0.0
        %1561 = vmatpush1.xpose.msra.mxu0 0.0
        %1562 = vmatprep.subr.mxu0 0.0
        %1563 = vmatpush1.xpose.msra.mxu0 0.0
        %1564 = vmatprep.subr.mxu0 0.0
        %1565 = vmatpush1.xpose.msra.mxu0 0.0
        %1566 = vmatprep.subr.mxu0 0.0
        %1567 = vmatpush1.xpose.msra.mxu0 0.0
        %1568 = vmatprep.subr.mxu0 0.0
        %1569 = vmatpush1.xpose.msra.mxu0 0.0
        %1570 = vmatprep.subr.mxu0 0.0
        %1571 = vmatpush1.xpose.msra.mxu0 0.0
        %1572 = vmatprep.subr.mxu0 0.0
        %1573 = vmatpush1.xpose.msra.mxu0 0.0
        %1574 = vmatprep.subr.mxu0 0.0
        %1575 = vmatpush1.xpose.msra.mxu0 0.0
        %1576 = vmatprep.subr.mxu0 0.0
        %1577 = vmatpush1.xpose.msra.mxu0 0.0
        %1578 = vmatprep.subr.mxu0 0.0
        %1579 = vmatpush1.xpose.msra.mxu0 0.0
        %1580 = vmatprep.subr.mxu0 0.0
        %1581 = vmatpush1.xpose.msra.mxu0 0.0
        %1582 = vmatprep.subr.mxu0 0.0
        %1583 = vmatpush1.xpose.msra.mxu0 0.0
        %1584 = vmatprep.subr.mxu0 0.0
        %1585 = vmatpush1.xpose.msra.mxu0 0.0
        %1586 = vmatprep.mubr.f32.mxu0 0.0
        %1587 = vmatmul.mubr.f32.gmra.mrb[0].mxu0 %v1518
        %v1588 = vpop.f32.mrb[0].mxu0
        %v1589 = vadd.f32 0.0, %v1588
        %v1590 = vpop.f32.mrb[0].mxu0
        %1591 = vdwg.mxu0
        %v1592 = vmul.f32 %v1589, 0.35355338
        %v1593 = vsel %vm1112, -1e+09, %v1592
        %v1594 = vsel %vm1036, %v1593, -inf
        %1595 = vmax.xlane.f32.xlu0 %v1594
        %v1596 = vpop.xlane.xlu0 %1595
        %v1597 = vsub.f32 %v1593, %v1596
        %v1598 = vmul.f32 %v1597, 1.442695
        %v1599 = vpow.pop %v1598
        %v1600 = vsel %vm1036, %v1599, 0.0
        %1601 = vadd.xlane.f32.xlu0 %v1600
        %v1602 = vpop.xlane.xlu0 %1601
        %v1603 = vrcp.pop %v1602
        %v1604 = vmul.f32 %v1599, %v1603
        %1605 = vrot.lane.b32.xlu0 %v1026, 48
        %v1606 = vpop.permute.xlu0 %1605
        %v1609 = vsel %vm1036, %v1604, 0
        %1611 = vmatprep.subr.mxu0 0.0
        %1612 = vmatpush1.msra.mxu0 %v1606
        %1613 = vmatprep.subr.mxu0 0.0
        %1614 = vmatpush1.msra.mxu0 0.0
        %1615 = vmatprep.subr.mxu0 0.0
        %1616 = vmatpush1.msra.mxu0 0.0
        %1617 = vmatprep.subr.mxu0 0.0
        %1618 = vmatpush1.msra.mxu0 0.0
        %1619 = vmatprep.subr.mxu0 0.0
        %1620 = vmatpush1.msra.mxu0 0.0
        %1621 = vmatprep.subr.mxu0 0.0
        %1622 = vmatpush1.msra.mxu0 0.0
        %1623 = vmatprep.subr.mxu0 0.0
        %1624 = vmatpush1.msra.mxu0 0.0
        %1625 = vmatprep.subr.mxu0 0.0
        %1626 = vmatpush1.msra.mxu0 0.0
        %1627 = vmatprep.subr.mxu0 0.0
        %1628 = vmatpush1.msra.mxu0 0.0
        %1629 = vmatprep.subr.mxu0 0.0
        %1630 = vmatpush1.msra.mxu0 0.0
        %1631 = vmatprep.subr.mxu0 0.0
        %1632 = vmatpush1.msra.mxu0 0.0
        %1633 = vmatprep.subr.mxu0 0.0
        %1634 = vmatpush1.msra.mxu0 0.0
        %1635 = vmatprep.subr.mxu0 0.0
        %1636 = vmatpush1.msra.mxu0 0.0
        %1637 = vmatprep.subr.mxu0 0.0
        %1638 = vmatpush1.msra.mxu0 0.0
        %1639 = vmatprep.subr.mxu0 0.0
        %1640 = vmatpush1.msra.mxu0 0.0
        %1641 = vmatprep.subr.mxu0 0.0
        %1642 = vmatpush1.msra.mxu0 0.0
        %1643 = vmatprep.subr.mxu0 0.0
        %1644 = vmatpush1.msra.mxu0 0.0
        %1645 = vmatprep.subr.mxu0 0.0
        %1646 = vmatpush1.msra.mxu0 0.0
        %1647 = vmatprep.subr.mxu0 0.0
        %1648 = vmatpush1.msra.mxu0 0.0
        %1649 = vmatprep.subr.mxu0 0.0
        %1650 = vmatpush1.msra.mxu0 0.0
        %1651 = vmatprep.subr.mxu0 0.0
        %1652 = vmatpush1.msra.mxu0 0.0
        %1653 = vmatprep.subr.mxu0 0.0
        %1654 = vmatpush1.msra.mxu0 0.0
        %1655 = vmatprep.subr.mxu0 0.0
        %1656 = vmatpush1.msra.mxu0 0.0
        %1657 = vmatprep.subr.mxu0 0.0
        %1658 = vmatpush1.msra.mxu0 0.0
        %1659 = vmatprep.subr.mxu0 0.0
        %1660 = vmatpush1.msra.mxu0 0.0
        %1661 = vmatprep.subr.mxu0 0.0
        %1662 = vmatpush1.msra.mxu0 0.0
        %1663 = vmatprep.subr.mxu0 0.0
        %1664 = vmatpush1.msra.mxu0 0.0
        %1665 = vmatprep.subr.mxu0 0.0
        %1666 = vmatpush1.msra.mxu0 0.0
        %1667 = vmatprep.subr.mxu0 0.0
        %1668 = vmatpush1.msra.mxu0 0.0
        %1669 = vmatprep.subr.mxu0 0.0
        %1670 = vmatpush1.msra.mxu0 0.0
        %1671 = vmatprep.subr.mxu0 0.0
        %1672 = vmatpush1.msra.mxu0 0.0
        %1673 = vmatprep.subr.mxu0 0.0
        %1674 = vmatpush1.msra.mxu0 0.0
        %1675 = vmatprep.mubr.f32.mxu0 0.0
        %1676 = vmatmul.mubr.f32.gmra.mrb[0].mxu0 %v1609
        %v1677 = vpop.f32.mrb[0].mxu0
        %v1678 = vadd.f32 0.0, %v1677
        %v1679 = vpop.f32.mrb[0].mxu0
        %1680 = vdwg.mxu0
        %v1682 = vsel %vm1036, %v1678, 0
        %1684 = vmatprep.subr.mxu0 0.0
        %1685 = vmatpush1.msra.mxu0 %v1031
        %1686 = vmatprep.subr.mxu0 0.0
        %1687 = vmatpush1.msra.mxu0 0.0
        %1688 = vmatprep.subr.mxu0 0.0
        %1689 = vmatpush1.msra.mxu0 0.0
        %1690 = vmatprep.subr.mxu0 0.0
        %1691 = vmatpush1.msra.mxu0 0.0
        %1692 = vmatprep.subr.mxu0 0.0
        %1693 = vmatpush1.msra.mxu0 0.0
        %1694 = vmatprep.subr.mxu0 0.0
        %1695 = vmatpush1.msra.mxu0 0.0
        %1696 = vmatprep.subr.mxu0 0.0
        %1697 = vmatpush1.msra.mxu0 0.0
        %1698 = vmatprep.subr.mxu0 0.0
        %1699 = vmatpush1.msra.mxu0 0.0
        %1700 = vmatprep.subr.mxu0 0.0
        %1701 = vmatpush1.msra.mxu0 0.0
        %1702 = vmatprep.subr.mxu0 0.0
        %1703 = vmatpush1.msra.mxu0 0.0
        %1704 = vmatprep.subr.mxu0 0.0
        %1705 = vmatpush1.msra.mxu0 0.0
        %1706 = vmatprep.subr.mxu0 0.0
        %1707 = vmatpush1.msra.mxu0 0.0
        %1708 = vmatprep.subr.mxu0 0.0
        %1709 = vmatpush1.msra.mxu0 0.0
        %1710 = vmatprep.subr.mxu0 0.0
        %1711 = vmatpush1.msra.mxu0 0.0
        %1712 = vmatprep.subr.mxu0 0.0
        %1713 = vmatpush1.msra.mxu0 0.0
        %1714 = vmatprep.subr.mxu0 0.0
        %1715 = vmatpush1.msra.mxu0 0.0
        %1716 = vmatprep.subr.mxu0 0.0
        %1717 = vmatpush1.msra.mxu0 0.0
        %1718 = vmatprep.subr.mxu0 0.0
        %1719 = vmatpush1.msra.mxu0 0.0
        %1720 = vmatprep.subr.mxu0 0.0
        %1721 = vmatpush1.msra.mxu0 0.0
        %1722 = vmatprep.subr.mxu0 0.0
        %1723 = vmatpush1.msra.mxu0 0.0
        %1724 = vmatprep.subr.mxu0 0.0
        %1725 = vmatpush1.msra.mxu0 0.0
        %1726 = vmatprep.subr.mxu0 0.0
        %1727 = vmatpush1.msra.mxu0 0.0
        %1728 = vmatprep.subr.mxu0 0.0
        %1729 = vmatpush1.msra.mxu0 0.0
        %1730 = vmatprep.subr.mxu0 0.0
        %1731 = vmatpush1.msra.mxu0 0.0
        %1732 = vmatprep.subr.mxu0 0.0
        %1733 = vmatpush1.msra.mxu0 0.0
        %1734 = vmatprep.subr.mxu0 0.0
        %1735 = vmatpush1.msra.mxu0 0.0
        %1736 = vmatprep.subr.mxu0 0.0
        %1737 = vmatpush1.msra.mxu0 0.0
        %1738 = vmatprep.subr.mxu0 0.0
        %1739 = vmatpush1.msra.mxu0 0.0
        %1740 = vmatprep.subr.mxu0 0.0
        %1741 = vmatpush1.msra.mxu0 0.0
        %1742 = vmatprep.subr.mxu0 0.0
        %1743 = vmatpush1.msra.mxu0 0.0
        %1744 = vmatprep.subr.mxu0 0.0
        %1745 = vmatpush1.msra.mxu0 0.0
        %1746 = vmatprep.subr.mxu0 0.0
        %1747 = vmatpush1.msra.mxu0 0.0
        %1748 = vmatprep.mubr.f32.mxu0 0.0
        %1749 = vmatmul.mubr.f32.gmra.mrb[0].mxu0 %v1682
        %v1750 = vpop.f32.mrb[0].mxu0
        %v1751 = vadd.f32 0.0, %v1750
        %v1752 = vpop.f32.mrb[0].mxu0
        %1753 = vdwg.mxu0
        %v1754 = vadd.f32 %v1511, %v1751
        %1755 = vrot.lane.b32.xlu0 %v1026, 104
        %v1756 = vpop.permute.xlu0 %1755
        %1757 = vrot.lane.b32.xlu0 %v1026, 72
        %v1758 = vpop.permute.xlu0 %1757
        %v1759 = vsel %vm1036, %v1756, 0
        %v1761 = vsel %vm1036, %v1758, 0
        %1763 = vmatprep.subr.mxu0 0.0
        %1764 = vmatpush1.xpose.msra.mxu0 %v1761
        %1765 = vmatprep.subr.mxu0 0.0
        %1766 = vmatpush1.xpose.msra.mxu0 0.0
        %1767 = vmatprep.subr.mxu0 0.0
        %1768 = vmatpush1.xpose.msra.mxu0 0.0
        %1769 = vmatprep.subr.mxu0 0.0
        %1770 = vmatpush1.xpose.msra.mxu0 0.0
        %1771 = vmatprep.subr.mxu0 0.0
        %1772 = vmatpush1.xpose.msra.mxu0 0.0
        %1773 = vmatprep.subr.mxu0 0.0
        %1774 = vmatpush1.xpose.msra.mxu0 0.0
        %1775 = vmatprep.subr.mxu0 0.0
        %1776 = vmatpush1.xpose.msra.mxu0 0.0
        %1777 = vmatprep.subr.mxu0 0.0
        %1778 = vmatpush1.xpose.msra.mxu0 0.0
        %1779 = vmatprep.subr.mxu0 0.0
        %1780 = vmatpush1.xpose.msra.mxu0 0.0
        %1781 = vmatprep.subr.mxu0 0.0
        %1782 = vmatpush1.xpose.msra.mxu0 0.0
        %1783 = vmatprep.subr.mxu0 0.0
        %1784 = vmatpush1.xpose.msra.mxu0 0.0
        %1785 = vmatprep.subr.mxu0 0.0
        %1786 = vmatpush1.xpose.msra.mxu0 0.0
        %1787 = vmatprep.subr.mxu0 0.0
        %1788 = vmatpush1.xpose.msra.mxu0 0.0
        %1789 = vmatprep.subr.mxu0 0.0
        %1790 = vmatpush1.xpose.msra.mxu0 0.0
        %1791 = vmatprep.subr.mxu0 0.0
        %1792 = vmatpush1.xpose.msra.mxu0 0.0
        %1793 = vmatprep.subr.mxu0 0.0
        %1794 = vmatpush1.xpose.msra.mxu0 0.0
        %1795 = vmatprep.subr.mxu0 0.0
        %1796 = vmatpush1.xpose.msra.mxu0 0.0
        %1797 = vmatprep.subr.mxu0 0.0
        %1798 = vmatpush1.xpose.msra.mxu0 0.0
        %1799 = vmatprep.subr.mxu0 0.0
        %1800 = vmatpush1.xpose.msra.mxu0 0.0
        %1801 = vmatprep.subr.mxu0 0.0
        %1802 = vmatpush1.xpose.msra.mxu0 0.0
        %1803 = vmatprep.subr.mxu0 0.0
        %1804 = vmatpush1.xpose.msra.mxu0 0.0
        %1805 = vmatprep.subr.mxu0 0.0
        %1806 = vmatpush1.xpose.msra.mxu0 0.0
        %1807 = vmatprep.subr.mxu0 0.0
        %1808 = vmatpush1.xpose.msra.mxu0 0.0
        %1809 = vmatprep.subr.mxu0 0.0
        %1810 = vmatpush1.xpose.msra.mxu0 0.0
        %1811 = vmatprep.subr.mxu0 0.0
        %1812 = vmatpush1.xpose.msra.mxu0 0.0
        %1813 = vmatprep.subr.mxu0 0.0
        %1814 = vmatpush1.xpose.msra.mxu0 0.0
        %1815 = vmatprep.subr.mxu0 0.0
        %1816 = vmatpush1.xpose.msra.mxu0 0.0
        %1817 = vmatprep.subr.mxu0 0.0
        %1818 = vmatpush1.xpose.msra.mxu0 0.0
        %1819 = vmatprep.subr.mxu0 0.0
        %1820 = vmatpush1.xpose.msra.mxu0 0.0
        %1821 = vmatprep.subr.mxu0 0.0
        %1822 = vmatpush1.xpose.msra.mxu0 0.0
        %1823 = vmatprep.subr.mxu0 0.0
        %1824 = vmatpush1.xpose.msra.mxu0 0.0
        %1825 = vmatprep.subr.mxu0 0.0
        %1826 = vmatpush1.xpose.msra.mxu0 0.0
        %1827 = vmatprep.mubr.f32.mxu0 0.0
        %1828 = vmatmul.mubr.f32.gmra.mrb[0].mxu0 %v1759
        %v1829 = vpop.f32.mrb[0].mxu0
        %v1830 = vadd.f32 0.0, %v1829
        %v1831 = vpop.f32.mrb[0].mxu0
        %1832 = vdwg.mxu0
        %v1833 = vmul.f32 %v1830, 0.35355338
        %v1834 = vsel %vm1112, -1e+09, %v1833
        %v1835 = vsel %vm1036, %v1834, -inf
        %1836 = vmax.xlane.f32.xlu0 %v1835
        %v1837 = vpop.xlane.xlu0 %1836
        %v1838 = vsub.f32 %v1834, %v1837
        %v1839 = vmul.f32 %v1838, 1.442695
        %v1840 = vpow.pop %v1839
        %v1841 = vsel %vm1036, %v1840, 0.0
        %1842 = vadd.xlane.f32.xlu0 %v1841
        %v1843 = vpop.xlane.xlu0 %1842
        %v1844 = vrcp.pop %v1843
        %v1845 = vmul.f32 %v1840, %v1844
        %1846 = vrot.lane.b32.xlu0 %v1026, 40
        %v1847 = vpop.permute.xlu0 %1846
        %v1850 = vsel %vm1036, %v1845, 0
        %1852 = vmatprep.subr.mxu0 0.0
        %1853 = vmatpush1.msra.mxu0 %v1847
        %1854 = vmatprep.subr.mxu0 0.0
        %1855 = vmatpush1.msra.mxu0 0.0
        %1856 = vmatprep.subr.mxu0 0.0
        %1857 = vmatpush1.msra.mxu0 0.0
        %1858 = vmatprep.subr.mxu0 0.0
        %1859 = vmatpush1.msra.mxu0 0.0
        %1860 = vmatprep.subr.mxu0 0.0
        %1861 = vmatpush1.msra.mxu0 0.0
        %1862 = vmatprep.subr.mxu0 0.0
        %1863 = vmatpush1.msra.mxu0 0.0
        %1864 = vmatprep.subr.mxu0 0.0
        %1865 = vmatpush1.msra.mxu0 0.0
        %1866 = vmatprep.subr.mxu0 0.0
        %1867 = vmatpush1.msra.mxu0 0.0
        %1868 = vmatprep.subr.mxu0 0.0
        %1869 = vmatpush1.msra.mxu0 0.0
        %1870 = vmatprep.subr.mxu0 0.0
        %1871 = vmatpush1.msra.mxu0 0.0
        %1872 = vmatprep.subr.mxu0 0.0
        %1873 = vmatpush1.msra.mxu0 0.0
        %1874 = vmatprep.subr.mxu0 0.0
        %1875 = vmatpush1.msra.mxu0 0.0
        %1876 = vmatprep.subr.mxu0 0.0
        %1877 = vmatpush1.msra.mxu0 0.0
        %1878 = vmatprep.subr.mxu0 0.0
        %1879 = vmatpush1.msra.mxu0 0.0
        %1880 = vmatprep.subr.mxu0 0.0
        %1881 = vmatpush1.msra.mxu0 0.0
        %1882 = vmatprep.subr.mxu0 0.0
        %1883 = vmatpush1.msra.mxu0 0.0
        %1884 = vmatprep.subr.mxu0 0.0
        %1885 = vmatpush1.msra.mxu0 0.0
        %1886 = vmatprep.subr.mxu0 0.0
        %1887 = vmatpush1.msra.mxu0 0.0
        %1888 = vmatprep.subr.mxu0 0.0
        %1889 = vmatpush1.msra.mxu0 0.0
        %1890 = vmatprep.subr.mxu0 0.0
        %1891 = vmatpush1.msra.mxu0 0.0
        %1892 = vmatprep.subr.mxu0 0.0
        %1893 = vmatpush1.msra.mxu0 0.0
        %1894 = vmatprep.subr.mxu0 0.0
        %1895 = vmatpush1.msra.mxu0 0.0
        %1896 = vmatprep.subr.mxu0 0.0
        %1897 = vmatpush1.msra.mxu0 0.0
        %1898 = vmatprep.subr.mxu0 0.0
        %1899 = vmatpush1.msra.mxu0 0.0
        %1900 = vmatprep.subr.mxu0 0.0
        %1901 = vmatpush1.msra.mxu0 0.0
        %1902 = vmatprep.subr.mxu0 0.0
        %1903 = vmatpush1.msra.mxu0 0.0
        %1904 = vmatprep.subr.mxu0 0.0
        %1905 = vmatpush1.msra.mxu0 0.0
        %1906 = vmatprep.subr.mxu0 0.0
        %1907 = vmatpush1.msra.mxu0 0.0
        %1908 = vmatprep.subr.mxu0 0.0
        %1909 = vmatpush1.msra.mxu0 0.0
        %1910 = vmatprep.subr.mxu0 0.0
        %1911 = vmatpush1.msra.mxu0 0.0
        %1912 = vmatprep.subr.mxu0 0.0
        %1913 = vmatpush1.msra.mxu0 0.0
        %1914 = vmatprep.subr.mxu0 0.0
        %1915 = vmatpush1.msra.mxu0 0.0
        %1916 = vmatprep.mubr.f32.mxu0 0.0
        %1917 = vmatmul.mubr.f32.gmra.mrb[0].mxu0 %v1850
        %v1918 = vpop.f32.mrb[0].mxu0
        %v1919 = vadd.f32 0.0, %v1918
        %v1920 = vpop.f32.mrb[0].mxu0
        %1921 = vdwg.mxu0
        %v1923 = vsel %vm1036, %v1919, 0
        %1925 = vmatprep.subr.mxu0 0.0
        %1926 = vmatpush1.msra.mxu0 %v1032
        %1927 = vmatprep.subr.mxu0 0.0
        %1928 = vmatpush1.msra.mxu0 0.0
        %1929 = vmatprep.subr.mxu0 0.0
        %1930 = vmatpush1.msra.mxu0 0.0
        %1931 = vmatprep.subr.mxu0 0.0
        %1932 = vmatpush1.msra.mxu0 0.0
        %1933 = vmatprep.subr.mxu0 0.0
        %1934 = vmatpush1.msra.mxu0 0.0
        %1935 = vmatprep.subr.mxu0 0.0
        %1936 = vmatpush1.msra.mxu0 0.0
        %1937 = vmatprep.subr.mxu0 0.0
        %1938 = vmatpush1.msra.mxu0 0.0
        %1939 = vmatprep.subr.mxu0 0.0
        %1940 = vmatpush1.msra.mxu0 0.0
        %1941 = vmatprep.subr.mxu0 0.0
        %1942 = vmatpush1.msra.mxu0 0.0
        %1943 = vmatprep.subr.mxu0 0.0
        %1944 = vmatpush1.msra.mxu0 0.0
        %1945 = vmatprep.subr.mxu0 0.0
        %1946 = vmatpush1.msra.mxu0 0.0
        %1947 = vmatprep.subr.mxu0 0.0
        %1948 = vmatpush1.msra.mxu0 0.0
        %1949 = vmatprep.subr.mxu0 0.0
        %1950 = vmatpush1.msra.mxu0 0.0
        %1951 = vmatprep.subr.mxu0 0.0
        %1952 = vmatpush1.msra.mxu0 0.0
        %1953 = vmatprep.subr.mxu0 0.0
        %1954 = vmatpush1.msra.mxu0 0.0
        %1955 = vmatprep.subr.mxu0 0.0
        %1956 = vmatpush1.msra.mxu0 0.0
        %1957 = vmatprep.subr.mxu0 0.0
        %1958 = vmatpush1.msra.mxu0 0.0
        %1959 = vmatprep.subr.mxu0 0.0
        %1960 = vmatpush1.msra.mxu0 0.0
        %1961 = vmatprep.subr.mxu0 0.0
        %1962 = vmatpush1.msra.mxu0 0.0
        %1963 = vmatprep.subr.mxu0 0.0
        %1964 = vmatpush1.msra.mxu0 0.0
        %1965 = vmatprep.subr.mxu0 0.0
        %1966 = vmatpush1.msra.mxu0 0.0
        %1967 = vmatprep.subr.mxu0 0.0
        %1968 = vmatpush1.msra.mxu0 0.0
        %1969 = vmatprep.subr.mxu0 0.0
        %1970 = vmatpush1.msra.mxu0 0.0
        %1971 = vmatprep.subr.mxu0 0.0
        %1972 = vmatpush1.msra.mxu0 0.0
        %1973 = vmatprep.subr.mxu0 0.0
        %1974 = vmatpush1.msra.mxu0 0.0
        %1975 = vmatprep.subr.mxu0 0.0
        %1976 = vmatpush1.msra.mxu0 0.0
        %1977 = vmatprep.subr.mxu0 0.0
        %1978 = vmatpush1.msra.mxu0 0.0
        %1979 = vmatprep.subr.mxu0 0.0
        %1980 = vmatpush1.msra.mxu0 0.0
        %1981 = vmatprep.subr.mxu0 0.0
        %1982 = vmatpush1.msra.mxu0 0.0
        %1983 = vmatprep.subr.mxu0 0.0
        %1984 = vmatpush1.msra.mxu0 0.0
        %1985 = vmatprep.subr.mxu0 0.0
        %1986 = vmatpush1.msra.mxu0 0.0
        %1987 = vmatprep.subr.mxu0 0.0
        %1988 = vmatpush1.msra.mxu0 0.0
        %1989 = vmatprep.mubr.f32.mxu0 0.0
        %1990 = vmatmul.mubr.f32.gmra.mrb[0].mxu0 %v1923
        %v1991 = vpop.f32.mrb[0].mxu0
        %v1992 = vadd.f32 0.0, %v1991
        %v1993 = vpop.f32.mrb[0].mxu0
        %1994 = vdwg.mxu0
        %v1995 = vadd.f32 %v1754, %v1992
        %v1996 = vadd.f32 %v901, %v1995
        %v1997 = vld [vmem:[%s13] sm:$0x1]
        %v1999 = vlaneseq
        %v2000 = vshrl.u32 %v1999, 7
        %v2001 = vsub.s32 0, %v2000
        %v2002 = vrot.slane %v1997, %v2001
        %v2004 = vadd.f32 %v1996, %v2002
        %v2005 = vld [vmem:[%s6] sm:$0x1]
        %v2006 = vld [vmem:[%s7] sm:$0x1]
        %v2007 = vsel %vm908, %v2004, 0.0
        %2008 = vadd.xlane.f32.xlu0 %v2007
        %v2009 = vpop.xlane.xlu0 %2008
        %v2010 = vmul.f32 %v2009, %v912
        %v2011 = vsub.f32 %v2004, %v2010
        %v2012 = vmul.f32 %v2011, %v2011
        %v2013 = vsel %vm908, %v2012, 0.0
        %2014 = vadd.xlane.f32.xlu0 %v2013
        %v2015 = vpop.xlane.xlu0 %2014
        %v2016 = vmul.f32 %v2015, %v919
        %v2017 = vrsqrt.pop %v2016
        %v2018 = vmul.f32 %v2016, %v2017
        %vm2019 = vcmp.eq.f32.partialorder %v2016, inf
        %v2020 = vsel %vm2019, %v2016, %v2018
        %vm2021 = vcmp.eq.f32.partialorder %v2016, 0.0
        %v2022 = vand.u32 %v2016, 2147483648
        %v2023 = vsel %vm2021, %v2022, %v2020
        %v2025 = vlaneseq
        %v2026 = vshrl.u32 %v2025, 7
        %v2027 = vsub.s32 0, %v2026
        %v2028 = vrot.slane %v2005, %v2027
        %v2030 = vmul.f32 %v2028, %v2011
        %v2031 = vadd.f32 %v2023, 1e-06
        %v2032 = vrcp.pop %v2031
        %v2033 = vmul.f32 %v2030, %v2032
        %v2035 = vlaneseq
        %v2036 = vshrl.u32 %v2035, 7
        %v2037 = vsub.s32 0, %v2036
        %v2038 = vrot.slane %v2006, %v2037
        %v2040 = vadd.f32 %v2033, %v2038
        %v2041 = vld [vmem:[%s14] sm:$0xff]
        %v2042 = vld [vmem:[%s14 + $0x8] sm:$0xff]
        %v2043 = vld [vmem:[%s14 + $0x10] sm:$0xff]
        %v2044 = vld [vmem:[%s14 + $0x18] sm:$0xff]
        %v2045 = vld [vmem:[#allocation5] sm:$0x1]
        %v2047 = vlaneseq
        %v2048 = vshrl.u32 %v2047, 7
        %v2049 = vsub.s32 0, %v2048
        %v2050 = vrot.slane %v2045, %v2049
        %v2053 = vsel %vm908, %v2040, 0
        %2055 = vmatprep.subr.mxu0 0.0
        %2056 = vmatpush1.msra.mxu0 %v2041
        %2057 = vmatprep.subr.mxu0 0.0
        %2058 = vmatpush1.msra.mxu0 %v2042
        %2059 = vmatprep.subr.mxu0 0.0
        %2060 = vmatpush1.msra.mxu0 %v2043
        %2061 = vmatprep.subr.mxu0 0.0
        %2062 = vmatpush1.msra.mxu0 %v2044
        %2063 = vmatprep.subr.mxu0 0.0
        %2064 = vmatpush1.msra.mxu0 0.0
        %2065 = vmatprep.subr.mxu0 0.0
        %2066 = vmatpush1.msra.mxu0 0.0
        %2067 = vmatprep.subr.mxu0 0.0
        %2068 = vmatpush1.msra.mxu0 0.0
        %2069 = vmatprep.subr.mxu0 0.0
        %2070 = vmatpush1.msra.mxu0 0.0
        %2071 = vmatprep.subr.mxu0 0.0
        %2072 = vmatpush1.msra.mxu0 0.0
        %2073 = vmatprep.subr.mxu0 0.0
        %2074 = vmatpush1.msra.mxu0 0.0
        %2075 = vmatprep.subr.mxu0 0.0
        %2076 = vmatpush1.msra.mxu0 0.0
        %2077 = vmatprep.subr.mxu0 0.0
        %2078 = vmatpush1.msra.mxu0 0.0
        %2079 = vmatprep.subr.mxu0 0.0
        %2080 = vmatpush1.msra.mxu0 0.0
        %2081 = vmatprep.subr.mxu0 0.0
        %2082 = vmatpush1.msra.mxu0 0.0
        %2083 = vmatprep.subr.mxu0 0.0
        %2084 = vmatpush1.msra.mxu0 0.0
        %2085 = vmatprep.subr.mxu0 0.0
        %2086 = vmatpush1.msra.mxu0 0.0
        %2087 = vmatprep.subr.mxu0 0.0
        %2088 = vmatpush1.msra.mxu0 0.0
        %2089 = vmatprep.subr.mxu0 0.0
        %2090 = vmatpush1.msra.mxu0 0.0
        %2091 = vmatprep.subr.mxu0 0.0
        %2092 = vmatpush1.msra.mxu0 0.0
        %2093 = vmatprep.subr.mxu0 0.0
        %2094 = vmatpush1.msra.mxu0 0.0
        %2095 = vmatprep.subr.mxu0 0.0
        %2096 = vmatpush1.msra.mxu0 0.0
        %2097 = vmatprep.subr.mxu0 0.0
        %2098 = vmatpush1.msra.mxu0 0.0
        %2099 = vmatprep.subr.mxu0 0.0
        %2100 = vmatpush1.msra.mxu0 0.0
        %2101 = vmatprep.subr.mxu0 0.0
        %2102 = vmatpush1.msra.mxu0 0.0
        %2103 = vmatprep.subr.mxu0 0.0
        %2104 = vmatpush1.msra.mxu0 0.0
        %2105 = vmatprep.subr.mxu0 0.0
        %2106 = vmatpush1.msra.mxu0 0.0
        %2107 = vmatprep.subr.mxu0 0.0
        %2108 = vmatpush1.msra.mxu0 0.0
        %2109 = vmatprep.subr.mxu0 0.0
        %2110 = vmatpush1.msra.mxu0 0.0
        %2111 = vmatprep.subr.mxu0 0.0
        %2112 = vmatpush1.msra.mxu0 0.0
        %2113 = vmatprep.subr.mxu0 0.0
        %2114 = vmatpush1.msra.mxu0 0.0
        %2115 = vmatprep.subr.mxu0 0.0
        %2116 = vmatpush1.msra.mxu0 0.0
        %2117 = vmatprep.subr.mxu0 0.0
        %2118 = vmatpush1.msra.mxu0 0.0
        %2119 = vmatprep.mubr.f32.mxu0 0.0
        %2120 = vmatmul.mubr.f32.gmra.mrb[0].mxu0 %v2053
        %v2121 = vpop.f32.mrb[0].mxu0
        %v2122 = vadd.f32 %v2050, %v2121
        %v2123 = vpop.f32.mrb[0].mxu0
        %2124 = vdwg.mxu0
        %v2125 = vld [vmem:[#allocation7] sm:$0xff]
        %v2126 = vld [vmem:[#allocation7 + $0x8] sm:$0xff]
        %v2127 = vld [vmem:[#allocation7 + $0x10] sm:$0xff]
        %v2128 = vld [vmem:[#allocation7 + $0x18] sm:$0xff]
        %v2129 = vld [vmem:[#allocation8] sm:$0x1]
        %v2131 = vlaneseq
        %v2132 = vshrl.u32 %v2131, 7
        %v2133 = vsub.s32 0, %v2132
        %v2134 = vrot.slane %v2129, %v2133
        %v2137 = vsel %vm908, %v902, 0
        %v2140 = vsel %vm908, %v903, 0
        %2142 = vmatprep.subr.mxu0 0.0
        %2143 = vmatpush1.msra.mxu0 %v2125
        %2144 = vmatprep.subr.mxu0 0.0
        %2145 = vmatpush1.msra.mxu0 %v2126
        %2146 = vmatprep.subr.mxu0 0.0
        %2147 = vmatpush1.msra.mxu0 %v2127
        %2148 = vmatprep.subr.mxu0 0.0
        %2149 = vmatpush1.msra.mxu0 %v2128
        %2150 = vmatprep.subr.mxu0 0.0
        %2151 = vmatpush1.msra.mxu0 0.0
        %2152 = vmatprep.subr.mxu0 0.0
        %2153 = vmatpush1.msra.mxu0 0.0
        %2154 = vmatprep.subr.mxu0 0.0
        %2155 = vmatpush1.msra.mxu0 0.0
        %2156 = vmatprep.subr.mxu0 0.0
        %2157 = vmatpush1.msra.mxu0 0.0
        %2158 = vmatprep.subr.mxu0 0.0
        %2159 = vmatpush1.msra.mxu0 0.0
        %2160 = vmatprep.subr.mxu0 0.0
        %2161 = vmatpush1.msra.mxu0 0.0
        %2162 = vmatprep.subr.mxu0 0.0
        %2163 = vmatpush1.msra.mxu0 0.0
        %2164 = vmatprep.subr.mxu0 0.0
        %2165 = vmatpush1.msra.mxu0 0.0
        %2166 = vmatprep.subr.mxu0 0.0
        %2167 = vmatpush1.msra.mxu0 0.0
        %2168 = vmatprep.subr.mxu0 0.0
        %2169 = vmatpush1.msra.mxu0 0.0
        %2170 = vmatprep.subr.mxu0 0.0
        %2171 = vmatpush1.msra.mxu0 0.0
        %2172 = vmatprep.subr.mxu0 0.0
        %2173 = vmatpush1.msra.mxu0 0.0
        %2174 = vmatprep.subr.mxu0 0.0
        %2175 = vmatpush1.msra.mxu0 0.0
        %2176 = vmatprep.subr.mxu0 0.0
        %2177 = vmatpush1.msra.mxu0 0.0
        %2178 = vmatprep.subr.mxu0 0.0
        %2179 = vmatpush1.msra.mxu0 0.0
        %2180 = vmatprep.subr.mxu0 0.0
        %2181 = vmatpush1.msra.mxu0 0.0
        %2182 = vmatprep.subr.mxu0 0.0
        %2183 = vmatpush1.msra.mxu0 0.0
        %2184 = vmatprep.subr.mxu0 0.0
        %2185 = vmatpush1.msra.mxu0 0.0
        %2186 = vmatprep.subr.mxu0 0.0
        %2187 = vmatpush1.msra.mxu0 0.0
        %2188 = vmatprep.subr.mxu0 0.0
        %2189 = vmatpush1.msra.mxu0 0.0
        %2190 = vmatprep.subr.mxu0 0.0
        %2191 = vmatpush1.msra.mxu0 0.0
        %2192 = vmatprep.subr.mxu0 0.0
        %2193 = vmatpush1.msra.mxu0 0.0
        %2194 = vmatprep.subr.mxu0 0.0
        %2195 = vmatpush1.msra.mxu0 0.0
        %2196 = vmatprep.subr.mxu0 0.0
        %2197 = vmatpush1.msra.mxu0 0.0
        %2198 = vmatprep.subr.mxu0 0.0
        %2199 = vmatpush1.msra.mxu0 0.0
        %2200 = vmatprep.subr.mxu0 0.0
        %2201 = vmatpush1.msra.mxu0 0.0
        %2202 = vmatprep.subr.mxu0 0.0
        %2203 = vmatpush1.msra.mxu0 0.0
        %2204 = vmatprep.subr.mxu0 0.0
        %2205 = vmatpush1.msra.mxu0 0.0
        %2206 = vmatprep.mubr.f32.mxu0 0.0
        %2207 = vmatmul.mubr.f32.gmra.mrb[0].mxu0 %v2137
        %v2208 = vpop.f32.mrb[0].mxu0
        %v2209 = vadd.f32 %v2134, %v2208
        %v2210 = vpop.f32.mrb[0].mxu0
        %2211 = vmatprep.mubr.f32.mxu0 0.0
        %2212 = vmatmul.mubr.f32.gmra.mrb[0].mxu0 %v2140
        %v2213 = vpop.f32.mrb[0].mxu0
        %v2214 = vadd.f32 %v2134, %v2213
        %v2215 = vpop.f32.mrb[0].mxu0
        %2216 = vdwg.mxu0
        %v2217 = vld [vmem:[#allocation10] sm:$0xff]
        %v2218 = vld [vmem:[#allocation10 + $0x8] sm:$0xff]
        %v2219 = vld [vmem:[#allocation10 + $0x10] sm:$0xff]
        %v2220 = vld [vmem:[#allocation10 + $0x18] sm:$0xff]
        %v2222 = vsel %vm1036, %v2122, 0
        %v2225 = vsel %vm1036, %v2209, 0
        %v2228 = vsel %vm1036, %v2214, 0
        %2230 = vmatprep.subr.mxu0 0.0
        %2231 = vmatpush1.xpose.msra.mxu0 %v2225
        %2232 = vmatprep.subr.mxu0 0.0
        %2233 = vmatpush1.xpose.msra.mxu0 %v2228
        %2234 = vmatprep.subr.mxu0 0.0
        %2235 = vmatpush1.xpose.msra.mxu0 0.0
        %2236 = vmatprep.subr.mxu0 0.0
        %2237 = vmatpush1.xpose.msra.mxu0 0.0
        %2238 = vmatprep.subr.mxu0 0.0
        %2239 = vmatpush1.xpose.msra.mxu0 0.0
        %2240 = vmatprep.subr.mxu0 0.0
        %2241 = vmatpush1.xpose.msra.mxu0 0.0
        %2242 = vmatprep.subr.mxu0 0.0
        %2243 = vmatpush1.xpose.msra.mxu0 0.0
        %2244 = vmatprep.subr.mxu0 0.0
        %2245 = vmatpush1.xpose.msra.mxu0 0.0
        %2246 = vmatprep.subr.mxu0 0.0
        %2247 = vmatpush1.xpose.msra.mxu0 0.0
        %2248 = vmatprep.subr.mxu0 0.0
        %2249 = vmatpush1.xpose.msra.mxu0 0.0
        %2250 = vmatprep.subr.mxu0 0.0
        %2251 = vmatpush1.xpose.msra.mxu0 0.0
        %2252 = vmatprep.subr.mxu0 0.0
        %2253 = vmatpush1.xpose.msra.mxu0 0.0
        %2254 = vmatprep.subr.mxu0 0.0
        %2255 = vmatpush1.xpose.msra.mxu0 0.0
        %2256 = vmatprep.subr.mxu0 0.0
        %2257 = vmatpush1.xpose.msra.mxu0 0.0
        %2258 = vmatprep.subr.mxu0 0.0
        %2259 = vmatpush1.xpose.msra.mxu0 0.0
        %2260 = vmatprep.subr.mxu0 0.0
        %2261 = vmatpush1.xpose.msra.mxu0 0.0
        %2262 = vmatprep.subr.mxu0 0.0
        %2263 = vmatpush1.xpose.msra.mxu0 0.0
        %2264 = vmatprep.subr.mxu0 0.0
        %2265 = vmatpush1.xpose.msra.mxu0 0.0
        %2266 = vmatprep.subr.mxu0 0.0
        %2267 = vmatpush1.xpose.msra.mxu0 0.0
        %2268 = vmatprep.subr.mxu0 0.0
        %2269 = vmatpush1.xpose.msra.mxu0 0.0
        %2270 = vmatprep.subr.mxu0 0.0
        %2271 = vmatpush1.xpose.msra.mxu0 0.0
        %2272 = vmatprep.subr.mxu0 0.0
        %2273 = vmatpush1.xpose.msra.mxu0 0.0
        %2274 = vmatprep.subr.mxu0 0.0
        %2275 = vmatpush1.xpose.msra.mxu0 0.0
        %2276 = vmatprep.subr.mxu0 0.0
        %2277 = vmatpush1.xpose.msra.mxu0 0.0
        %2278 = vmatprep.subr.mxu0 0.0
        %2279 = vmatpush1.xpose.msra.mxu0 0.0
        %2280 = vmatprep.subr.mxu0 0.0
        %2281 = vmatpush1.xpose.msra.mxu0 0.0
        %2282 = vmatprep.subr.mxu0 0.0
        %2283 = vmatpush1.xpose.msra.mxu0 0.0
        %2284 = vmatprep.subr.mxu0 0.0
        %2285 = vmatpush1.xpose.msra.mxu0 0.0
        %2286 = vmatprep.subr.mxu0 0.0
        %2287 = vmatpush1.xpose.msra.mxu0 0.0
        %2288 = vmatprep.subr.mxu0 0.0
        %2289 = vmatpush1.xpose.msra.mxu0 0.0
        %2290 = vmatprep.subr.mxu0 0.0
        %2291 = vmatpush1.xpose.msra.mxu0 0.0
        %2292 = vmatprep.subr.mxu0 0.0
        %2293 = vmatpush1.xpose.msra.mxu0 0.0
        %2294 = vmatprep.mubr.f32.mxu0 0.0
        %2295 = vmatmul.mubr.f32.gmra.mrb[0].mxu0 %v2222
        %v2296 = vpop.f32.mrb[0].mxu0
        %v2297 = vadd.f32 0.0, %v2296
        %v2298 = vpop.f32.mrb[0].mxu0
        %2299 = vdwg.mxu0
        %v2300 = vmul.f32 %v2297, 0.35355338
        %vm2301 = vcmp.eq.f32.partialorder %v905, 0.0
        %v2302 = vsel %vm2301, -1e+09, %v2300
        %vm2303 = vcmask 130048
        %v2304 = vsel %vm2303, %v2302, -inf
        %2305 = vmax.xlane.f32.xlu0 %v2304
        %v2306 = vpop.xlane.xlu0 %2305
        %v2307 = vsub.f32 %v2302, %v2306
        %v2308 = vmul.f32 %v2307, 1.442695
        %v2309 = vpow.pop %v2308
        %v2310 = vsel %vm2303, %v2309, 0.0
        %2311 = vadd.xlane.f32.xlu0 %v2310
        %v2312 = vpop.xlane.xlu0 %2311
        %v2313 = vrcp.pop %v2312
        %v2314 = vmul.f32 %v2309, %v2313
        %2315 = vrot.lane.b32.xlu0 %v2209, 96
        %v2316 = vpop.permute.xlu0 %2315
        %2317 = vrot.lane.b32.xlu0 %v2214, 96
        %v2318 = vpop.permute.xlu0 %2317
        %v2322 = vsel %vm2303, %v2314, 0
        %2324 = vmatprep.subr.mxu0 0.0
        %2325 = vmatpush1.msra.mxu0 %v2316
        %2326 = vmatprep.subr.mxu0 0.0
        %2327 = vmatpush1.msra.mxu0 %v2318
        %2328 = vmatprep.subr.mxu0 0.0
        %2329 = vmatpush1.msra.mxu0 0.0
        %2330 = vmatprep.subr.mxu0 0.0
        %2331 = vmatpush1.msra.mxu0 0.0
        %2332 = vmatprep.subr.mxu0 0.0
        %2333 = vmatpush1.msra.mxu0 0.0
        %2334 = vmatprep.subr.mxu0 0.0
        %2335 = vmatpush1.msra.mxu0 0.0
        %2336 = vmatprep.subr.mxu0 0.0
        %2337 = vmatpush1.msra.mxu0 0.0
        %2338 = vmatprep.subr.mxu0 0.0
        %2339 = vmatpush1.msra.mxu0 0.0
        %2340 = vmatprep.subr.mxu0 0.0
        %2341 = vmatpush1.msra.mxu0 0.0
        %2342 = vmatprep.subr.mxu0 0.0
        %2343 = vmatpush1.msra.mxu0 0.0
        %2344 = vmatprep.subr.mxu0 0.0
        %2345 = vmatpush1.msra.mxu0 0.0
        %2346 = vmatprep.subr.mxu0 0.0
        %2347 = vmatpush1.msra.mxu0 0.0
        %2348 = vmatprep.subr.mxu0 0.0
        %2349 = vmatpush1.msra.mxu0 0.0
        %2350 = vmatprep.subr.mxu0 0.0
        %2351 = vmatpush1.msra.mxu0 0.0
        %2352 = vmatprep.subr.mxu0 0.0
        %2353 = vmatpush1.msra.mxu0 0.0
        %2354 = vmatprep.subr.mxu0 0.0
        %2355 = vmatpush1.msra.mxu0 0.0
        %2356 = vmatprep.subr.mxu0 0.0
        %2357 = vmatpush1.msra.mxu0 0.0
        %2358 = vmatprep.subr.mxu0 0.0
        %2359 = vmatpush1.msra.mxu0 0.0
        %2360 = vmatprep.subr.mxu0 0.0
        %2361 = vmatpush1.msra.mxu0 0.0
        %2362 = vmatprep.subr.mxu0 0.0
        %2363 = vmatpush1.msra.mxu0 0.0
        %2364 = vmatprep.subr.mxu0 0.0
        %2365 = vmatpush1.msra.mxu0 0.0
        %2366 = vmatprep.subr.mxu0 0.0
        %2367 = vmatpush1.msra.mxu0 0.0
        %2368 = vmatprep.subr.mxu0 0.0
        %2369 = vmatpush1.msra.mxu0 0.0
        %2370 = vmatprep.subr.mxu0 0.0
        %2371 = vmatpush1.msra.mxu0 0.0
        %2372 = vmatprep.subr.mxu0 0.0
        %2373 = vmatpush1.msra.mxu0 0.0
        %2374 = vmatprep.subr.mxu0 0.0
        %2375 = vmatpush1.msra.mxu0 0.0
        %2376 = vmatprep.subr.mxu0 0.0
        %2377 = vmatpush1.msra.mxu0 0.0
        %2378 = vmatprep.subr.mxu0 0.0
        %2379 = vmatpush1.msra.mxu0 0.0
        %2380 = vmatprep.subr.mxu0 0.0
        %2381 = vmatpush1.msra.mxu0 0.0
        %2382 = vmatprep.subr.mxu0 0.0
        %2383 = vmatpush1.msra.mxu0 0.0
        %2384 = vmatprep.subr.mxu0 0.0
        %2385 = vmatpush1.msra.mxu0 0.0
        %2386 = vmatprep.subr.mxu0 0.0
        %2387 = vmatpush1.msra.mxu0 0.0
        %2388 = vmatprep.mubr.f32.mxu0 0.0
        %2389 = vmatmul.mubr.f32.gmra.mrb[0].mxu0 %v2322
        %v2390 = vpop.f32.mrb[0].mxu0
        %v2391 = vadd.f32 0.0, %v2390
        %v2392 = vpop.f32.mrb[0].mxu0
        %2393 = vdwg.mxu0
        %2394 = vrot.lane.b32.xlu0 %v2122, 120
        %v2395 = vpop.permute.xlu0 %2394
        %2396 = vrot.lane.b32.xlu0 %v2209, 120
        %v2397 = vpop.permute.xlu0 %2396
        %2398 = vrot.lane.b32.xlu0 %v2214, 120
        %v2399 = vpop.permute.xlu0 %2398
        %v2400 = vsel %vm1036, %v2395, 0
        %v2402 = vsel %vm1036, %v2397, 0
        %v2404 = vsel %vm1036, %v2399, 0
        %2406 = vmatprep.subr.mxu0 0.0
        %2407 = vmatpush1.xpose.msra.mxu0 %v2402
        %2408 = vmatprep.subr.mxu0 0.0
        %2409 = vmatpush1.xpose.msra.mxu0 %v2404
        %2410 = vmatprep.subr.mxu0 0.0
        %2411 = vmatpush1.xpose.msra.mxu0 0.0
        %2412 = vmatprep.subr.mxu0 0.0
        %2413 = vmatpush1.xpose.msra.mxu0 0.0
        %2414 = vmatprep.subr.mxu0 0.0
        %2415 = vmatpush1.xpose.msra.mxu0 0.0
        %2416 = vmatprep.subr.mxu0 0.0
        %2417 = vmatpush1.xpose.msra.mxu0 0.0
        %2418 = vmatprep.subr.mxu0 0.0
        %2419 = vmatpush1.xpose.msra.mxu0 0.0
        %2420 = vmatprep.subr.mxu0 0.0
        %2421 = vmatpush1.xpose.msra.mxu0 0.0
        %2422 = vmatprep.subr.mxu0 0.0
        %2423 = vmatpush1.xpose.msra.mxu0 0.0
        %2424 = vmatprep.subr.mxu0 0.0
        %2425 = vmatpush1.xpose.msra.mxu0 0.0
        %2426 = vmatprep.subr.mxu0 0.0
        %2427 = vmatpush1.xpose.msra.mxu0 0.0
        %2428 = vmatprep.subr.mxu0 0.0
        %2429 = vmatpush1.xpose.msra.mxu0 0.0
        %2430 = vmatprep.subr.mxu0 0.0
        %2431 = vmatpush1.xpose.msra.mxu0 0.0
        %2432 = vmatprep.subr.mxu0 0.0
        %2433 = vmatpush1.xpose.msra.mxu0 0.0
        %2434 = vmatprep.subr.mxu0 0.0
        %2435 = vmatpush1.xpose.msra.mxu0 0.0
        %2436 = vmatprep.subr.mxu0 0.0
        %2437 = vmatpush1.xpose.msra.mxu0 0.0
        %2438 = vmatprep.subr.mxu0 0.0
        %2439 = vmatpush1.xpose.msra.mxu0 0.0
        %2440 = vmatprep.subr.mxu0 0.0
        %2441 = vmatpush1.xpose.msra.mxu0 0.0
        %2442 = vmatprep.subr.mxu0 0.0
        %2443 = vmatpush1.xpose.msra.mxu0 0.0
        %2444 = vmatprep.subr.mxu0 0.0
        %2445 = vmatpush1.xpose.msra.mxu0 0.0
        %2446 = vmatprep.subr.mxu0 0.0
        %2447 = vmatpush1.xpose.msra.mxu0 0.0
        %2448 = vmatprep.subr.mxu0 0.0
        %2449 = vmatpush1.xpose.msra.mxu0 0.0
        %2450 = vmatprep.subr.mxu0 0.0
        %2451 = vmatpush1.xpose.msra.mxu0 0.0
        %2452 = vmatprep.subr.mxu0 0.0
        %2453 = vmatpush1.xpose.msra.mxu0 0.0
        %2454 = vmatprep.subr.mxu0 0.0
        %2455 = vmatpush1.xpose.msra.mxu0 0.0
        %2456 = vmatprep.subr.mxu0 0.0
        %2457 = vmatpush1.xpose.msra.mxu0 0.0
        %2458 = vmatprep.subr.mxu0 0.0
        %2459 = vmatpush1.xpose.msra.mxu0 0.0
        %2460 = vmatprep.subr.mxu0 0.0
        %2461 = vmatpush1.xpose.msra.mxu0 0.0
        %2462 = vmatprep.subr.mxu0 0.0
        %2463 = vmatpush1.xpose.msra.mxu0 0.0
        %2464 = vmatprep.subr.mxu0 0.0
        %2465 = vmatpush1.xpose.msra.mxu0 0.0
        %2466 = vmatprep.subr.mxu0 0.0
        %2467 = vmatpush1.xpose.msra.mxu0 0.0
        %2468 = vmatprep.subr.mxu0 0.0
        %2469 = vmatpush1.xpose.msra.mxu0 0.0
        %2470 = vmatprep.mubr.f32.mxu0 0.0
        %2471 = vmatmul.mubr.f32.gmra.mrb[0].mxu0 %v2400
        %v2472 = vpop.f32.mrb[0].mxu0
        %v2473 = vadd.f32 0.0, %v2472
        %v2474 = vpop.f32.mrb[0].mxu0
        %2475 = vdwg.mxu0
        %v2476 = vmul.f32 %v2473, 0.35355338
        %v2477 = vsel %vm2301, -1e+09, %v2476
        %v2478 = vsel %vm2303, %v2477, -inf
        %2479 = vmax.xlane.f32.xlu0 %v2478
        %v2480 = vpop.xlane.xlu0 %2479
        %v2481 = vsub.f32 %v2477, %v2480
        %v2482 = vmul.f32 %v2481, 1.442695
        %v2483 = vpow.pop %v2482
        %v2484 = vsel %vm2303, %v2483, 0.0
        %2485 = vadd.xlane.f32.xlu0 %v2484
        %v2486 = vpop.xlane.xlu0 %2485
        %v2487 = vrcp.pop %v2486
        %v2488 = vmul.f32 %v2483, %v2487
        %2489 = vrot.lane.b32.xlu0 %v2209, 88
        %v2490 = vpop.permute.xlu0 %2489
        %2491 = vrot.lane.b32.xlu0 %v2214, 88
        %v2492 = vpop.permute.xlu0 %2491
        %v2496 = vsel %vm2303, %v2488, 0
        %2498 = vmatprep.subr.mxu0 0.0
        %2499 = vmatpush1.msra.mxu0 %v2490
        %2500 = vmatprep.subr.mxu0 0.0
        %2501 = vmatpush1.msra.mxu0 %v2492
        %2502 = vmatprep.subr.mxu0 0.0
        %2503 = vmatpush1.msra.mxu0 0.0
        %2504 = vmatprep.subr.mxu0 0.0
        %2505 = vmatpush1.msra.mxu0 0.0
        %2506 = vmatprep.subr.mxu0 0.0
        %2507 = vmatpush1.msra.mxu0 0.0
        %2508 = vmatprep.subr.mxu0 0.0
        %2509 = vmatpush1.msra.mxu0 0.0
        %2510 = vmatprep.subr.mxu0 0.0
        %2511 = vmatpush1.msra.mxu0 0.0
        %2512 = vmatprep.subr.mxu0 0.0
        %2513 = vmatpush1.msra.mxu0 0.0
        %2514 = vmatprep.subr.mxu0 0.0
        %2515 = vmatpush1.msra.mxu0 0.0
        %2516 = vmatprep.subr.mxu0 0.0
        %2517 = vmatpush1.msra.mxu0 0.0
        %2518 = vmatprep.subr.mxu0 0.0
        %2519 = vmatpush1.msra.mxu0 0.0
        %2520 = vmatprep.subr.mxu0 0.0
        %2521 = vmatpush1.msra.mxu0 0.0
        %2522 = vmatprep.subr.mxu0 0.0
        %2523 = vmatpush1.msra.mxu0 0.0
        %2524 = vmatprep.subr.mxu0 0.0
        %2525 = vmatpush1.msra.mxu0 0.0
        %2526 = vmatprep.subr.mxu0 0.0
        %2527 = vmatpush1.msra.mxu0 0.0
        %2528 = vmatprep.subr.mxu0 0.0
        %2529 = vmatpush1.msra.mxu0 0.0
        %2530 = vmatprep.subr.mxu0 0.0
        %2531 = vmatpush1.msra.mxu0 0.0
        %2532 = vmatprep.subr.mxu0 0.0
        %2533 = vmatpush1.msra.mxu0 0.0
        %2534 = vmatprep.subr.mxu0 0.0
        %2535 = vmatpush1.msra.mxu0 0.0
        %2536 = vmatprep.subr.mxu0 0.0
        %2537 = vmatpush1.msra.mxu0 0.0
        %2538 = vmatprep.subr.mxu0 0.0
        %2539 = vmatpush1.msra.mxu0 0.0
        %2540 = vmatprep.subr.mxu0 0.0
        %2541 = vmatpush1.msra.mxu0 0.0
        %2542 = vmatprep.subr.mxu0 0.0
        %2543 = vmatpush1.msra.mxu0 0.0
        %2544 = vmatprep.subr.mxu0 0.0
        %2545 = vmatpush1.msra.mxu0 0.0
        %2546 = vmatprep.subr.mxu0 0.0
        %2547 = vmatpush1.msra.mxu0 0.0
        %2548 = vmatprep.subr.mxu0 0.0
        %2549 = vmatpush1.msra.mxu0 0.0
        %2550 = vmatprep.subr.mxu0 0.0
        %2551 = vmatpush1.msra.mxu0 0.0
        %2552 = vmatprep.subr.mxu0 0.0
        %2553 = vmatpush1.msra.mxu0 0.0
        %2554 = vmatprep.subr.mxu0 0.0
        %2555 = vmatpush1.msra.mxu0 0.0
        %2556 = vmatprep.subr.mxu0 0.0
        %2557 = vmatpush1.msra.mxu0 0.0
        %2558 = vmatprep.subr.mxu0 0.0
        %2559 = vmatpush1.msra.mxu0 0.0
        %2560 = vmatprep.subr.mxu0 0.0
        %2561 = vmatpush1.msra.mxu0 0.0
        %2562 = vmatprep.mubr.f32.mxu0 0.0
        %2563 = vmatmul.mubr.f32.gmra.mrb[0].mxu0 %v2496
        %v2564 = vpop.f32.mrb[0].mxu0
        %v2565 = vadd.f32 0.0, %v2564
        %v2566 = vpop.f32.mrb[0].mxu0
        %2567 = vdwg.mxu0
        %v2569 = vsel %vm1036, %v2565, 0
        %2571 = vmatprep.subr.mxu0 0.0
        %2572 = vmatpush1.msra.mxu0 %v2218
        %2573 = vmatprep.subr.mxu0 0.0
        %2574 = vmatpush1.msra.mxu0 0.0
        %2575 = vmatprep.subr.mxu0 0.0
        %2576 = vmatpush1.msra.mxu0 0.0
        %2577 = vmatprep.subr.mxu0 0.0
        %2578 = vmatpush1.msra.mxu0 0.0
        %2579 = vmatprep.subr.mxu0 0.0
        %2580 = vmatpush1.msra.mxu0 0.0
        %2581 = vmatprep.subr.mxu0 0.0
        %2582 = vmatpush1.msra.mxu0 0.0
        %2583 = vmatprep.subr.mxu0 0.0
        %2584 = vmatpush1.msra.mxu0 0.0
        %2585 = vmatprep.subr.mxu0 0.0
        %2586 = vmatpush1.msra.mxu0 0.0
        %2587 = vmatprep.subr.mxu0 0.0
        %2588 = vmatpush1.msra.mxu0 0.0
        %2589 = vmatprep.subr.mxu0 0.0
        %2590 = vmatpush1.msra.mxu0 0.0
        %2591 = vmatprep.subr.mxu0 0.0
        %2592 = vmatpush1.msra.mxu0 0.0
        %2593 = vmatprep.subr.mxu0 0.0
        %2594 = vmatpush1.msra.mxu0 0.0
        %2595 = vmatprep.subr.mxu0 0.0
        %2596 = vmatpush1.msra.mxu0 0.0
        %2597 = vmatprep.subr.mxu0 0.0
        %2598 = vmatpush1.msra.mxu0 0.0
        %2599 = vmatprep.subr.mxu0 0.0
        %2600 = vmatpush1.msra.mxu0 0.0
        %2601 = vmatprep.subr.mxu0 0.0
        %2602 = vmatpush1.msra.mxu0 0.0
        %2603 = vmatprep.subr.mxu0 0.0
        %2604 = vmatpush1.msra.mxu0 0.0
        %2605 = vmatprep.subr.mxu0 0.0
        %2606 = vmatpush1.msra.mxu0 0.0
        %2607 = vmatprep.subr.mxu0 0.0
        %2608 = vmatpush1.msra.mxu0 0.0
        %2609 = vmatprep.subr.mxu0 0.0
        %2610 = vmatpush1.msra.mxu0 0.0
        %2611 = vmatprep.subr.mxu0 0.0
        %2612 = vmatpush1.msra.mxu0 0.0
        %2613 = vmatprep.subr.mxu0 0.0
        %2614 = vmatpush1.msra.mxu0 0.0
        %2615 = vmatprep.subr.mxu0 0.0
        %2616 = vmatpush1.msra.mxu0 0.0
        %2617 = vmatprep.subr.mxu0 0.0
        %2618 = vmatpush1.msra.mxu0 0.0
        %2619 = vmatprep.subr.mxu0 0.0
        %2620 = vmatpush1.msra.mxu0 0.0
        %2621 = vmatprep.subr.mxu0 0.0
        %2622 = vmatpush1.msra.mxu0 0.0
        %2623 = vmatprep.subr.mxu0 0.0
        %2624 = vmatpush1.msra.mxu0 0.0
        %2625 = vmatprep.subr.mxu0 0.0
        %2626 = vmatpush1.msra.mxu0 0.0
        %2627 = vmatprep.subr.mxu0 0.0
        %2628 = vmatpush1.msra.mxu0 0.0
        %2629 = vmatprep.subr.mxu0 0.0
        %2630 = vmatpush1.msra.mxu0 0.0
        %2631 = vmatprep.subr.mxu0 0.0
        %2632 = vmatpush1.msra.mxu0 0.0
        %2633 = vmatprep.subr.mxu0 0.0
        %2634 = vmatpush1.msra.mxu0 0.0
        %2635 = vmatprep.mubr.f32.mxu0 0.0
        %2636 = vmatmul.mubr.f32.gmra.mrb[0].mxu0 %v2569
        %v2637 = vpop.f32.mrb[0].mxu0
        %v2638 = vadd.f32 0.0, %v2637
        %v2639 = vpop.f32.mrb[0].mxu0
        %2640 = vdwg.mxu0
        %v2642 = vsel %vm1036, %v2391, 0
        %2644 = vmatprep.subr.mxu0 0.0
        %2645 = vmatpush1.msra.mxu0 %v2217
        %2646 = vmatprep.subr.mxu0 0.0
        %2647 = vmatpush1.msra.mxu0 0.0
        %2648 = vmatprep.subr.mxu0 0.0
        %2649 = vmatpush1.msra.mxu0 0.0
        %2650 = vmatprep.subr.mxu0 0.0
        %2651 = vmatpush1.msra.mxu0 0.0
        %2652 = vmatprep.subr.mxu0 0.0
        %2653 = vmatpush1.msra.mxu0 0.0
        %2654 = vmatprep.subr.mxu0 0.0
        %2655 = vmatpush1.msra.mxu0 0.0
        %2656 = vmatprep.subr.mxu0 0.0
        %2657 = vmatpush1.msra.mxu0 0.0
        %2658 = vmatprep.subr.mxu0 0.0
        %2659 = vmatpush1.msra.mxu0 0.0
        %2660 = vmatprep.subr.mxu0 0.0
        %2661 = vmatpush1.msra.mxu0 0.0
        %2662 = vmatprep.subr.mxu0 0.0
        %2663 = vmatpush1.msra.mxu0 0.0
        %2664 = vmatprep.subr.mxu0 0.0
        %2665 = vmatpush1.msra.mxu0 0.0
        %2666 = vmatprep.subr.mxu0 0.0
        %2667 = vmatpush1.msra.mxu0 0.0
        %2668 = vmatprep.subr.mxu0 0.0
        %2669 = vmatpush1.msra.mxu0 0.0
        %2670 = vmatprep.subr.mxu0 0.0
        %2671 = vmatpush1.msra.mxu0 0.0
        %2672 = vmatprep.subr.mxu0 0.0
        %2673 = vmatpush1.msra.mxu0 0.0
        %2674 = vmatprep.subr.mxu0 0.0
        %2675 = vmatpush1.msra.mxu0 0.0
        %2676 = vmatprep.subr.mxu0 0.0
        %2677 = vmatpush1.msra.mxu0 0.0
        %2678 = vmatprep.subr.mxu0 0.0
        %2679 = vmatpush1.msra.mxu0 0.0
        %2680 = vmatprep.subr.mxu0 0.0
        %2681 = vmatpush1.msra.mxu0 0.0
        %2682 = vmatprep.subr.mxu0 0.0
        %2683 = vmatpush1.msra.mxu0 0.0
        %2684 = vmatprep.subr.mxu0 0.0
        %2685 = vmatpush1.msra.mxu0 0.0
        %2686 = vmatprep.subr.mxu0 0.0
        %2687 = vmatpush1.msra.mxu0 0.0
        %2688 = vmatprep.subr.mxu0 0.0
        %2689 = vmatpush1.msra.mxu0 0.0
        %2690 = vmatprep.subr.mxu0 0.0
        %2691 = vmatpush1.msra.mxu0 0.0
        %2692 = vmatprep.subr.mxu0 0.0
        %2693 = vmatpush1.msra.mxu0 0.0
        %2694 = vmatprep.subr.mxu0 0.0
        %2695 = vmatpush1.msra.mxu0 0.0
        %2696 = vmatprep.subr.mxu0 0.0
        %2697 = vmatpush1.msra.mxu0 0.0
        %2698 = vmatprep.subr.mxu0 0.0
        %2699 = vmatpush1.msra.mxu0 0.0
        %2700 = vmatprep.subr.mxu0 0.0
        %2701 = vmatpush1.msra.mxu0 0.0
        %2702 = vmatprep.subr.mxu0 0.0
        %2703 = vmatpush1.msra.mxu0 0.0
        %2704 = vmatprep.subr.mxu0 0.0
        %2705 = vmatpush1.msra.mxu0 0.0
        %2706 = vmatprep.subr.mxu0 0.0
        %2707 = vmatpush1.msra.mxu0 0.0
        %2708 = vmatprep.mubr.f32.mxu0 0.0
        %2709 = vmatmul.mubr.f32.gmra.mrb[0].mxu0 %v2642
        %v2710 = vpop.f32.mrb[0].mxu0
        %v2711 = vadd.f32 %v2638, %v2710
        %v2712 = vpop.f32.mrb[0].mxu0
        %2713 = vdwg.mxu0
        %2714 = vrot.lane.b32.xlu0 %v2122, 112
        %v2715 = vpop.permute.xlu0 %2714
        %2716 = vrot.lane.b32.xlu0 %v2209, 112
        %v2717 = vpop.permute.xlu0 %2716
        %2718 = vrot.lane.b32.xlu0 %v2214, 112
        %v2719 = vpop.permute.xlu0 %2718
        %v2720 = vsel %vm1036, %v2715, 0
        %v2722 = vsel %vm1036, %v2717, 0
        %v2724 = vsel %vm1036, %v2719, 0
        %2726 = vmatprep.subr.mxu0 0.0
        %2727 = vmatpush1.xpose.msra.mxu0 %v2722
        %2728 = vmatprep.subr.mxu0 0.0
        %2729 = vmatpush1.xpose.msra.mxu0 %v2724
        %2730 = vmatprep.subr.mxu0 0.0
        %2731 = vmatpush1.xpose.msra.mxu0 0.0
        %2732 = vmatprep.subr.mxu0 0.0
        %2733 = vmatpush1.xpose.msra.mxu0 0.0
        %2734 = vmatprep.subr.mxu0 0.0
        %2735 = vmatpush1.xpose.msra.mxu0 0.0
        %2736 = vmatprep.subr.mxu0 0.0
        %2737 = vmatpush1.xpose.msra.mxu0 0.0
        %2738 = vmatprep.subr.mxu0 0.0
        %2739 = vmatpush1.xpose.msra.mxu0 0.0
        %2740 = vmatprep.subr.mxu0 0.0
        %2741 = vmatpush1.xpose.msra.mxu0 0.0
        %2742 = vmatprep.subr.mxu0 0.0
        %2743 = vmatpush1.xpose.msra.mxu0 0.0
        %2744 = vmatprep.subr.mxu0 0.0
        %2745 = vmatpush1.xpose.msra.mxu0 0.0
        %2746 = vmatprep.subr.mxu0 0.0
        %2747 = vmatpush1.xpose.msra.mxu0 0.0
        %2748 = vmatprep.subr.mxu0 0.0
        %2749 = vmatpush1.xpose.msra.mxu0 0.0
        %2750 = vmatprep.subr.mxu0 0.0
        %2751 = vmatpush1.xpose.msra.mxu0 0.0
        %2752 = vmatprep.subr.mxu0 0.0
        %2753 = vmatpush1.xpose.msra.mxu0 0.0
        %2754 = vmatprep.subr.mxu0 0.0
        %2755 = vmatpush1.xpose.msra.mxu0 0.0
        %2756 = vmatprep.subr.mxu0 0.0
        %2757 = vmatpush1.xpose.msra.mxu0 0.0
        %2758 = vmatprep.subr.mxu0 0.0
        %2759 = vmatpush1.xpose.msra.mxu0 0.0
        %2760 = vmatprep.subr.mxu0 0.0
        %2761 = vmatpush1.xpose.msra.mxu0 0.0
        %2762 = vmatprep.subr.mxu0 0.0
        %2763 = vmatpush1.xpose.msra.mxu0 0.0
        %2764 = vmatprep.subr.mxu0 0.0
        %2765 = vmatpush1.xpose.msra.mxu0 0.0
        %2766 = vmatprep.subr.mxu0 0.0
        %2767 = vmatpush1.xpose.msra.mxu0 0.0
        %2768 = vmatprep.subr.mxu0 0.0
        %2769 = vmatpush1.xpose.msra.mxu0 0.0
        %2770 = vmatprep.subr.mxu0 0.0
        %2771 = vmatpush1.xpose.msra.mxu0 0.0
        %2772 = vmatprep.subr.mxu0 0.0
        %2773 = vmatpush1.xpose.msra.mxu0 0.0
        %2774 = vmatprep.subr.mxu0 0.0
        %2775 = vmatpush1.xpose.msra.mxu0 0.0
        %2776 = vmatprep.subr.mxu0 0.0
        %2777 = vmatpush1.xpose.msra.mxu0 0.0
        %2778 = vmatprep.subr.mxu0 0.0
        %2779 = vmatpush1.xpose.msra.mxu0 0.0
        %2780 = vmatprep.subr.mxu0 0.0
        %2781 = vmatpush1.xpose.msra.mxu0 0.0
        %2782 = vmatprep.subr.mxu0 0.0
        %2783 = vmatpush1.xpose.msra.mxu0 0.0
        %2784 = vmatprep.subr.mxu0 0.0
        %2785 = vmatpush1.xpose.msra.mxu0 0.0
        %2786 = vmatprep.subr.mxu0 0.0
        %2787 = vmatpush1.xpose.msra.mxu0 0.0
        %2788 = vmatprep.subr.mxu0 0.0
        %2789 = vmatpush1.xpose.msra.mxu0 0.0
        %2790 = vmatprep.mubr.f32.mxu0 0.0
        %2791 = vmatmul.mubr.f32.gmra.mrb[0].mxu0 %v2720
        %v2792 = vpop.f32.mrb[0].mxu0
        %v2793 = vadd.f32 0.0, %v2792
        %v2794 = vpop.f32.mrb[0].mxu0
        %2795 = vdwg.mxu0
        %v2796 = vmul.f32 %v2793, 0.35355338
        %v2797 = vsel %vm2301, -1e+09, %v2796
        %v2798 = vsel %vm2303, %v2797, -inf
        %2799 = vmax.xlane.f32.xlu0 %v2798
        %v2800 = vpop.xlane.xlu0 %2799
        %v2801 = vsub.f32 %v2797, %v2800
        %v2802 = vmul.f32 %v2801, 1.442695
        %v2803 = vpow.pop %v2802
        %v2804 = vsel %vm2303, %v2803, 0.0
        %2805 = vadd.xlane.f32.xlu0 %v2804
        %v2806 = vpop.xlane.xlu0 %2805
        %v2807 = vrcp.pop %v2806
        %v2808 = vmul.f32 %v2803, %v2807
        %2809 = vrot.lane.b32.xlu0 %v2209, 80
        %v2810 = vpop.permute.xlu0 %2809
        %2811 = vrot.lane.b32.xlu0 %v2214, 80
        %v2812 = vpop.permute.xlu0 %2811
        %v2816 = vsel %vm2303, %v2808, 0
        %2818 = vmatprep.subr.mxu0 0.0
        %2819 = vmatpush1.msra.mxu0 %v2810
        %2820 = vmatprep.subr.mxu0 0.0
        %2821 = vmatpush1.msra.mxu0 %v2812
        %2822 = vmatprep.subr.mxu0 0.0
        %2823 = vmatpush1.msra.mxu0 0.0
        %2824 = vmatprep.subr.mxu0 0.0
        %2825 = vmatpush1.msra.mxu0 0.0
        %2826 = vmatprep.subr.mxu0 0.0
        %2827 = vmatpush1.msra.mxu0 0.0
        %2828 = vmatprep.subr.mxu0 0.0
        %2829 = vmatpush1.msra.mxu0 0.0
        %2830 = vmatprep.subr.mxu0 0.0
        %2831 = vmatpush1.msra.mxu0 0.0
        %2832 = vmatprep.subr.mxu0 0.0
        %2833 = vmatpush1.msra.mxu0 0.0
        %2834 = vmatprep.subr.mxu0 0.0
        %2835 = vmatpush1.msra.mxu0 0.0
        %2836 = vmatprep.subr.mxu0 0.0
        %2837 = vmatpush1.msra.mxu0 0.0
        %2838 = vmatprep.subr.mxu0 0.0
        %2839 = vmatpush1.msra.mxu0 0.0
        %2840 = vmatprep.subr.mxu0 0.0
        %2841 = vmatpush1.msra.mxu0 0.0
        %2842 = vmatprep.subr.mxu0 0.0
        %2843 = vmatpush1.msra.mxu0 0.0
        %2844 = vmatprep.subr.mxu0 0.0
        %2845 = vmatpush1.msra.mxu0 0.0
        %2846 = vmatprep.subr.mxu0 0.0
        %2847 = vmatpush1.msra.mxu0 0.0
        %2848 = vmatprep.subr.mxu0 0.0
        %2849 = vmatpush1.msra.mxu0 0.0
        %2850 = vmatprep.subr.mxu0 0.0
        %2851 = vmatpush1.msra.mxu0 0.0
        %2852 = vmatprep.subr.mxu0 0.0
        %2853 = vmatpush1.msra.mxu0 0.0
        %2854 = vmatprep.subr.mxu0 0.0
        %2855 = vmatpush1.msra.mxu0 0.0
        %2856 = vmatprep.subr.mxu0 0.0
        %2857 = vmatpush1.msra.mxu0 0.0
        %2858 = vmatprep.subr.mxu0 0.0
        %2859 = vmatpush1.msra.mxu0 0.0
        %2860 = vmatprep.subr.mxu0 0.0
        %2861 = vmatpush1.msra.mxu0 0.0
        %2862 = vmatprep.subr.mxu0 0.0
        %2863 = vmatpush1.msra.mxu0 0.0
        %2864 = vmatprep.subr.mxu0 0.0
        %2865 = vmatpush1.msra.mxu0 0.0
        %2866 = vmatprep.subr.mxu0 0.0
        %2867 = vmatpush1.msra.mxu0 0.0
        %2868 = vmatprep.subr.mxu0 0.0
        %2869 = vmatpush1.msra.mxu0 0.0
        %2870 = vmatprep.subr.mxu0 0.0
        %2871 = vmatpush1.msra.mxu0 0.0
        %2872 = vmatprep.subr.mxu0 0.0
        %2873 = vmatpush1.msra.mxu0 0.0
        %2874 = vmatprep.subr.mxu0 0.0
        %2875 = vmatpush1.msra.mxu0 0.0
        %2876 = vmatprep.subr.mxu0 0.0
        %2877 = vmatpush1.msra.mxu0 0.0
        %2878 = vmatprep.subr.mxu0 0.0
        %2879 = vmatpush1.msra.mxu0 0.0
        %2880 = vmatprep.subr.mxu0 0.0
        %2881 = vmatpush1.msra.mxu0 0.0
        %2882 = vmatprep.mubr.f32.mxu0 0.0
        %2883 = vmatmul.mubr.f32.gmra.mrb[0].mxu0 %v2816
        %v2884 = vpop.f32.mrb[0].mxu0
        %v2885 = vadd.f32 0.0, %v2884
        %v2886 = vpop.f32.mrb[0].mxu0
        %2887 = vdwg.mxu0
        %v2889 = vsel %vm1036, %v2885, 0
        %2891 = vmatprep.subr.mxu0 0.0
        %2892 = vmatpush1.msra.mxu0 %v2219
        %2893 = vmatprep.subr.mxu0 0.0
        %2894 = vmatpush1.msra.mxu0 0.0
        %2895 = vmatprep.subr.mxu0 0.0
        %2896 = vmatpush1.msra.mxu0 0.0
        %2897 = vmatprep.subr.mxu0 0.0
        %2898 = vmatpush1.msra.mxu0 0.0
        %2899 = vmatprep.subr.mxu0 0.0
        %2900 = vmatpush1.msra.mxu0 0.0
        %2901 = vmatprep.subr.mxu0 0.0
        %2902 = vmatpush1.msra.mxu0 0.0
        %2903 = vmatprep.subr.mxu0 0.0
        %2904 = vmatpush1.msra.mxu0 0.0
        %2905 = vmatprep.subr.mxu0 0.0
        %2906 = vmatpush1.msra.mxu0 0.0
        %2907 = vmatprep.subr.mxu0 0.0
        %2908 = vmatpush1.msra.mxu0 0.0
        %2909 = vmatprep.subr.mxu0 0.0
        %2910 = vmatpush1.msra.mxu0 0.0
        %2911 = vmatprep.subr.mxu0 0.0
        %2912 = vmatpush1.msra.mxu0 0.0
        %2913 = vmatprep.subr.mxu0 0.0
        %2914 = vmatpush1.msra.mxu0 0.0
        %2915 = vmatprep.subr.mxu0 0.0
        %2916 = vmatpush1.msra.mxu0 0.0
        %2917 = vmatprep.subr.mxu0 0.0
        %2918 = vmatpush1.msra.mxu0 0.0
        %2919 = vmatprep.subr.mxu0 0.0
        %2920 = vmatpush1.msra.mxu0 0.0
        %2921 = vmatprep.subr.mxu0 0.0
        %2922 = vmatpush1.msra.mxu0 0.0
        %2923 = vmatprep.subr.mxu0 0.0
        %2924 = vmatpush1.msra.mxu0 0.0
        %2925 = vmatprep.subr.mxu0 0.0
        %2926 = vmatpush1.msra.mxu0 0.0
        %2927 = vmatprep.subr.mxu0 0.0
        %2928 = vmatpush1.msra.mxu0 0.0
        %2929 = vmatprep.subr.mxu0 0.0
        %2930 = vmatpush1.msra.mxu0 0.0
        %2931 = vmatprep.subr.mxu0 0.0
        %2932 = vmatpush1.msra.mxu0 0.0
        %2933 = vmatprep.subr.mxu0 0.0
        %2934 = vmatpush1.msra.mxu0 0.0
        %2935 = vmatprep.subr.mxu0 0.0
        %2936 = vmatpush1.msra.mxu0 0.0
        %2937 = vmatprep.subr.mxu0 0.0
        %2938 = vmatpush1.msra.mxu0 0.0
        %2939 = vmatprep.subr.mxu0 0.0
        %2940 = vmatpush1.msra.mxu0 0.0
        %2941 = vmatprep.subr.mxu0 0.0
        %2942 = vmatpush1.msra.mxu0 0.0
        %2943 = vmatprep.subr.mxu0 0.0
        %2944 = vmatpush1.msra.mxu0 0.0
        %2945 = vmatprep.subr.mxu0 0.0
        %2946 = vmatpush1.msra.mxu0 0.0
        %2947 = vmatprep.subr.mxu0 0.0
        %2948 = vmatpush1.msra.mxu0 0.0
        %2949 = vmatprep.subr.mxu0 0.0
        %2950 = vmatpush1.msra.mxu0 0.0
        %2951 = vmatprep.subr.mxu0 0.0
        %2952 = vmatpush1.msra.mxu0 0.0
        %2953 = vmatprep.subr.mxu0 0.0
        %2954 = vmatpush1.msra.mxu0 0.0
        %2955 = vmatprep.mubr.f32.mxu0 0.0
        %2956 = vmatmul.mubr.f32.gmra.mrb[0].mxu0 %v2889
        %v2957 = vpop.f32.mrb[0].mxu0
        %v2958 = vadd.f32 0.0, %v2957
        %v2959 = vpop.f32.mrb[0].mxu0
        %2960 = vdwg.mxu0
        %v2961 = vadd.f32 %v2711, %v2958
        %2962 = vrot.lane.b32.xlu0 %v2122, 104
        %v2963 = vpop.permute.xlu0 %2962
        %2964 = vrot.lane.b32.xlu0 %v2209, 104
        %v2965 = vpop.permute.xlu0 %2964
        %2966 = vrot.lane.b32.xlu0 %v2214, 104
        %v2967 = vpop.permute.xlu0 %2966
        %v2968 = vsel %vm1036, %v2963, 0
        %v2970 = vsel %vm1036, %v2965, 0
        %v2972 = vsel %vm1036, %v2967, 0
        %2974 = vmatprep.subr.mxu0 0.0
        %2975 = vmatpush1.xpose.msra.mxu0 %v2970
        %2976 = vmatprep.subr.mxu0 0.0
        %2977 = vmatpush1.xpose.msra.mxu0 %v2972
        %2978 = vmatprep.subr.mxu0 0.0
        %2979 = vmatpush1.xpose.msra.mxu0 0.0
        %2980 = vmatprep.subr.mxu0 0.0
        %2981 = vmatpush1.xpose.msra.mxu0 0.0
        %2982 = vmatprep.subr.mxu0 0.0
        %2983 = vmatpush1.xpose.msra.mxu0 0.0
        %2984 = vmatprep.subr.mxu0 0.0
        %2985 = vmatpush1.xpose.msra.mxu0 0.0
        %2986 = vmatprep.subr.mxu0 0.0
        %2987 = vmatpush1.xpose.msra.mxu0 0.0
        %2988 = vmatprep.subr.mxu0 0.0
        %2989 = vmatpush1.xpose.msra.mxu0 0.0
        %2990 = vmatprep.subr.mxu0 0.0
        %2991 = vmatpush1.xpose.msra.mxu0 0.0
        %2992 = vmatprep.subr.mxu0 0.0
        %2993 = vmatpush1.xpose.msra.mxu0 0.0
        %2994 = vmatprep.subr.mxu0 0.0
        %2995 = vmatpush1.xpose.msra.mxu0 0.0
        %2996 = vmatprep.subr.mxu0 0.0
        %2997 = vmatpush1.xpose.msra.mxu0 0.0
        %2998 = vmatprep.subr.mxu0 0.0
        %2999 = vmatpush1.xpose.msra.mxu0 0.0
        %3000 = vmatprep.subr.mxu0 0.0
        %3001 = vmatpush1.xpose.msra.mxu0 0.0
        %3002 = vmatprep.subr.mxu0 0.0
        %3003 = vmatpush1.xpose.msra.mxu0 0.0
        %3004 = vmatprep.subr.mxu0 0.0
        %3005 = vmatpush1.xpose.msra.mxu0 0.0
        %3006 = vmatprep.subr.mxu0 0.0
        %3007 = vmatpush1.xpose.msra.mxu0 0.0
        %3008 = vmatprep.subr.mxu0 0.0
        %3009 = vmatpush1.xpose.msra.mxu0 0.0
        %3010 = vmatprep.subr.mxu0 0.0
        %3011 = vmatpush1.xpose.msra.mxu0 0.0
        %3012 = vmatprep.subr.mxu0 0.0
        %3013 = vmatpush1.xpose.msra.mxu0 0.0
        %3014 = vmatprep.subr.mxu0 0.0
        %3015 = vmatpush1.xpose.msra.mxu0 0.0
        %3016 = vmatprep.subr.mxu0 0.0
        %3017 = vmatpush1.xpose.msra.mxu0 0.0
        %3018 = vmatprep.subr.mxu0 0.0
        %3019 = vmatpush1.xpose.msra.mxu0 0.0
        %3020 = vmatprep.subr.mxu0 0.0
        %3021 = vmatpush1.xpose.msra.mxu0 0.0
        %3022 = vmatprep.subr.mxu0 0.0
        %3023 = vmatpush1.xpose.msra.mxu0 0.0
        %3024 = vmatprep.subr.mxu0 0.0
        %3025 = vmatpush1.xpose.msra.mxu0 0.0
        %3026 = vmatprep.subr.mxu0 0.0
        %3027 = vmatpush1.xpose.msra.mxu0 0.0
        %3028 = vmatprep.subr.mxu0 0.0
        %3029 = vmatpush1.xpose.msra.mxu0 0.0
        %3030 = vmatprep.subr.mxu0 0.0
        %3031 = vmatpush1.xpose.msra.mxu0 0.0
        %3032 = vmatprep.subr.mxu0 0.0
        %3033 = vmatpush1.xpose.msra.mxu0 0.0
        %3034 = vmatprep.subr.mxu0 0.0
        %3035 = vmatpush1.xpose.msra.mxu0 0.0
        %3036 = vmatprep.subr.mxu0 0.0
        %3037 = vmatpush1.xpose.msra.mxu0 0.0
        %3038 = vmatprep.mubr.f32.mxu0 0.0
        %3039 = vmatmul.mubr.f32.gmra.mrb[0].mxu0 %v2968
        %v3040 = vpop.f32.mrb[0].mxu0
        %v3041 = vadd.f32 0.0, %v3040
        %v3042 = vpop.f32.mrb[0].mxu0
        %3043 = vdwg.mxu0
        %v3044 = vmul.f32 %v3041, 0.35355338
        %v3045 = vsel %vm2301, -1e+09, %v3044
        %v3046 = vsel %vm2303, %v3045, -inf
        %3047 = vmax.xlane.f32.xlu0 %v3046
        %v3048 = vpop.xlane.xlu0 %3047
        %v3049 = vsub.f32 %v3045, %v3048
        %v3050 = vmul.f32 %v3049, 1.442695
        %v3051 = vpow.pop %v3050
        %v3052 = vsel %vm2303, %v3051, 0.0
        %3053 = vadd.xlane.f32.xlu0 %v3052
        %v3054 = vpop.xlane.xlu0 %3053
        %v3055 = vrcp.pop %v3054
        %v3056 = vmul.f32 %v3051, %v3055
        %3057 = vrot.lane.b32.xlu0 %v2209, 72
        %v3058 = vpop.permute.xlu0 %3057
        %3059 = vrot.lane.b32.xlu0 %v2214, 72
        %v3060 = vpop.permute.xlu0 %3059
        %v3064 = vsel %vm2303, %v3056, 0
        %3066 = vmatprep.subr.mxu0 0.0
        %3067 = vmatpush1.msra.mxu0 %v3058
        %3068 = vmatprep.subr.mxu0 0.0
        %3069 = vmatpush1.msra.mxu0 %v3060
        %3070 = vmatprep.subr.mxu0 0.0
        %3071 = vmatpush1.msra.mxu0 0.0
        %3072 = vmatprep.subr.mxu0 0.0
        %3073 = vmatpush1.msra.mxu0 0.0
        %3074 = vmatprep.subr.mxu0 0.0
        %3075 = vmatpush1.msra.mxu0 0.0
        %3076 = vmatprep.subr.mxu0 0.0
        %3077 = vmatpush1.msra.mxu0 0.0
        %3078 = vmatprep.subr.mxu0 0.0
        %3079 = vmatpush1.msra.mxu0 0.0
        %3080 = vmatprep.subr.mxu0 0.0
        %3081 = vmatpush1.msra.mxu0 0.0
        %3082 = vmatprep.subr.mxu0 0.0
        %3083 = vmatpush1.msra.mxu0 0.0
        %3084 = vmatprep.subr.mxu0 0.0
        %3085 = vmatpush1.msra.mxu0 0.0
        %3086 = vmatprep.subr.mxu0 0.0
        %3087 = vmatpush1.msra.mxu0 0.0
        %3088 = vmatprep.subr.mxu0 0.0
        %3089 = vmatpush1.msra.mxu0 0.0
        %3090 = vmatprep.subr.mxu0 0.0
        %3091 = vmatpush1.msra.mxu0 0.0
        %3092 = vmatprep.subr.mxu0 0.0
        %3093 = vmatpush1.msra.mxu0 0.0
        %3094 = vmatprep.subr.mxu0 0.0
        %3095 = vmatpush1.msra.mxu0 0.0
        %3096 = vmatprep.subr.mxu0 0.0
        %3097 = vmatpush1.msra.mxu0 0.0
        %3098 = vmatprep.subr.mxu0 0.0
        %3099 = vmatpush1.msra.mxu0 0.0
        %3100 = vmatprep.subr.mxu0 0.0
        %3101 = vmatpush1.msra.mxu0 0.0
        %3102 = vmatprep.subr.mxu0 0.0
        %3103 = vmatpush1.msra.mxu0 0.0
        %3104 = vmatprep.subr.mxu0 0.0
        %3105 = vmatpush1.msra.mxu0 0.0
        %3106 = vmatprep.subr.mxu0 0.0
        %3107 = vmatpush1.msra.mxu0 0.0
        %3108 = vmatprep.subr.mxu0 0.0
        %3109 = vmatpush1.msra.mxu0 0.0
        %3110 = vmatprep.subr.mxu0 0.0
        %3111 = vmatpush1.msra.mxu0 0.0
        %3112 = vmatprep.subr.mxu0 0.0
        %3113 = vmatpush1.msra.mxu0 0.0
        %3114 = vmatprep.subr.mxu0 0.0
        %3115 = vmatpush1.msra.mxu0 0.0
        %3116 = vmatprep.subr.mxu0 0.0
        %3117 = vmatpush1.msra.mxu0 0.0
        %3118 = vmatprep.subr.mxu0 0.0
        %3119 = vmatpush1.msra.mxu0 0.0
        %3120 = vmatprep.subr.mxu0 0.0
        %3121 = vmatpush1.msra.mxu0 0.0
        %3122 = vmatprep.subr.mxu0 0.0
        %3123 = vmatpush1.msra.mxu0 0.0
        %3124 = vmatprep.subr.mxu0 0.0
        %3125 = vmatpush1.msra.mxu0 0.0
        %3126 = vmatprep.subr.mxu0 0.0
        %3127 = vmatpush1.msra.mxu0 0.0
        %3128 = vmatprep.subr.mxu0 0.0
        %3129 = vmatpush1.msra.mxu0 0.0
        %3130 = vmatprep.mubr.f32.mxu0 0.0
        %3131 = vmatmul.mubr.f32.gmra.mrb[0].mxu0 %v3064
        %v3132 = vpop.f32.mrb[0].mxu0
        %v3133 = vadd.f32 0.0, %v3132
        %v3134 = vpop.f32.mrb[0].mxu0
        %3135 = vdwg.mxu0
        %v3137 = vsel %vm1036, %v3133, 0
        %3139 = vmatprep.subr.mxu0 0.0
        %3140 = vmatpush1.msra.mxu0 %v2220
        %3141 = vmatprep.subr.mxu0 0.0
        %3142 = vmatpush1.msra.mxu0 0.0
        %3143 = vmatprep.subr.mxu0 0.0
        %3144 = vmatpush1.msra.mxu0 0.0
        %3145 = vmatprep.subr.mxu0 0.0
        %3146 = vmatpush1.msra.mxu0 0.0
        %3147 = vmatprep.subr.mxu0 0.0
        %3148 = vmatpush1.msra.mxu0 0.0
        %3149 = vmatprep.subr.mxu0 0.0
        %3150 = vmatpush1.msra.mxu0 0.0
        %3151 = vmatprep.subr.mxu0 0.0
        %3152 = vmatpush1.msra.mxu0 0.0
        %3153 = vmatprep.subr.mxu0 0.0
        %3154 = vmatpush1.msra.mxu0 0.0
        %3155 = vmatprep.subr.mxu0 0.0
        %3156 = vmatpush1.msra.mxu0 0.0
        %3157 = vmatprep.subr.mxu0 0.0
        %3158 = vmatpush1.msra.mxu0 0.0
        %3159 = vmatprep.subr.mxu0 0.0
        %3160 = vmatpush1.msra.mxu0 0.0
        %3161 = vmatprep.subr.mxu0 0.0
        %3162 = vmatpush1.msra.mxu0 0.0
        %3163 = vmatprep.subr.mxu0 0.0
        %3164 = vmatpush1.msra.mxu0 0.0
        %3165 = vmatprep.subr.mxu0 0.0
        %3166 = vmatpush1.msra.mxu0 0.0
        %3167 = vmatprep.subr.mxu0 0.0
        %3168 = vmatpush1.msra.mxu0 0.0
        %3169 = vmatprep.subr.mxu0 0.0
        %3170 = vmatpush1.msra.mxu0 0.0
        %3171 = vmatprep.subr.mxu0 0.0
        %3172 = vmatpush1.msra.mxu0 0.0
        %3173 = vmatprep.subr.mxu0 0.0
        %3174 = vmatpush1.msra.mxu0 0.0
        %3175 = vmatprep.subr.mxu0 0.0
        %3176 = vmatpush1.msra.mxu0 0.0
        %3177 = vmatprep.subr.mxu0 0.0
        %3178 = vmatpush1.msra.mxu0 0.0
        %3179 = vmatprep.subr.mxu0 0.0
        %3180 = vmatpush1.msra.mxu0 0.0
        %3181 = vmatprep.subr.mxu0 0.0
        %3182 = vmatpush1.msra.mxu0 0.0
        %3183 = vmatprep.subr.mxu0 0.0
        %3184 = vmatpush1.msra.mxu0 0.0
        %3185 = vmatprep.subr.mxu0 0.0
        %3186 = vmatpush1.msra.mxu0 0.0
        %3187 = vmatprep.subr.mxu0 0.0
        %3188 = vmatpush1.msra.mxu0 0.0
        %3189 = vmatprep.subr.mxu0 0.0
        %3190 = vmatpush1.msra.mxu0 0.0
        %3191 = vmatprep.subr.mxu0 0.0
        %3192 = vmatpush1.msra.mxu0 0.0
        %3193 = vmatprep.subr.mxu0 0.0
        %3194 = vmatpush1.msra.mxu0 0.0
        %3195 = vmatprep.subr.mxu0 0.0
        %3196 = vmatpush1.msra.mxu0 0.0
        %3197 = vmatprep.subr.mxu0 0.0
        %3198 = vmatpush1.msra.mxu0 0.0
        %3199 = vmatprep.subr.mxu0 0.0
        %3200 = vmatpush1.msra.mxu0 0.0
        %3201 = vmatprep.subr.mxu0 0.0
        %3202 = vmatpush1.msra.mxu0 0.0
        %3203 = vmatprep.mubr.f32.mxu0 0.0
        %3204 = vmatmul.mubr.f32.gmra.mrb[0].mxu0 %v3137
        %v3205 = vpop.f32.mrb[0].mxu0
        %v3206 = vadd.f32 0.0, %v3205
        %v3207 = vpop.f32.mrb[0].mxu0
        %3208 = vdwg.mxu0
        %v3209 = vadd.f32 %v2961, %v3206
        %v3210 = vadd.f32 %v2004, %v3209
        %v3211 = vld [vmem:[#allocation11] sm:$0x1]
        %v3213 = vlaneseq
        %v3214 = vshrl.u32 %v3213, 7
        %v3215 = vsub.s32 0, %v3214
        %v3216 = vrot.slane %v3211, %v3215
        %v3218 = vadd.f32 %v3210, %v3216
        %v3219 = vld [vmem:[%s8] sm:$0x1]
        %v3220 = vld [vmem:[%s9] sm:$0x1]
        %v3221 = vsel %vm908, %v3218, 0.0
        %3222 = vadd.xlane.f32.xlu0 %v3221
        %v3223 = vpop.xlane.xlu0 %3222
        %v3224 = vmul.f32 %v3223, %v912
        %v3225 = vsub.f32 %v3218, %v3224
        %v3226 = vmul.f32 %v3225, %v3225
        %v3227 = vsel %vm908, %v3226, 0.0
        %3228 = vadd.xlane.f32.xlu0 %v3227
        %v3229 = vpop.xlane.xlu0 %3228
        %v3230 = vmul.f32 %v3229, %v919
        %v3231 = vrsqrt.pop %v3230
        %v3232 = vmul.f32 %v3230, %v3231
        %vm3233 = vcmp.eq.f32.partialorder %v3230, inf
        %v3234 = vsel %vm3233, %v3230, %v3232
        %vm3235 = vcmp.eq.f32.partialorder %v3230, 0.0
        %v3236 = vand.u32 %v3230, 2147483648
        %v3237 = vsel %vm3235, %v3236, %v3234
        %v3239 = vlaneseq
        %v3240 = vshrl.u32 %v3239, 7
        %v3241 = vsub.s32 0, %v3240
        %v3242 = vrot.slane %v3219, %v3241
        %v3244 = vmul.f32 %v3242, %v3225
        %v3245 = vadd.f32 %v3237, 1e-06
        %v3246 = vrcp.pop %v3245
        %v3247 = vmul.f32 %v3244, %v3246
        %v3249 = vlaneseq
        %v3250 = vshrl.u32 %v3249, 7
        %v3251 = vsub.s32 0, %v3250
        %v3252 = vrot.slane %v3220, %v3251
        %v3254 = vadd.f32 %v3247, %v3252
        %v3255 = vld [vmem:[%s20] sm:$0xff]
        %v3256 = vld [vmem:[%s20 + $0x8] sm:$0xff]
        %v3257 = vld [vmem:[%s20 + $0x10] sm:$0xff]
        %v3258 = vld [vmem:[%s20 + $0x18] sm:$0xff]
        %v3259 = vld [vmem:[#allocation13] sm:$0x1]
        %v3261 = vlaneseq
        %v3262 = vshrl.u32 %v3261, 7
        %v3263 = vsub.s32 0, %v3262
        %v3264 = vrot.slane %v3259, %v3263
        %v3267 = vsel %vm908, %v3254, 0
        %3269 = vmatprep.subr.mxu0 0.0
        %3270 = vmatpush1.msra.mxu0 %v3255
        %3271 = vmatprep.subr.mxu0 0.0
        %3272 = vmatpush1.msra.mxu0 %v3256
        %3273 = vmatprep.subr.mxu0 0.0
        %3274 = vmatpush1.msra.mxu0 %v3257
        %3275 = vmatprep.subr.mxu0 0.0
        %3276 = vmatpush1.msra.mxu0 %v3258
        %3277 = vmatprep.subr.mxu0 0.0
        %3278 = vmatpush1.msra.mxu0 0.0
        %3279 = vmatprep.subr.mxu0 0.0
        %3280 = vmatpush1.msra.mxu0 0.0
        %3281 = vmatprep.subr.mxu0 0.0
        %3282 = vmatpush1.msra.mxu0 0.0
        %3283 = vmatprep.subr.mxu0 0.0
        %3284 = vmatpush1.msra.mxu0 0.0
        %3285 = vmatprep.subr.mxu0 0.0
        %3286 = vmatpush1.msra.mxu0 0.0
        %3287 = vmatprep.subr.mxu0 0.0
        %3288 = vmatpush1.msra.mxu0 0.0
        %3289 = vmatprep.subr.mxu0 0.0
        %3290 = vmatpush1.msra.mxu0 0.0
        %3291 = vmatprep.subr.mxu0 0.0
        %3292 = vmatpush1.msra.mxu0 0.0
        %3293 = vmatprep.subr.mxu0 0.0
        %3294 = vmatpush1.msra.mxu0 0.0
        %3295 = vmatprep.subr.mxu0 0.0
        %3296 = vmatpush1.msra.mxu0 0.0
        %3297 = vmatprep.subr.mxu0 0.0
        %3298 = vmatpush1.msra.mxu0 0.0
        %3299 = vmatprep.subr.mxu0 0.0
        %3300 = vmatpush1.msra.mxu0 0.0
        %3301 = vmatprep.subr.mxu0 0.0
        %3302 = vmatpush1.msra.mxu0 0.0
        %3303 = vmatprep.subr.mxu0 0.0
        %3304 = vmatpush1.msra.mxu0 0.0
        %3305 = vmatprep.subr.mxu0 0.0
        %3306 = vmatpush1.msra.mxu0 0.0
        %3307 = vmatprep.subr.mxu0 0.0
        %3308 = vmatpush1.msra.mxu0 0.0
        %3309 = vmatprep.subr.mxu0 0.0
        %3310 = vmatpush1.msra.mxu0 0.0
        %3311 = vmatprep.subr.mxu0 0.0
        %3312 = vmatpush1.msra.mxu0 0.0
        %3313 = vmatprep.subr.mxu0 0.0
        %3314 = vmatpush1.msra.mxu0 0.0
        %3315 = vmatprep.subr.mxu0 0.0
        %3316 = vmatpush1.msra.mxu0 0.0
        %3317 = vmatprep.subr.mxu0 0.0
        %3318 = vmatpush1.msra.mxu0 0.0
        %3319 = vmatprep.subr.mxu0 0.0
        %3320 = vmatpush1.msra.mxu0 0.0
        %3321 = vmatprep.subr.mxu0 0.0
        %3322 = vmatpush1.msra.mxu0 0.0
        %3323 = vmatprep.subr.mxu0 0.0
        %3324 = vmatpush1.msra.mxu0 0.0
        %3325 = vmatprep.subr.mxu0 0.0
        %3326 = vmatpush1.msra.mxu0 0.0
        %3327 = vmatprep.subr.mxu0 0.0
        %3328 = vmatpush1.msra.mxu0 0.0
        %3329 = vmatprep.subr.mxu0 0.0
        %3330 = vmatpush1.msra.mxu0 0.0
        %3331 = vmatprep.subr.mxu0 0.0
        %3332 = vmatpush1.msra.mxu0 0.0
        %3333 = vmatprep.mubr.f32.mxu0 0.0
        %3334 = vmatmul.mubr.f32.gmra.mrb[0].mxu0 %v3267
        %v3335 = vpop.f32.mrb[0].mxu0
        %v3336 = vadd.f32 %v3264, %v3335
        %v3337 = vpop.f32.mrb[0].mxu0
        %3338 = vdwg.mxu0
        %v3339 = vmax.f32 %v3336, 0.0
        %v3340 = vld [vmem:[%s22] sm:$0xff]
        %v3341 = vld [vmem:[%s22 + $0x8] sm:$0xff]
        %v3342 = vld [vmem:[%s22 + $0x10] sm:$0xff]
        %v3343 = vld [vmem:[%s22 + $0x18] sm:$0xff]
        %v3344 = vld [vmem:[%s22 + $0x20] sm:$0xff]
        %v3345 = vld [vmem:[%s22 + $0x28] sm:$0xff]
        %v3346 = vld [vmem:[%s22 + $0x30] sm:$0xff]
        %v3347 = vld [vmem:[%s22 + $0x38] sm:$0xff]
        %vm3348 = vcmask 523264
        %v3350 = vsel %vm3348, %v3339, 0
        %3352 = vmatprep.subr.mxu0 0.0
        %3353 = vmatpush1.msra.mxu0 %v3340
        %3354 = vmatprep.subr.mxu0 0.0
        %3355 = vmatpush1.msra.mxu0 %v3341
        %3356 = vmatprep.subr.mxu0 0.0
        %3357 = vmatpush1.msra.mxu0 %v3342
        %3358 = vmatprep.subr.mxu0 0.0
        %3359 = vmatpush1.msra.mxu0 %v3343
        %3360 = vmatprep.subr.mxu0 0.0
        %3361 = vmatpush1.msra.mxu0 %v3344
        %3362 = vmatprep.subr.mxu0 0.0
        %3363 = vmatpush1.msra.mxu0 %v3345
        %3364 = vmatprep.subr.mxu0 0.0
        %3365 = vmatpush1.msra.mxu0 %v3346
        %3366 = vmatprep.subr.mxu0 0.0
        %3367 = vmatpush1.msra.mxu0 %v3347
        %3368 = vmatprep.subr.mxu0 0.0
        %3369 = vmatpush1.msra.mxu0 0.0
        %3370 = vmatprep.subr.mxu0 0.0
        %3371 = vmatpush1.msra.mxu0 0.0
        %3372 = vmatprep.subr.mxu0 0.0
        %3373 = vmatpush1.msra.mxu0 0.0
        %3374 = vmatprep.subr.mxu0 0.0
        %3375 = vmatpush1.msra.mxu0 0.0
        %3376 = vmatprep.subr.mxu0 0.0
        %3377 = vmatpush1.msra.mxu0 0.0
        %3378 = vmatprep.subr.mxu0 0.0
        %3379 = vmatpush1.msra.mxu0 0.0
        %3380 = vmatprep.subr.mxu0 0.0
        %3381 = vmatpush1.msra.mxu0 0.0
        %3382 = vmatprep.subr.mxu0 0.0
        %3383 = vmatpush1.msra.mxu0 0.0
        %3384 = vmatprep.subr.mxu0 0.0
        %3385 = vmatpush1.msra.mxu0 0.0
        %3386 = vmatprep.subr.mxu0 0.0
        %3387 = vmatpush1.msra.mxu0 0.0
        %3388 = vmatprep.subr.mxu0 0.0
        %3389 = vmatpush1.msra.mxu0 0.0
        %3390 = vmatprep.subr.mxu0 0.0
        %3391 = vmatpush1.msra.mxu0 0.0
        %3392 = vmatprep.subr.mxu0 0.0
        %3393 = vmatpush1.msra.mxu0 0.0
        %3394 = vmatprep.subr.mxu0 0.0
        %3395 = vmatpush1.msra.mxu0 0.0
        %3396 = vmatprep.subr.mxu0 0.0
        %3397 = vmatpush1.msra.mxu0 0.0
        %3398 = vmatprep.subr.mxu0 0.0
        %3399 = vmatpush1.msra.mxu0 0.0
        %3400 = vmatprep.subr.mxu0 0.0
        %3401 = vmatpush1.msra.mxu0 0.0
        %3402 = vmatprep.subr.mxu0 0.0
        %3403 = vmatpush1.msra.mxu0 0.0
        %3404 = vmatprep.subr.mxu0 0.0
        %3405 = vmatpush1.msra.mxu0 0.0
        %3406 = vmatprep.subr.mxu0 0.0
        %3407 = vmatpush1.msra.mxu0 0.0
        %3408 = vmatprep.subr.mxu0 0.0
        %3409 = vmatpush1.msra.mxu0 0.0
        %3410 = vmatprep.subr.mxu0 0.0
        %3411 = vmatpush1.msra.mxu0 0.0
        %3412 = vmatprep.subr.mxu0 0.0
        %3413 = vmatpush1.msra.mxu0 0.0
        %3414 = vmatprep.subr.mxu0 0.0
        %3415 = vmatpush1.msra.mxu0 0.0
        %3416 = vmatprep.mubr.f32.mxu0 0.0
        %3417 = vmatmul.mubr.f32.gmra.mrb[0].mxu0 %v3350
        %v3418 = vpop.f32.mrb[0].mxu0
        %v3419 = vadd.f32 0.0, %v3418
        %v3420 = vpop.f32.mrb[0].mxu0
        %3421 = vdwg.mxu0
        %v3422 = vadd.f32 %v3218, %v3419
        %v3423 = vld [vmem:[#allocation14] sm:$0x1]
        %v3425 = vlaneseq
        %v3426 = vshrl.u32 %v3425, 7
        %v3427 = vsub.s32 0, %v3426
        %v3428 = vrot.slane %v3423, %v3427
        %v3430 = vadd.f32 %v3422, %v3428
        %3431 = vst.msk [vmem:[%s886] sm:$0xff] %vm908, %v3430
        %s3432 = sand.u32 %s577, 1
        %s3433 = scalar_lea.sflag [#allocation4], %s3432
        %s3434 = sand.u32 %s577, 1
        %s3435 = smul.addr %s3434, 8
        %s3436 = scalar_lea.vmem [#allocation16], %s3435
        // Predicated region
        $region149: #{decoder_layer.1} parent=115 // pred_check
          %p3437 = pneg %p587
        $region150: #{decoder_layer.1} parent=115 // pred_check_branch
          %3439 = sbr.rel (%p3437) target = $region152
        $region151: #{decoder_layer.1} parent=115 // pred_region
          %s3441 = ssub.s32 128, 128
          %3442 = vsyncadd %s3433, %s3441
          %s3443 = smul.addr %s45, 128
          %s3444 = scalar_lea.hbm %s24, %s3443
          %s3446 = sshll.u32 %s3436, 4
          %s3447 = int_to_ptr.vmem [resolvable:$true] %s3446
          %3449 = dma.vmem_to_hbm [thread:$0]  %s3447, 128, %s3444, %s3433
        $region152: #{decoder_layer.1} parent=115 // pred_fallthru
          _
      $region116: #{decoder_layer.1} parent=5 // pred_fallthru
        _
      %p3450 = scmp.le.s32.totalorder 2, %s40
      // Predicated region
      $region153: #{decoder_layer.1} parent=5 // pred_check
        %p3451 = pneg %p3450
      $region154: #{decoder_layer.1} parent=5 // pred_check_branch
        %3453 = sbr.rel (%p3451) target = $region156
      $region155: #{decoder_layer.1} parent=5 // pred_region
        %s3454 = ssub.s32 %s40, 2
        // Predicated region
        $region157: #{decoder_layer.1} parent=155 // pred_check
          %p3455 = pneg %p593
        $region158: #{decoder_layer.1} parent=155 // pred_check_branch
          %3457 = sbr.rel (%p3455) target = $region160
        $region159: #{decoder_layer.1} parent=155 // pred_region
          %s3458 = sand.u32 %s578, 1
          %s3459 = scalar_lea.sflag [#allocation4], %s3458
          %s3460 = sand.u32 %s578, 1
          %s3461 = smul.addr %s3460, 8
          %s3462 = scalar_lea.vmem [#allocation16], %s3461
          %3463 = dma.done %s3459, 128
        $region160: #{decoder_layer.1} parent=155 // pred_fallthru
          _
      $region156: #{decoder_layer.1} parent=5 // pred_fallthru
        _
    $region6: #{decoder_layer.1} parent=1 // loop_footer
      %s44 = sadd.s32 1, %s40
    $region7: #{decoder_layer.1} parent=1 // loop_footer_branch
      %39 = sbr.rel target = $region3
    $region8: #{decoder_layer.1} parent=1 // loop_exit
      _
    %3464 = vsyncpa [#allocation3], 1
    %s3465 = scalar_lea.sflag [#allocation3], 1
    %3466 = vsyncpa %s3465, 1
    %3467 = vsyncpa [#allocation6], 1
    %3468 = vsyncpa [#allocation9], 1
    %3469 = vsyncpa [#allocation12], 1
    %3470 = vsyncpa [#allocation15], 1
    %3471 = vsyncpa [#allocation4], 1
    %s3472 = scalar_lea.sflag [#allocation4], 1
    %3473 = vsyncpa %s3472, 1

</llo_original>
